<compile_context>
chip_gen: v5e
topology: v5e:2x2
jax: 0.10.0
libtpu: 0.0.40
codegen_flags: <defaults>
</compile_context>

<pallas_src>
import jax
import jax.numpy as jnp
import numpy as np
from jax.experimental import pallas as pl
from jax.experimental.pallas import tpu as pltpu


# ----------------------------------------------------------------------------
# Fully fused Encode kernel (one grid step == one batch element).
# ----------------------------------------------------------------------------
def _make_encode_kernel(H0, W0, cin0, cout0, cin1, cout1):
    H1, W1 = H0 // 2, W0 // 2
    M0, M1 = H0 * W0, H1 * W1
    f32 = jnp.float32
    TAPS = [(dy, dx) for dy in (-1, 0, 1) for dx in (-1, 0, 1)]

    def _rot(x, k):
        # Static circular lane rotation: out[:, m] = x[:, (m + k) % M].
        # Lowers to two static lane slices + a concat (what jnp.roll emits).
        M = x.shape[1]
        k = k % M
        if k == 0:
            return x
        return jnp.concatenate([x[:, k:], x[:, :k]], axis=1)

    def _patch(x, masks_ref, W_img):
        # x: (Cin, M) channel-major activation -> (9*Cin, M) im2col patch.
        # Border handling via constant per-tap masks (no padded-halo buffer).
        taps = []
        for t, (dy, dx) in enumerate(TAPS):
            tap = _rot(x, dy * W_img + dx)
            if (dy, dx) != (0, 0):
                tap = tap * masks_ref[t, :]
            taps.append(tap)
        return jnp.concatenate(taps, axis=0)

    def _bias_prelu(y, b_ref, a):
        y = y + b_ref[...]                       # (Cout, 1) broadcast over lanes
        return jnp.where(y >= 0.0, y, a * y)     # scalar alpha from SMEM

    def _conv(x, w_ref, b_ref, a, masks_ref, W_img):
        p = _patch(x, masks_ref, W_img)                              # (9Cin, M)
        y = jnp.dot(w_ref[...], p, preferred_element_type=f32)      # (Cout, M)
        return _bias_prelu(y, b_ref, a)

    def kernel(x0_ref, x1_ref, m0_ref, m1_ref, cm_ref,
               w_h0a, b_h0a, w_h0b, b_h0b,
               w_h1a, b_h1a, w_h1b, b_h1b,
               w_v1a, b_v1a, w_v1b, b_v1b,
               alpha_ref, out0_ref, out1_ref):
        a = [alpha_ref[i] for i in range(6)]     # PReLU params via SMEM scalars

        x0 = x0_ref[0]                           # (cin0, M0), pixels in lanes
        x1 = x1_ref[0]                           # (cin1, M1)

        # ---------------- hor0 (level 0): cin0 -> cout0 -> cout0 ------------
        t0 = _conv(x0, w_h0a, b_h0a, a[0], m0_ref, W0)
        y0 = _conv(t0, w_h0b, b_h0b, a[1], m0_ref, W0)        # (cout0, M0)
        # single conv result: stored as out0 AND reused as ver1 input (dedup)
        out0_ref[...] = y0[None]

        # ---------------- hor1 (level 1): cin1 -> cout1 -> cout1 ------------
        t1 = _conv(x1, w_h1a, b_h1a, a[2], m1_ref, W1)
        u = _conv(t1, w_h1b, b_h1b, a[3], m1_ref, W1)         # (cout1, M1)

        # --------- ver1: stride-2 conv on y0, then stride-1 conv ------------
        p = _patch(y0, m0_ref, W0)                                     # (9*cout0, M0)
        vf = jnp.dot(w_v1a[...], p, preferred_element_type=f32)       # (cout1, M0)
        # stride-2 == stride-1 result at even (h, w): two-stage masked lane
        # compaction (W1 + H1 static rotates) -- linear in pixel count.
        z = jnp.zeros_like(vf)
        for k in range(W1):                      # stage 1: even cols, per row
            z = z + cm_ref[k, :] * _rot(vf, k)
        z2 = jnp.zeros_like(vf)
        for j in range(H1):                      # stage 2: even rows, compact
            z2 = z2 + cm_ref[W1 + j, :] * _rot(z, (2 * W0 - W1) * j)
        vs = _bias_prelu(z2[:, :M1], b_v1a, a[4])             # (cout1, M1)
        v = _conv(vs, w_v1b, b_v1b, a[5], m1_ref, W1)         # (cout1, M1)

        # fused residual add: tenIns[1] = hor1(x1) + ver1(hor0(x0))
        out1_ref[...] = (u + v)[None]

    return kernel


# ----------------------------------------------------------------------------
# Wrapper: one pallas_call for the whole Encode forward.
# ----------------------------------------------------------------------------
def encode_forward(ten_ins_nchw, params, obj_scratch):
    x0_nchw, x1_nchw = ten_ins_nchw
    B, cin0, H0, W0 = x0_nchw.shape
    _, cin1, H1, W1 = x1_nchw.shape
    assert (H1, W1) == (H0 // 2, W0 // 2)
    assert H0 % 2 == 0 and W0 % 2 == 0

    (w_h0a, b_h0a, a_h0a), (w_h0b, b_h0b, a_h0b) = params["hor0"]
    (w_h1a, b_h1a, a_h1a), (w_h1b, b_h1b, a_h1b) = params["hor1"]
    (w_v1a, b_v1a, a_v1a), (w_v1b, b_v1b, a_v1b) = params["ver1"]
    cout0 = w_h0a.shape[-1]
    cout1 = w_h1a.shape[-1]
    M0, M1 = H0 * W0, H1 * W1

    # NCHW -> channel-major (C, H*W): pixels in lanes.  Free reshape, no
    # transpose, and the kernel outputs land directly in flat NCHW order.
    x0 = x0_nchw.reshape(B, cin0, M0)
    x1 = x1_nchw.reshape(B, cin1, M1)

    def cm_w(w):        # HWIO (3,3,Cin,Cout) -> (Cout, 9*Cin), tap-major rows
        return jnp.transpose(w.reshape(9 * w.shape[2], w.shape[3]))

    def col(b):
        return b.reshape(-1, 1)

    # Constant border masks for the 9 taps, one set per pyramid level.
    def tap_masks(H, W):
        hh, ww = np.meshgrid(np.arange(H), np.arange(W), indexing="ij")
        rows = []
        for dy in (-1, 0, 1):
            for dx in (-1, 0, 1):
                ok = ((hh + dy >= 0) & (hh + dy < H) &
                      (ww + dx >= 0) & (ww + dx < W))
                rows.append(ok.reshape(-1))
        return jnp.asarray(np.stack(rows).astype(np.float32))   # (9, H*W)

    masks0 = tap_masks(H0, W0)
    masks1 = tap_masks(H1, W1)

    # Constant masks for the two-stage stride-2 lane compaction (linear size).
    lane = np.arange(M0)
    cm = np.zeros((W1 + H1, M0), np.float32)
    for k in range(W1):                        # stage 1: lanes with w0 == 2*k
        cm[k, (lane % W0) == k] = 1.0
    for j in range(H1):                        # stage 2: compacted row block j
        cm[W1 + j, (lane // W1) == j] = 1.0
    cmasks = jnp.asarray(cm)

    alphas = jnp.stack([a_h0a, a_h0b, a_h1a, a_h1b, a_v1a, a_v1b]
                       ).astype(jnp.float32)                     # (6,) -> SMEM

    args = [
        x0, x1, masks0, masks1, cmasks,
        cm_w(w_h0a), col(b_h0a), cm_w(w_h0b), col(b_h0b),
        cm_w(w_h1a), col(b_h1a), cm_w(w_h1b), col(b_h1b),
        cm_w(w_v1a), col(b_v1a), cm_w(w_v1b), col(b_v1b),
        alphas,
    ]

    def _resident2(shape):
        return pl.BlockSpec(shape, lambda n: (0, 0))

    in_specs = (
        [pl.BlockSpec((1, cin0, M0), lambda n: (n, 0, 0)),
         pl.BlockSpec((1, cin1, M1), lambda n: (n, 0, 0))]
        + [_resident2(a.shape) for a in args[2:-1]]
        + [pl.BlockSpec(memory_space=pltpu.MemorySpace.SMEM)]    # alphas
    )

    out_specs = [
        pl.BlockSpec((1, cout0, M0), lambda n: (n, 0, 0)),
        pl.BlockSpec((1, cout1, M1), lambda n: (n, 0, 0)),
    ]
    out_shape = (
        jax.ShapeDtypeStruct((B, cout0, M0), jnp.float32),
        jax.ShapeDtypeStruct((B, cout1, M1), jnp.float32),
    )

    kernel = _make_encode_kernel(H0, W0, cin0, cout0, cin1, cout1)

    out0_flat, out1_flat = pl.pallas_call(
        kernel,
        out_shape=out_shape,
        grid=(B,),
        in_specs=in_specs,
        out_specs=out_specs,
        compiler_params=pltpu.CompilerParams(
            dimension_semantics=("parallel",)),
    )(*args)

    # Outputs already arrive in flat NCHW order -> free reshape only.
    out0 = out0_flat.reshape(B, cout0, H0, W0)
    out1 = out1_flat.reshape(B, cout1, H1, W1)
    outs = [out0, out1]
    for i, t in enumerate(outs):
        obj_scratch["levelshape" + str(i)] = list(t.shape)   # objScratch bookkeeping
    return outs


# ----------------------------------------------------------------------------
# Pure-JAX reference (validation of the Pallas kernel)
# ----------------------------------------------------------------------------
def _ref_conv_prelu(x, w, b, alpha, stride):
    y = jax.lax.conv_general_dilated(
        x, w, window_strides=(stride, stride), padding=((1, 1), (1, 1)),
        dimension_numbers=("NHWC", "HWIO", "NHWC"), precision="highest")
    y = y + b
    return jnp.where(y >= 0.0, y, alpha * y)


def _ref_basic(x, conv_params, strides):
    for (w, b, alpha), s in zip(conv_params, strides):
        x = _ref_conv_prelu(x, w, b, alpha, s)
    return x


if __name__ == "__main__":
    key = jax.random.PRNGKey(0)
    keys = iter(jax.random.split(key, 16))

    B, H, W = 2, 16, 16
    intIns, intOuts = [4, 8], [8, 16]

    # module inputs (PyTorch NCHW convention): pyramid levels at full / half res
    x0 = jax.random.normal(next(keys), (B, intIns[0], H, W), jnp.float32)
    x1 = jax.random.normal(next(keys), (B, intIns[1], H // 2, W // 2), jnp.float32)

    def make_conv(k, cin, cout):
        kw, kb = jax.random.split(k)
        w = 0.1 * jax.random.normal(kw, (3, 3, cin, cout), jnp.float32)   # HWIO
        b = 0.1 * jax.random.normal(kb, (cout,), jnp.float32)
        return (w, b, jnp.float32(0.25))                                  # PReLU init=0.25

    params = {
        # netHor[0]: Basic(strHor, [4, 8, 8])
        "hor0": [make_conv(next(keys), intIns[0], intOuts[0]),
                 make_conv(next(keys), intOuts[0], intOuts[0])],
        # netHor[1]: Basic(strHor, [8, 16, 16])
        "hor1": [make_conv(next(keys), intIns[1], intOuts[1]),
                 make_conv(next(keys), intOuts[1], intOuts[1])],
        # netVer[1]: Basic(strVer, [8, 16, 16]) -- first conv has stride 2
        "ver1": [make_conv(next(keys), intOuts[0], intOuts[1]),
                 make_conv(next(keys), intOuts[1], intOuts[1])],
    }

    obj_scratch = {}
    outs = encode_forward([x0, x1], params, obj_scratch)
    outs = [jax.block_until_ready(o) for o in outs]

    # reference check
    r0 = _ref_basic(jnp.transpose(x0, (0, 2, 3, 1)), params["hor0"], (1, 1))
    r1 = _ref_basic(jnp.transpose(x1, (0, 2, 3, 1)), params["hor1"], (1, 1))
    r1 = r1 + _ref_basic(r0, params["ver1"], (2, 1))
    refs = [jnp.transpose(r0, (0, 3, 1, 2)), jnp.transpose(r1, (0, 3, 1, 2))]

    for o, r in zip(outs, refs):
        assert o.shape == r.shape, (o.shape, r.shape)
        assert jnp.allclose(o, r, atol=2e-2, rtol=2e-2), \
            float(jnp.max(jnp.abs(o - r)))
    assert obj_scratch["levelshape0"] == [B, intOuts[0], H, W]
    assert obj_scratch["levelshape1"] == [B, intOuts[1], H // 2, W // 2]

    print("KERNEL_OK")
</pallas_src>

<mosaic_0001>
module attributes {stable_mosaic.version = 11 : i64} {
  func.func @kernel(%arg0: i32, %arg1: memref<1x4x256xf32, #tpu.memory_space<vmem>>, %arg2: memref<1x8x64xf32, #tpu.memory_space<vmem>>, %arg3: memref<9x256xf32, #tpu.memory_space<vmem>>, %arg4: memref<9x64xf32, #tpu.memory_space<vmem>>, %arg5: memref<16x256xf32, #tpu.memory_space<vmem>>, %arg6: memref<8x36xf32, #tpu.memory_space<vmem>>, %arg7: memref<8x1xf32, #tpu.memory_space<vmem>>, %arg8: memref<8x72xf32, #tpu.memory_space<vmem>>, %arg9: memref<8x1xf32, #tpu.memory_space<vmem>>, %arg10: memref<16x72xf32, #tpu.memory_space<vmem>>, %arg11: memref<16x1xf32, #tpu.memory_space<vmem>>, %arg12: memref<16x144xf32, #tpu.memory_space<vmem>>, %arg13: memref<16x1xf32, #tpu.memory_space<vmem>>, %arg14: memref<16x72xf32, #tpu.memory_space<vmem>>, %arg15: memref<16x1xf32, #tpu.memory_space<vmem>>, %arg16: memref<16x144xf32, #tpu.memory_space<vmem>>, %arg17: memref<16x1xf32, #tpu.memory_space<vmem>>, %arg18: memref<6xf32, #tpu.memory_space<smem>>, %arg19: memref<1x8x256xf32, #tpu.memory_space<vmem>>, %arg20: memref<1x16x64xf32, #tpu.memory_space<vmem>>) attributes {dimension_semantics = [#tpu.dimension_semantics<parallel>], iteration_bounds = array<i64: 2>, scalar_prefetch = 0 : i64, scratch_operands = 0 : i64, tpu.core_type = #tpu.core_type<tc>, window_params = [{transform_indices = @transform_0, window_bounds = array<i64: 1, 4, 256>}, {transform_indices = @transform_1, window_bounds = array<i64: 1, 8, 64>}, {pipeline_mode = #tpu.pipeline_mode<synchronous>, transform_indices = @transform_2, window_bounds = array<i64: 9, 256>}, {pipeline_mode = #tpu.pipeline_mode<synchronous>, transform_indices = @transform_3, window_bounds = array<i64: 9, 64>}, {pipeline_mode = #tpu.pipeline_mode<synchronous>, transform_indices = @transform_4, window_bounds = array<i64: 16, 256>}, {pipeline_mode = #tpu.pipeline_mode<synchronous>, transform_indices = @transform_5, window_bounds = array<i64: 8, 36>}, {pipeline_mode = #tpu.pipeline_mode<synchronous>, transform_indices = @transform_6, window_bounds = array<i64: 8, 1>}, {pipeline_mode = #tpu.pipeline_mode<synchronous>, transform_indices = @transform_7, window_bounds = array<i64: 8, 72>}, {pipeline_mode = #tpu.pipeline_mode<synchronous>, transform_indices = @transform_8, window_bounds = array<i64: 8, 1>}, {pipeline_mode = #tpu.pipeline_mode<synchronous>, transform_indices = @transform_9, window_bounds = array<i64: 16, 72>}, {pipeline_mode = #tpu.pipeline_mode<synchronous>, transform_indices = @transform_10, window_bounds = array<i64: 16, 1>}, {pipeline_mode = #tpu.pipeline_mode<synchronous>, transform_indices = @transform_11, window_bounds = array<i64: 16, 144>}, {pipeline_mode = #tpu.pipeline_mode<synchronous>, transform_indices = @transform_12, window_bounds = array<i64: 16, 1>}, {pipeline_mode = #tpu.pipeline_mode<synchronous>, transform_indices = @transform_13, window_bounds = array<i64: 16, 72>}, {pipeline_mode = #tpu.pipeline_mode<synchronous>, transform_indices = @transform_14, window_bounds = array<i64: 16, 1>}, {pipeline_mode = #tpu.pipeline_mode<synchronous>, transform_indices = @transform_15, window_bounds = array<i64: 16, 144>}, {pipeline_mode = #tpu.pipeline_mode<synchronous>, transform_indices = @transform_16, window_bounds = array<i64: 16, 1>}, {transform_indices = @transform_17, window_bounds = array<i64: 6>}, {transform_indices = @transform_18, window_bounds = array<i64: 1, 8, 256>}, {transform_indices = @transform_19, window_bounds = array<i64: 1, 16, 64>}]} {
    %c0 = arith.constant 0 : index
    %0 = memref.load %arg18[%c0] : memref<6xf32, #tpu.memory_space<smem>>
    %c1 = arith.constant 1 : index
    %1 = memref.load %arg18[%c1] : memref<6xf32, #tpu.memory_space<smem>>
    %c2 = arith.constant 2 : index
    %2 = memref.load %arg18[%c2] : memref<6xf32, #tpu.memory_space<smem>>
    %c3 = arith.constant 3 : index
    %3 = memref.load %arg18[%c3] : memref<6xf32, #tpu.memory_space<smem>>
    %c4 = arith.constant 4 : index
    %4 = memref.load %arg18[%c4] : memref<6xf32, #tpu.memory_space<smem>>
    %c5 = arith.constant 5 : index
    %5 = memref.load %arg18[%c5] : memref<6xf32, #tpu.memory_space<smem>>
    %c0_0 = arith.constant 0 : index
    %c0_1 = arith.constant 0 : index
    %c0_2 = arith.constant 0 : index
    %6 = vector.load %arg1[%c0_0, %c0_1, %c0_2] : memref<1x4x256xf32, #tpu.memory_space<vmem>>, vector<1x4x256xf32>
    %7 = vector.shape_cast %6 : vector<1x4x256xf32> to vector<4x256xf32>
    %c0_3 = arith.constant 0 : index
    %c0_4 = arith.constant 0 : index
    %c0_5 = arith.constant 0 : index
    %8 = vector.load %arg2[%c0_3, %c0_4, %c0_5] : memref<1x8x64xf32, #tpu.memory_space<vmem>>, vector<1x8x64xf32>
    %9 = vector.shape_cast %8 : vector<1x8x64xf32> to vector<8x64xf32>
    %10 = vector.extract_strided_slice %7 {offsets = [0, 239], sizes = [4, 17], strides = [1, 1]} : vector<4x256xf32> to vector<4x17xf32>
    %11 = vector.extract_strided_slice %7 {offsets = [0, 0], sizes = [4, 239], strides = [1, 1]} : vector<4x256xf32> to vector<4x239xf32>
    %12 = tpu.concatenate %10, %11 in 1 : vector<4x17xf32>, vector<4x239xf32> -> vector<4x256xf32>
    %c0_6 = arith.constant 0 : index
    %c0_7 = arith.constant 0 : index
    %13 = vector.load %arg3[%c0_6, %c0_7] : memref<9x256xf32, #tpu.memory_space<vmem>>, vector<1x256xf32>
    %14 = vector.shape_cast %13 : vector<1x256xf32> to vector<256xf32>
    %15 = vector.shape_cast %14 : vector<256xf32> to vector<1x256xf32>
    %16 = vector.broadcast %15 : vector<1x256xf32> to vector<4x256xf32>
    %17 = arith.mulf %12, %16 : vector<4x256xf32>
    %18 = vector.extract_strided_slice %7 {offsets = [0, 240], sizes = [4, 16], strides = [1, 1]} : vector<4x256xf32> to vector<4x16xf32>
    %19 = vector.extract_strided_slice %7 {offsets = [0, 0], sizes = [4, 240], strides = [1, 1]} : vector<4x256xf32> to vector<4x240xf32>
    %20 = tpu.concatenate %18, %19 in 1 : vector<4x16xf32>, vector<4x240xf32> -> vector<4x256xf32>
    %c1_8 = arith.constant 1 : index
    %c0_9 = arith.constant 0 : index
    %21 = vector.load %arg3[%c1_8, %c0_9] : memref<9x256xf32, #tpu.memory_space<vmem>>, vector<1x256xf32>
    %22 = vector.shape_cast %21 : vector<1x256xf32> to vector<256xf32>
    %23 = vector.shape_cast %22 : vector<256xf32> to vector<1x256xf32>
    %24 = vector.broadcast %23 : vector<1x256xf32> to vector<4x256xf32>
    %25 = arith.mulf %20, %24 : vector<4x256xf32>
    %26 = vector.extract_strided_slice %7 {offsets = [0, 241], sizes = [4, 15], strides = [1, 1]} : vector<4x256xf32> to vector<4x15xf32>
    %27 = vector.extract_strided_slice %7 {offsets = [0, 0], sizes = [4, 241], strides = [1, 1]} : vector<4x256xf32> to vector<4x241xf32>
    %28 = tpu.concatenate %26, %27 in 1 : vector<4x15xf32>, vector<4x241xf32> -> vector<4x256xf32>
    %c2_10 = arith.constant 2 : index
    %c0_11 = arith.constant 0 : index
    %29 = vector.load %arg3[%c2_10, %c0_11] : memref<9x256xf32, #tpu.memory_space<vmem>>, vector<1x256xf32>
    %30 = vector.shape_cast %29 : vector<1x256xf32> to vector<256xf32>
    %31 = vector.shape_cast %30 : vector<256xf32> to vector<1x256xf32>
    %32 = vector.broadcast %31 : vector<1x256xf32> to vector<4x256xf32>
    %33 = arith.mulf %28, %32 : vector<4x256xf32>
    %34 = vector.extract_strided_slice %7 {offsets = [0, 255], sizes = [4, 1], strides = [1, 1]} : vector<4x256xf32> to vector<4x1xf32>
    %35 = vector.extract_strided_slice %7 {offsets = [0, 0], sizes = [4, 255], strides = [1, 1]} : vector<4x256xf32> to vector<4x255xf32>
    %36 = tpu.concatenate %34, %35 in 1 : vector<4x1xf32>, vector<4x255xf32> -> vector<4x256xf32>
    %c3_12 = arith.constant 3 : index
    %c0_13 = arith.constant 0 : index
    %37 = vector.load %arg3[%c3_12, %c0_13] : memref<9x256xf32, #tpu.memory_space<vmem>>, vector<1x256xf32>
    %38 = vector.shape_cast %37 : vector<1x256xf32> to vector<256xf32>
    %39 = vector.shape_cast %38 : vector<256xf32> to vector<1x256xf32>
    %40 = vector.broadcast %39 : vector<1x256xf32> to vector<4x256xf32>
    %41 = arith.mulf %36, %40 : vector<4x256xf32>
    %42 = vector.extract_strided_slice %7 {offsets = [0, 1], sizes = [4, 255], strides = [1, 1]} : vector<4x256xf32> to vector<4x255xf32>
    %43 = vector.extract_strided_slice %7 {offsets = [0, 0], sizes = [4, 1], strides = [1, 1]} : vector<4x256xf32> to vector<4x1xf32>
    %44 = tpu.concatenate %42, %43 in 1 : vector<4x255xf32>, vector<4x1xf32> -> vector<4x256xf32>
    %c5_14 = arith.constant 5 : index
    %c0_15 = arith.constant 0 : index
    %45 = vector.load %arg3[%c5_14, %c0_15] : memref<9x256xf32, #tpu.memory_space<vmem>>, vector<1x256xf32>
    %46 = vector.shape_cast %45 : vector<1x256xf32> to vector<256xf32>
    %47 = vector.shape_cast %46 : vector<256xf32> to vector<1x256xf32>
    %48 = vector.broadcast %47 : vector<1x256xf32> to vector<4x256xf32>
    %49 = arith.mulf %44, %48 : vector<4x256xf32>
    %50 = vector.extract_strided_slice %7 {offsets = [0, 15], sizes = [4, 241], strides = [1, 1]} : vector<4x256xf32> to vector<4x241xf32>
    %51 = vector.extract_strided_slice %7 {offsets = [0, 0], sizes = [4, 15], strides = [1, 1]} : vector<4x256xf32> to vector<4x15xf32>
    %52 = tpu.concatenate %50, %51 in 1 : vector<4x241xf32>, vector<4x15xf32> -> vector<4x256xf32>
    %c6 = arith.constant 6 : index
    %c0_16 = arith.constant 0 : index
    %53 = vector.load %arg3[%c6, %c0_16] : memref<9x256xf32, #tpu.memory_space<vmem>>, vector<1x256xf32>
    %54 = vector.shape_cast %53 : vector<1x256xf32> to vector<256xf32>
    %55 = vector.shape_cast %54 : vector<256xf32> to vector<1x256xf32>
    %56 = vector.broadcast %55 : vector<1x256xf32> to vector<4x256xf32>
    %57 = arith.mulf %52, %56 : vector<4x256xf32>
    %58 = vector.extract_strided_slice %7 {offsets = [0, 16], sizes = [4, 240], strides = [1, 1]} : vector<4x256xf32> to vector<4x240xf32>
    %59 = vector.extract_strided_slice %7 {offsets = [0, 0], sizes = [4, 16], strides = [1, 1]} : vector<4x256xf32> to vector<4x16xf32>
    %60 = tpu.concatenate %58, %59 in 1 : vector<4x240xf32>, vector<4x16xf32> -> vector<4x256xf32>
    %c7 = arith.constant 7 : index
    %c0_17 = arith.constant 0 : index
    %61 = vector.load %arg3[%c7, %c0_17] : memref<9x256xf32, #tpu.memory_space<vmem>>, vector<1x256xf32>
    %62 = vector.shape_cast %61 : vector<1x256xf32> to vector<256xf32>
    %63 = vector.shape_cast %62 : vector<256xf32> to vector<1x256xf32>
    %64 = vector.broadcast %63 : vector<1x256xf32> to vector<4x256xf32>
    %65 = arith.mulf %60, %64 : vector<4x256xf32>
    %66 = vector.extract_strided_slice %7 {offsets = [0, 17], sizes = [4, 239], strides = [1, 1]} : vector<4x256xf32> to vector<4x239xf32>
    %67 = vector.extract_strided_slice %7 {offsets = [0, 0], sizes = [4, 17], strides = [1, 1]} : vector<4x256xf32> to vector<4x17xf32>
    %68 = tpu.concatenate %66, %67 in 1 : vector<4x239xf32>, vector<4x17xf32> -> vector<4x256xf32>
    %c8 = arith.constant 8 : index
    %c0_18 = arith.constant 0 : index
    %69 = vector.load %arg3[%c8, %c0_18] : memref<9x256xf32, #tpu.memory_space<vmem>>, vector<1x256xf32>
    %70 = vector.shape_cast %69 : vector<1x256xf32> to vector<256xf32>
    %71 = vector.shape_cast %70 : vector<256xf32> to vector<1x256xf32>
    %72 = vector.broadcast %71 : vector<1x256xf32> to vector<4x256xf32>
    %73 = arith.mulf %68, %72 : vector<4x256xf32>
    %74 = tpu.concatenate %17, %25, %33, %41, %7, %49, %57, %65, %73 in 0 : vector<4x256xf32>, vector<4x256xf32>, vector<4x256xf32>, vector<4x256xf32>, vector<4x256xf32>, vector<4x256xf32>, vector<4x256xf32>, vector<4x256xf32>, vector<4x256xf32> -> vector<36x256xf32>
    %c0_19 = arith.constant 0 : index
    %c0_20 = arith.constant 0 : index
    %75 = vector.load %arg6[%c0_19, %c0_20] : memref<8x36xf32, #tpu.memory_space<vmem>>, vector<8x36xf32>
    %cst = arith.constant dense<0.000000e+00> : vector<8x256xf32>
    %76 = tpu.matmul %75, %74, %cst {dimension_numbers = #tpu.dot_dimension_numbers<[1], [0], [0], [1], [0, 0, 1, 1], [], []>} : vector<8x36xf32>, vector<36x256xf32>, vector<8x256xf32> -> vector<8x256xf32>
    %c0_21 = arith.constant 0 : index
    %c0_22 = arith.constant 0 : index
    %77 = vector.load %arg7[%c0_21, %c0_22] : memref<8x1xf32, #tpu.memory_space<vmem>>, vector<8x1xf32>
    %78 = vector.broadcast %77 : vector<8x1xf32> to vector<8x256xf32>
    %79 = arith.addf %76, %78 : vector<8x256xf32>
    %cst_23 = arith.constant 0.000000e+00 : f32
    %80 = vector.broadcast %cst_23 : f32 to vector<8x256xf32>
    %81 = arith.cmpf oge, %79, %80 : vector<8x256xf32>
    %82 = vector.broadcast %0 : f32 to vector<8x256xf32>
    %83 = arith.mulf %82, %79 : vector<8x256xf32>
    %84 = arith.select %81, %79, %83 : vector<8x256xi1>, vector<8x256xf32>
    %85 = vector.extract_strided_slice %84 {offsets = [0, 239], sizes = [8, 17], strides = [1, 1]} : vector<8x256xf32> to vector<8x17xf32>
    %86 = vector.extract_strided_slice %84 {offsets = [0, 0], sizes = [8, 239], strides = [1, 1]} : vector<8x256xf32> to vector<8x239xf32>
    %87 = tpu.concatenate %85, %86 in 1 : vector<8x17xf32>, vector<8x239xf32> -> vector<8x256xf32>
    %c0_24 = arith.constant 0 : index
    %c0_25 = arith.constant 0 : index
    %88 = vector.load %arg3[%c0_24, %c0_25] : memref<9x256xf32, #tpu.memory_space<vmem>>, vector<1x256xf32>
    %89 = vector.shape_cast %88 : vector<1x256xf32> to vector<256xf32>
    %90 = vector.shape_cast %89 : vector<256xf32> to vector<1x256xf32>
    %91 = vector.broadcast %90 : vector<1x256xf32> to vector<8x256xf32>
    %92 = arith.mulf %87, %91 : vector<8x256xf32>
    %93 = vector.extract_strided_slice %84 {offsets = [0, 240], sizes = [8, 16], strides = [1, 1]} : vector<8x256xf32> to vector<8x16xf32>
    %94 = vector.extract_strided_slice %84 {offsets = [0, 0], sizes = [8, 240], strides = [1, 1]} : vector<8x256xf32> to vector<8x240xf32>
    %95 = tpu.concatenate %93, %94 in 1 : vector<8x16xf32>, vector<8x240xf32> -> vector<8x256xf32>
    %c1_26 = arith.constant 1 : index
    %c0_27 = arith.constant 0 : index
    %96 = vector.load %arg3[%c1_26, %c0_27] : memref<9x256xf32, #tpu.memory_space<vmem>>, vector<1x256xf32>
    %97 = vector.shape_cast %96 : vector<1x256xf32> to vector<256xf32>
    %98 = vector.shape_cast %97 : vector<256xf32> to vector<1x256xf32>
    %99 = vector.broadcast %98 : vector<1x256xf32> to vector<8x256xf32>
    %100 = arith.mulf %95, %99 : vector<8x256xf32>
    %101 = vector.extract_strided_slice %84 {offsets = [0, 241], sizes = [8, 15], strides = [1, 1]} : vector<8x256xf32> to vector<8x15xf32>
    %102 = vector.extract_strided_slice %84 {offsets = [0, 0], sizes = [8, 241], strides = [1, 1]} : vector<8x256xf32> to vector<8x241xf32>
    %103 = tpu.concatenate %101, %102 in 1 : vector<8x15xf32>, vector<8x241xf32> -> vector<8x256xf32>
    %c2_28 = arith.constant 2 : index
    %c0_29 = arith.constant 0 : index
    %104 = vector.load %arg3[%c2_28, %c0_29] : memref<9x256xf32, #tpu.memory_space<vmem>>, vector<1x256xf32>
    %105 = vector.shape_cast %104 : vector<1x256xf32> to vector<256xf32>
    %106 = vector.shape_cast %105 : vector<256xf32> to vector<1x256xf32>
    %107 = vector.broadcast %106 : vector<1x256xf32> to vector<8x256xf32>
    %108 = arith.mulf %103, %107 : vector<8x256xf32>
    %109 = vector.extract_strided_slice %84 {offsets = [0, 255], sizes = [8, 1], strides = [1, 1]} : vector<8x256xf32> to vector<8x1xf32>
    %110 = vector.extract_strided_slice %84 {offsets = [0, 0], sizes = [8, 255], strides = [1, 1]} : vector<8x256xf32> to vector<8x255xf32>
    %111 = tpu.concatenate %109, %110 in 1 : vector<8x1xf32>, vector<8x255xf32> -> vector<8x256xf32>
    %c3_30 = arith.constant 3 : index
    %c0_31 = arith.constant 0 : index
    %112 = vector.load %arg3[%c3_30, %c0_31] : memref<9x256xf32, #tpu.memory_space<vmem>>, vector<1x256xf32>
    %113 = vector.shape_cast %112 : vector<1x256xf32> to vector<256xf32>
    %114 = vector.shape_cast %113 : vector<256xf32> to vector<1x256xf32>
    %115 = vector.broadcast %114 : vector<1x256xf32> to vector<8x256xf32>
    %116 = arith.mulf %111, %115 : vector<8x256xf32>
    %117 = vector.extract_strided_slice %84 {offsets = [0, 1], sizes = [8, 255], strides = [1, 1]} : vector<8x256xf32> to vector<8x255xf32>
    %118 = vector.extract_strided_slice %84 {offsets = [0, 0], sizes = [8, 1], strides = [1, 1]} : vector<8x256xf32> to vector<8x1xf32>
    %119 = tpu.concatenate %117, %118 in 1 : vector<8x255xf32>, vector<8x1xf32> -> vector<8x256xf32>
    %c5_32 = arith.constant 5 : index
    %c0_33 = arith.constant 0 : index
    %120 = vector.load %arg3[%c5_32, %c0_33] : memref<9x256xf32, #tpu.memory_space<vmem>>, vector<1x256xf32>
    %121 = vector.shape_cast %120 : vector<1x256xf32> to vector<256xf32>
    %122 = vector.shape_cast %121 : vector<256xf32> to vector<1x256xf32>
    %123 = vector.broadcast %122 : vector<1x256xf32> to vector<8x256xf32>
    %124 = arith.mulf %119, %123 : vector<8x256xf32>
    %125 = vector.extract_strided_slice %84 {offsets = [0, 15], sizes = [8, 241], strides = [1, 1]} : vector<8x256xf32> to vector<8x241xf32>
    %126 = vector.extract_strided_slice %84 {offsets = [0, 0], sizes = [8, 15], strides = [1, 1]} : vector<8x256xf32> to vector<8x15xf32>
    %127 = tpu.concatenate %125, %126 in 1 : vector<8x241xf32>, vector<8x15xf32> -> vector<8x256xf32>
    %c6_34 = arith.constant 6 : index
    %c0_35 = arith.constant 0 : index
    %128 = vector.load %arg3[%c6_34, %c0_35] : memref<9x256xf32, #tpu.memory_space<vmem>>, vector<1x256xf32>
    %129 = vector.shape_cast %128 : vector<1x256xf32> to vector<256xf32>
    %130 = vector.shape_cast %129 : vector<256xf32> to vector<1x256xf32>
    %131 = vector.broadcast %130 : vector<1x256xf32> to vector<8x256xf32>
    %132 = arith.mulf %127, %131 : vector<8x256xf32>
    %133 = vector.extract_strided_slice %84 {offsets = [0, 16], sizes = [8, 240], strides = [1, 1]} : vector<8x256xf32> to vector<8x240xf32>
    %134 = vector.extract_strided_slice %84 {offsets = [0, 0], sizes = [8, 16], strides = [1, 1]} : vector<8x256xf32> to vector<8x16xf32>
    %135 = tpu.concatenate %133, %134 in 1 : vector<8x240xf32>, vector<8x16xf32> -> vector<8x256xf32>
    %c7_36 = arith.constant 7 : index
    %c0_37 = arith.constant 0 : index
    %136 = vector.load %arg3[%c7_36, %c0_37] : memref<9x256xf32, #tpu.memory_space<vmem>>, vector<1x256xf32>
    %137 = vector.shape_cast %136 : vector<1x256xf32> to vector<256xf32>
    %138 = vector.shape_cast %137 : vector<256xf32> to vector<1x256xf32>
    %139 = vector.broadcast %138 : vector<1x256xf32> to vector<8x256xf32>
    %140 = arith.mulf %135, %139 : vector<8x256xf32>
    %141 = vector.extract_strided_slice %84 {offsets = [0, 17], sizes = [8, 239], strides = [1, 1]} : vector<8x256xf32> to vector<8x239xf32>
    %142 = vector.extract_strided_slice %84 {offsets = [0, 0], sizes = [8, 17], strides = [1, 1]} : vector<8x256xf32> to vector<8x17xf32>
    %143 = tpu.concatenate %141, %142 in 1 : vector<8x239xf32>, vector<8x17xf32> -> vector<8x256xf32>
    %c8_38 = arith.constant 8 : index
    %c0_39 = arith.constant 0 : index
    %144 = vector.load %arg3[%c8_38, %c0_39] : memref<9x256xf32, #tpu.memory_space<vmem>>, vector<1x256xf32>
    %145 = vector.shape_cast %144 : vector<1x256xf32> to vector<256xf32>
    %146 = vector.shape_cast %145 : vector<256xf32> to vector<1x256xf32>
    %147 = vector.broadcast %146 : vector<1x256xf32> to vector<8x256xf32>
    %148 = arith.mulf %143, %147 : vector<8x256xf32>
    %149 = tpu.concatenate %92, %100, %108, %116, %84, %124, %132, %140, %148 in 0 : vector<8x256xf32>, vector<8x256xf32>, vector<8x256xf32>, vector<8x256xf32>, vector<8x256xf32>, vector<8x256xf32>, vector<8x256xf32>, vector<8x256xf32>, vector<8x256xf32> -> vector<72x256xf32>
    %c0_40 = arith.constant 0 : index
    %c0_41 = arith.constant 0 : index
    %150 = vector.load %arg8[%c0_40, %c0_41] : memref<8x72xf32, #tpu.memory_space<vmem>>, vector<8x72xf32>
    %cst_42 = arith.constant dense<0.000000e+00> : vector<8x256xf32>
    %151 = tpu.matmul %150, %149, %cst_42 {dimension_numbers = #tpu.dot_dimension_numbers<[1], [0], [0], [1], [0, 0, 1, 1], [], []>} : vector<8x72xf32>, vector<72x256xf32>, vector<8x256xf32> -> vector<8x256xf32>
    %c0_43 = arith.constant 0 : index
    %c0_44 = arith.constant 0 : index
    %152 = vector.load %arg9[%c0_43, %c0_44] : memref<8x1xf32, #tpu.memory_space<vmem>>, vector<8x1xf32>
    %153 = vector.broadcast %152 : vector<8x1xf32> to vector<8x256xf32>
    %154 = arith.addf %151, %153 : vector<8x256xf32>
    %cst_45 = arith.constant 0.000000e+00 : f32
    %155 = vector.broadcast %cst_45 : f32 to vector<8x256xf32>
    %156 = arith.cmpf oge, %154, %155 : vector<8x256xf32>
    %157 = vector.broadcast %1 : f32 to vector<8x256xf32>
    %158 = arith.mulf %157, %154 : vector<8x256xf32>
    %159 = arith.select %156, %154, %158 : vector<8x256xi1>, vector<8x256xf32>
    %160 = vector.shape_cast %159 : vector<8x256xf32> to vector<1x8x256xf32>
    %c0_46 = arith.constant 0 : index
    %c0_47 = arith.constant 0 : index
    %c0_48 = arith.constant 0 : index
    %161 = vector.load %arg19[%c0_46, %c0_47, %c0_48] : memref<1x8x256xf32, #tpu.memory_space<vmem>>, vector<1x8x256xf32>
    tpu.vector_store %arg19[%c0_46, %c0_47, %c0_48], %160 {strides = array<i32>} : memref<1x8x256xf32, #tpu.memory_space<vmem>>, vector<1x8x256xf32>,
    %162 = vector.extract_strided_slice %9 {offsets = [0, 55], sizes = [8, 9], strides = [1, 1]} : vector<8x64xf32> to vector<8x9xf32>
    %163 = vector.extract_strided_slice %9 {offsets = [0, 0], sizes = [8, 55], strides = [1, 1]} : vector<8x64xf32> to vector<8x55xf32>
    %164 = tpu.concatenate %162, %163 in 1 : vector<8x9xf32>, vector<8x55xf32> -> vector<8x64xf32>
    %c0_49 = arith.constant 0 : index
    %c0_50 = arith.constant 0 : index
    %165 = vector.load %arg4[%c0_49, %c0_50] : memref<9x64xf32, #tpu.memory_space<vmem>>, vector<1x64xf32>
    %166 = vector.shape_cast %165 : vector<1x64xf32> to vector<64xf32>
    %167 = vector.shape_cast %166 : vector<64xf32> to vector<1x64xf32>
    %168 = vector.broadcast %167 : vector<1x64xf32> to vector<8x64xf32>
    %169 = arith.mulf %164, %168 : vector<8x64xf32>
    %170 = vector.extract_strided_slice %9 {offsets = [0, 56], sizes = [8, 8], strides = [1, 1]} : vector<8x64xf32> to vector<8x8xf32>
    %171 = vector.extract_strided_slice %9 {offsets = [0, 0], sizes = [8, 56], strides = [1, 1]} : vector<8x64xf32> to vector<8x56xf32>
    %172 = tpu.concatenate %170, %171 in 1 : vector<8x8xf32>, vector<8x56xf32> -> vector<8x64xf32>
    %c1_51 = arith.constant 1 : index
    %c0_52 = arith.constant 0 : index
    %173 = vector.load %arg4[%c1_51, %c0_52] : memref<9x64xf32, #tpu.memory_space<vmem>>, vector<1x64xf32>
    %174 = vector.shape_cast %173 : vector<1x64xf32> to vector<64xf32>
    %175 = vector.shape_cast %174 : vector<64xf32> to vector<1x64xf32>
    %176 = vector.broadcast %175 : vector<1x64xf32> to vector<8x64xf32>
    %177 = arith.mulf %172, %176 : vector<8x64xf32>
    %178 = vector.extract_strided_slice %9 {offsets = [0, 57], sizes = [8, 7], strides = [1, 1]} : vector<8x64xf32> to vector<8x7xf32>
    %179 = vector.extract_strided_slice %9 {offsets = [0, 0], sizes = [8, 57], strides = [1, 1]} : vector<8x64xf32> to vector<8x57xf32>
    %180 = tpu.concatenate %178, %179 in 1 : vector<8x7xf32>, vector<8x57xf32> -> vector<8x64xf32>
    %c2_53 = arith.constant 2 : index
    %c0_54 = arith.constant 0 : index
    %181 = vector.load %arg4[%c2_53, %c0_54] : memref<9x64xf32, #tpu.memory_space<vmem>>, vector<1x64xf32>
    %182 = vector.shape_cast %181 : vector<1x64xf32> to vector<64xf32>
    %183 = vector.shape_cast %182 : vector<64xf32> to vector<1x64xf32>
    %184 = vector.broadcast %183 : vector<1x64xf32> to vector<8x64xf32>
    %185 = arith.mulf %180, %184 : vector<8x64xf32>
    %186 = vector.extract_strided_slice %9 {offsets = [0, 63], sizes = [8, 1], strides = [1, 1]} : vector<8x64xf32> to vector<8x1xf32>
    %187 = vector.extract_strided_slice %9 {offsets = [0, 0], sizes = [8, 63], strides = [1, 1]} : vector<8x64xf32> to vector<8x63xf32>
    %188 = tpu.concatenate %186, %187 in 1 : vector<8x1xf32>, vector<8x63xf32> -> vector<8x64xf32>
    %c3_55 = arith.constant 3 : index
    %c0_56 = arith.constant 0 : index
    %189 = vector.load %arg4[%c3_55, %c0_56] : memref<9x64xf32, #tpu.memory_space<vmem>>, vector<1x64xf32>
    %190 = vector.shape_cast %189 : vector<1x64xf32> to vector<64xf32>
    %191 = vector.shape_cast %190 : vector<64xf32> to vector<1x64xf32>
    %192 = vector.broadcast %191 : vector<1x64xf32> to vector<8x64xf32>
    %193 = arith.mulf %188, %192 : vector<8x64xf32>
    %194 = vector.extract_strided_slice %9 {offsets = [0, 1], sizes = [8, 63], strides = [1, 1]} : vector<8x64xf32> to vector<8x63xf32>
    %195 = vector.extract_strided_slice %9 {offsets = [0, 0], sizes = [8, 1], strides = [1, 1]} : vector<8x64xf32> to vector<8x1xf32>
    %196 = tpu.concatenate %194, %195 in 1 : vector<8x63xf32>, vector<8x1xf32> -> vector<8x64xf32>
    %c5_57 = arith.constant 5 : index
    %c0_58 = arith.constant 0 : index
    %197 = vector.load %arg4[%c5_57, %c0_58] : memref<9x64xf32, #tpu.memory_space<vmem>>, vector<1x64xf32>
    %198 = vector.shape_cast %197 : vector<1x64xf32> to vector<64xf32>
    %199 = vector.shape_cast %198 : vector<64xf32> to vector<1x64xf32>
    %200 = vector.broadcast %199 : vector<1x64xf32> to vector<8x64xf32>
    %201 = arith.mulf %196, %200 : vector<8x64xf32>
    %202 = vector.extract_strided_slice %9 {offsets = [0, 7], sizes = [8, 57], strides = [1, 1]} : vector<8x64xf32> to vector<8x57xf32>
    %203 = vector.extract_strided_slice %9 {offsets = [0, 0], sizes = [8, 7], strides = [1, 1]} : vector<8x64xf32> to vector<8x7xf32>
    %204 = tpu.concatenate %202, %203 in 1 : vector<8x57xf32>, vector<8x7xf32> -> vector<8x64xf32>
    %c6_59 = arith.constant 6 : index
    %c0_60 = arith.constant 0 : index
    %205 = vector.load %arg4[%c6_59, %c0_60] : memref<9x64xf32, #tpu.memory_space<vmem>>, vector<1x64xf32>
    %206 = vector.shape_cast %205 : vector<1x64xf32> to vector<64xf32>
    %207 = vector.shape_cast %206 : vector<64xf32> to vector<1x64xf32>
    %208 = vector.broadcast %207 : vector<1x64xf32> to vector<8x64xf32>
    %209 = arith.mulf %204, %208 : vector<8x64xf32>
    %210 = vector.extract_strided_slice %9 {offsets = [0, 8], sizes = [8, 56], strides = [1, 1]} : vector<8x64xf32> to vector<8x56xf32>
    %211 = vector.extract_strided_slice %9 {offsets = [0, 0], sizes = [8, 8], strides = [1, 1]} : vector<8x64xf32> to vector<8x8xf32>
    %212 = tpu.concatenate %210, %211 in 1 : vector<8x56xf32>, vector<8x8xf32> -> vector<8x64xf32>
    %c7_61 = arith.constant 7 : index
    %c0_62 = arith.constant 0 : index
    %213 = vector.load %arg4[%c7_61, %c0_62] : memref<9x64xf32, #tpu.memory_space<vmem>>, vector<1x64xf32>
    %214 = vector.shape_cast %213 : vector<1x64xf32> to vector<64xf32>
    %215 = vector.shape_cast %214 : vector<64xf32> to vector<1x64xf32>
    %216 = vector.broadcast %215 : vector<1x64xf32> to vector<8x64xf32>
    %217 = arith.mulf %212, %216 : vector<8x64xf32>
    %218 = vector.extract_strided_slice %9 {offsets = [0, 9], sizes = [8, 55], strides = [1, 1]} : vector<8x64xf32> to vector<8x55xf32>
    %219 = vector.extract_strided_slice %9 {offsets = [0, 0], sizes = [8, 9], strides = [1, 1]} : vector<8x64xf32> to vector<8x9xf32>
    %220 = tpu.concatenate %218, %219 in 1 : vector<8x55xf32>, vector<8x9xf32> -> vector<8x64xf32>
    %c8_63 = arith.constant 8 : index
    %c0_64 = arith.constant 0 : index
    %221 = vector.load %arg4[%c8_63, %c0_64] : memref<9x64xf32, #tpu.memory_space<vmem>>, vector<1x64xf32>
    %222 = vector.shape_cast %221 : vector<1x64xf32> to vector<64xf32>
    %223 = vector.shape_cast %222 : vector<64xf32> to vector<1x64xf32>
    %224 = vector.broadcast %223 : vector<1x64xf32> to vector<8x64xf32>
    %225 = arith.mulf %220, %224 : vector<8x64xf32>
    %226 = tpu.concatenate %169, %177, %185, %193, %9, %201, %209, %217, %225 in 0 : vector<8x64xf32>, vector<8x64xf32>, vector<8x64xf32>, vector<8x64xf32>, vector<8x64xf32>, vector<8x64xf32>, vector<8x64xf32>, vector<8x64xf32>, vector<8x64xf32> -> vector<72x64xf32>
    %c0_65 = arith.constant 0 : index
    %c0_66 = arith.constant 0 : index
    %227 = vector.load %arg10[%c0_65, %c0_66] : memref<16x72xf32, #tpu.memory_space<vmem>>, vector<16x72xf32>
    %cst_67 = arith.constant dense<0.000000e+00> : vector<16x64xf32>
    %228 = tpu.matmul %227, %226, %cst_67 {dimension_numbers = #tpu.dot_dimension_numbers<[1], [0], [0], [1], [0, 0, 1, 1], [], []>} : vector<16x72xf32>, vector<72x64xf32>, vector<16x64xf32> -> vector<16x64xf32>
    %c0_68 = arith.constant 0 : index
    %c0_69 = arith.constant 0 : index
    %229 = vector.load %arg11[%c0_68, %c0_69] : memref<16x1xf32, #tpu.memory_space<vmem>>, vector<16x1xf32>
    %230 = vector.broadcast %229 : vector<16x1xf32> to vector<16x64xf32>
    %231 = arith.addf %228, %230 : vector<16x64xf32>
    %cst_70 = arith.constant 0.000000e+00 : f32
    %232 = vector.broadcast %cst_70 : f32 to vector<16x64xf32>
    %233 = arith.cmpf oge, %231, %232 : vector<16x64xf32>
    %234 = vector.broadcast %2 : f32 to vector<16x64xf32>
    %235 = arith.mulf %234, %231 : vector<16x64xf32>
    %236 = arith.select %233, %231, %235 : vector<16x64xi1>, vector<16x64xf32>
    %237 = vector.extract_strided_slice %236 {offsets = [0, 55], sizes = [16, 9], strides = [1, 1]} : vector<16x64xf32> to vector<16x9xf32>
    %238 = vector.extract_strided_slice %236 {offsets = [0, 0], sizes = [16, 55], strides = [1, 1]} : vector<16x64xf32> to vector<16x55xf32>
    %239 = tpu.concatenate %237, %238 in 1 : vector<16x9xf32>, vector<16x55xf32> -> vector<16x64xf32>
    %c0_71 = arith.constant 0 : index
    %c0_72 = arith.constant 0 : index
    %240 = vector.load %arg4[%c0_71, %c0_72] : memref<9x64xf32, #tpu.memory_space<vmem>>, vector<1x64xf32>
    %241 = vector.shape_cast %240 : vector<1x64xf32> to vector<64xf32>
    %242 = vector.shape_cast %241 : vector<64xf32> to vector<1x64xf32>
    %243 = vector.broadcast %242 : vector<1x64xf32> to vector<16x64xf32>
    %244 = arith.mulf %239, %243 : vector<16x64xf32>
    %245 = vector.extract_strided_slice %236 {offsets = [0, 56], sizes = [16, 8], strides = [1, 1]} : vector<16x64xf32> to vector<16x8xf32>
    %246 = vector.extract_strided_slice %236 {offsets = [0, 0], sizes = [16, 56], strides = [1, 1]} : vector<16x64xf32> to vector<16x56xf32>
    %247 = tpu.concatenate %245, %246 in 1 : vector<16x8xf32>, vector<16x56xf32> -> vector<16x64xf32>
    %c1_73 = arith.constant 1 : index
    %c0_74 = arith.constant 0 : index
    %248 = vector.load %arg4[%c1_73, %c0_74] : memref<9x64xf32, #tpu.memory_space<vmem>>, vector<1x64xf32>
    %249 = vector.shape_cast %248 : vector<1x64xf32> to vector<64xf32>
    %250 = vector.shape_cast %249 : vector<64xf32> to vector<1x64xf32>
    %251 = vector.broadcast %250 : vector<1x64xf32> to vector<16x64xf32>
    %252 = arith.mulf %247, %251 : vector<16x64xf32>
    %253 = vector.extract_strided_slice %236 {offsets = [0, 57], sizes = [16, 7], strides = [1, 1]} : vector<16x64xf32> to vector<16x7xf32>
    %254 = vector.extract_strided_slice %236 {offsets = [0, 0], sizes = [16, 57], strides = [1, 1]} : vector<16x64xf32> to vector<16x57xf32>
    %255 = tpu.concatenate %253, %254 in 1 : vector<16x7xf32>, vector<16x57xf32> -> vector<16x64xf32>
    %c2_75 = arith.constant 2 : index
    %c0_76 = arith.constant 0 : index
    %256 = vector.load %arg4[%c2_75, %c0_76] : memref<9x64xf32, #tpu.memory_space<vmem>>, vector<1x64xf32>
    %257 = vector.shape_cast %256 : vector<1x64xf32> to vector<64xf32>
    %258 = vector.shape_cast %257 : vector<64xf32> to vector<1x64xf32>
    %259 = vector.broadcast %258 : vector<1x64xf32> to vector<16x64xf32>
    %260 = arith.mulf %255, %259 : vector<16x64xf32>
    %261 = vector.extract_strided_slice %236 {offsets = [0, 63], sizes = [16, 1], strides = [1, 1]} : vector<16x64xf32> to vector<16x1xf32>
    %262 = vector.extract_strided_slice %236 {offsets = [0, 0], sizes = [16, 63], strides = [1, 1]} : vector<16x64xf32> to vector<16x63xf32>
    %263 = tpu.concatenate %261, %262 in 1 : vector<16x1xf32>, vector<16x63xf32> -> vector<16x64xf32>
    %c3_77 = arith.constant 3 : index
    %c0_78 = arith.constant 0 : index
    %264 = vector.load %arg4[%c3_77, %c0_78] : memref<9x64xf32, #tpu.memory_space<vmem>>, vector<1x64xf32>
    %265 = vector.shape_cast %264 : vector<1x64xf32> to vector<64xf32>
    %266 = vector.shape_cast %265 : vector<64xf32> to vector<1x64xf32>
    %267 = vector.broadcast %266 : vector<1x64xf32> to vector<16x64xf32>
    %268 = arith.mulf %263, %267 : vector<16x64xf32>
    %269 = vector.extract_strided_slice %236 {offsets = [0, 1], sizes = [16, 63], strides = [1, 1]} : vector<16x64xf32> to vector<16x63xf32>
    %270 = vector.extract_strided_slice %236 {offsets = [0, 0], sizes = [16, 1], strides = [1, 1]} : vector<16x64xf32> to vector<16x1xf32>
    %271 = tpu.concatenate %269, %270 in 1 : vector<16x63xf32>, vector<16x1xf32> -> vector<16x64xf32>
    %c5_79 = arith.constant 5 : index
    %c0_80 = arith.constant 0 : index
    %272 = vector.load %arg4[%c5_79, %c0_80] : memref<9x64xf32, #tpu.memory_space<vmem>>, vector<1x64xf32>
    %273 = vector.shape_cast %272 : vector<1x64xf32> to vector<64xf32>
    %274 = vector.shape_cast %273 : vector<64xf32> to vector<1x64xf32>
    %275 = vector.broadcast %274 : vector<1x64xf32> to vector<16x64xf32>
    %276 = arith.mulf %271, %275 : vector<16x64xf32>
    %277 = vector.extract_strided_slice %236 {offsets = [0, 7], sizes = [16, 57], strides = [1, 1]} : vector<16x64xf32> to vector<16x57xf32>
    %278 = vector.extract_strided_slice %236 {offsets = [0, 0], sizes = [16, 7], strides = [1, 1]} : vector<16x64xf32> to vector<16x7xf32>
    %279 = tpu.concatenate %277, %278 in 1 : vector<16x57xf32>, vector<16x7xf32> -> vector<16x64xf32>
    %c6_81 = arith.constant 6 : index
    %c0_82 = arith.constant 0 : index
    %280 = vector.load %arg4[%c6_81, %c0_82] : memref<9x64xf32, #tpu.memory_space<vmem>>, vector<1x64xf32>
    %281 = vector.shape_cast %280 : vector<1x64xf32> to vector<64xf32>
    %282 = vector.shape_cast %281 : vector<64xf32> to vector<1x64xf32>
    %283 = vector.broadcast %282 : vector<1x64xf32> to vector<16x64xf32>
    %284 = arith.mulf %279, %283 : vector<16x64xf32>
    %285 = vector.extract_strided_slice %236 {offsets = [0, 8], sizes = [16, 56], strides = [1, 1]} : vector<16x64xf32> to vector<16x56xf32>
    %286 = vector.extract_strided_slice %236 {offsets = [0, 0], sizes = [16, 8], strides = [1, 1]} : vector<16x64xf32> to vector<16x8xf32>
    %287 = tpu.concatenate %285, %286 in 1 : vector<16x56xf32>, vector<16x8xf32> -> vector<16x64xf32>
    %c7_83 = arith.constant 7 : index
    %c0_84 = arith.constant 0 : index
    %288 = vector.load %arg4[%c7_83, %c0_84] : memref<9x64xf32, #tpu.memory_space<vmem>>, vector<1x64xf32>
    %289 = vector.shape_cast %288 : vector<1x64xf32> to vector<64xf32>
    %290 = vector.shape_cast %289 : vector<64xf32> to vector<1x64xf32>
    %291 = vector.broadcast %290 : vector<1x64xf32> to vector<16x64xf32>
    %292 = arith.mulf %287, %291 : vector<16x64xf32>
    %293 = vector.extract_strided_slice %236 {offsets = [0, 9], sizes = [16, 55], strides = [1, 1]} : vector<16x64xf32> to vector<16x55xf32>
    %294 = vector.extract_strided_slice %236 {offsets = [0, 0], sizes = [16, 9], strides = [1, 1]} : vector<16x64xf32> to vector<16x9xf32>
    %295 = tpu.concatenate %293, %294 in 1 : vector<16x55xf32>, vector<16x9xf32> -> vector<16x64xf32>
    %c8_85 = arith.constant 8 : index
    %c0_86 = arith.constant 0 : index
    %296 = vector.load %arg4[%c8_85, %c0_86] : memref<9x64xf32, #tpu.memory_space<vmem>>, vector<1x64xf32>
    %297 = vector.shape_cast %296 : vector<1x64xf32> to vector<64xf32>
    %298 = vector.shape_cast %297 : vector<64xf32> to vector<1x64xf32>
    %299 = vector.broadcast %298 : vector<1x64xf32> to vector<16x64xf32>
    %300 = arith.mulf %295, %299 : vector<16x64xf32>
    %301 = tpu.concatenate %244, %252, %260, %268, %236, %276, %284, %292, %300 in 0 : vector<16x64xf32>, vector<16x64xf32>, vector<16x64xf32>, vector<16x64xf32>, vector<16x64xf32>, vector<16x64xf32>, vector<16x64xf32>, vector<16x64xf32>, vector<16x64xf32> -> vector<144x64xf32>
    %c0_87 = arith.constant 0 : index
    %c0_88 = arith.constant 0 : index
    %302 = vector.load %arg12[%c0_87, %c0_88] : memref<16x144xf32, #tpu.memory_space<vmem>>, vector<16x144xf32>
    %cst_89 = arith.constant dense<0.000000e+00> : vector<16x64xf32>
    %303 = tpu.matmul %302, %301, %cst_89 {dimension_numbers = #tpu.dot_dimension_numbers<[1], [0], [0], [1], [0, 0, 1, 1], [], []>} : vector<16x144xf32>, vector<144x64xf32>, vector<16x64xf32> -> vector<16x64xf32>
    %c0_90 = arith.constant 0 : index
    %c0_91 = arith.constant 0 : index
    %304 = vector.load %arg13[%c0_90, %c0_91] : memref<16x1xf32, #tpu.memory_space<vmem>>, vector<16x1xf32>
    %305 = vector.broadcast %304 : vector<16x1xf32> to vector<16x64xf32>
    %306 = arith.addf %303, %305 : vector<16x64xf32>
    %cst_92 = arith.constant 0.000000e+00 : f32
    %307 = vector.broadcast %cst_92 : f32 to vector<16x64xf32>
    %308 = arith.cmpf oge, %306, %307 : vector<16x64xf32>
    %309 = vector.broadcast %3 : f32 to vector<16x64xf32>
    %310 = arith.mulf %309, %306 : vector<16x64xf32>
    %311 = arith.select %308, %306, %310 : vector<16x64xi1>, vector<16x64xf32>
    %312 = vector.extract_strided_slice %159 {offsets = [0, 239], sizes = [8, 17], strides = [1, 1]} : vector<8x256xf32> to vector<8x17xf32>
    %313 = vector.extract_strided_slice %159 {offsets = [0, 0], sizes = [8, 239], strides = [1, 1]} : vector<8x256xf32> to vector<8x239xf32>
    %314 = tpu.concatenate %312, %313 in 1 : vector<8x17xf32>, vector<8x239xf32> -> vector<8x256xf32>
    %c0_93 = arith.constant 0 : index
    %c0_94 = arith.constant 0 : index
    %315 = vector.load %arg3[%c0_93, %c0_94] : memref<9x256xf32, #tpu.memory_space<vmem>>, vector<1x256xf32>
    %316 = vector.shape_cast %315 : vector<1x256xf32> to vector<256xf32>
    %317 = vector.shape_cast %316 : vector<256xf32> to vector<1x256xf32>
    %318 = vector.broadcast %317 : vector<1x256xf32> to vector<8x256xf32>
    %319 = arith.mulf %314, %318 : vector<8x256xf32>
    %320 = vector.extract_strided_slice %159 {offsets = [0, 240], sizes = [8, 16], strides = [1, 1]} : vector<8x256xf32> to vector<8x16xf32>
    %321 = vector.extract_strided_slice %159 {offsets = [0, 0], sizes = [8, 240], strides = [1, 1]} : vector<8x256xf32> to vector<8x240xf32>
    %322 = tpu.concatenate %320, %321 in 1 : vector<8x16xf32>, vector<8x240xf32> -> vector<8x256xf32>
    %c1_95 = arith.constant 1 : index
    %c0_96 = arith.constant 0 : index
    %323 = vector.load %arg3[%c1_95, %c0_96] : memref<9x256xf32, #tpu.memory_space<vmem>>, vector<1x256xf32>
    %324 = vector.shape_cast %323 : vector<1x256xf32> to vector<256xf32>
    %325 = vector.shape_cast %324 : vector<256xf32> to vector<1x256xf32>
    %326 = vector.broadcast %325 : vector<1x256xf32> to vector<8x256xf32>
    %327 = arith.mulf %322, %326 : vector<8x256xf32>
    %328 = vector.extract_strided_slice %159 {offsets = [0, 241], sizes = [8, 15], strides = [1, 1]} : vector<8x256xf32> to vector<8x15xf32>
    %329 = vector.extract_strided_slice %159 {offsets = [0, 0], sizes = [8, 241], strides = [1, 1]} : vector<8x256xf32> to vector<8x241xf32>
    %330 = tpu.concatenate %328, %329 in 1 : vector<8x15xf32>, vector<8x241xf32> -> vector<8x256xf32>
    %c2_97 = arith.constant 2 : index
    %c0_98 = arith.constant 0 : index
    %331 = vector.load %arg3[%c2_97, %c0_98] : memref<9x256xf32, #tpu.memory_space<vmem>>, vector<1x256xf32>
    %332 = vector.shape_cast %331 : vector<1x256xf32> to vector<256xf32>
    %333 = vector.shape_cast %332 : vector<256xf32> to vector<1x256xf32>
    %334 = vector.broadcast %333 : vector<1x256xf32> to vector<8x256xf32>
    %335 = arith.mulf %330, %334 : vector<8x256xf32>
    %336 = vector.extract_strided_slice %159 {offsets = [0, 255], sizes = [8, 1], strides = [1, 1]} : vector<8x256xf32> to vector<8x1xf32>
    %337 = vector.extract_strided_slice %159 {offsets = [0, 0], sizes = [8, 255], strides = [1, 1]} : vector<8x256xf32> to vector<8x255xf32>
    %338 = tpu.concatenate %336, %337 in 1 : vector<8x1xf32>, vector<8x255xf32> -> vector<8x256xf32>
    %c3_99 = arith.constant 3 : index
    %c0_100 = arith.constant 0 : index
    %339 = vector.load %arg3[%c3_99, %c0_100] : memref<9x256xf32, #tpu.memory_space<vmem>>, vector<1x256xf32>
    %340 = vector.shape_cast %339 : vector<1x256xf32> to vector<256xf32>
    %341 = vector.shape_cast %340 : vector<256xf32> to vector<1x256xf32>
    %342 = vector.broadcast %341 : vector<1x256xf32> to vector<8x256xf32>
    %343 = arith.mulf %338, %342 : vector<8x256xf32>
    %344 = vector.extract_strided_slice %159 {offsets = [0, 1], sizes = [8, 255], strides = [1, 1]} : vector<8x256xf32> to vector<8x255xf32>
    %345 = vector.extract_strided_slice %159 {offsets = [0, 0], sizes = [8, 1], strides = [1, 1]} : vector<8x256xf32> to vector<8x1xf32>
    %346 = tpu.concatenate %344, %345 in 1 : vector<8x255xf32>, vector<8x1xf32> -> vector<8x256xf32>
    %c5_101 = arith.constant 5 : index
    %c0_102 = arith.constant 0 : index
    %347 = vector.load %arg3[%c5_101, %c0_102] : memref<9x256xf32, #tpu.memory_space<vmem>>, vector<1x256xf32>
    %348 = vector.shape_cast %347 : vector<1x256xf32> to vector<256xf32>
    %349 = vector.shape_cast %348 : vector<256xf32> to vector<1x256xf32>
    %350 = vector.broadcast %349 : vector<1x256xf32> to vector<8x256xf32>
    %351 = arith.mulf %346, %350 : vector<8x256xf32>
    %352 = vector.extract_strided_slice %159 {offsets = [0, 15], sizes = [8, 241], strides = [1, 1]} : vector<8x256xf32> to vector<8x241xf32>
    %353 = vector.extract_strided_slice %159 {offsets = [0, 0], sizes = [8, 15], strides = [1, 1]} : vector<8x256xf32> to vector<8x15xf32>
    %354 = tpu.concatenate %352, %353 in 1 : vector<8x241xf32>, vector<8x15xf32> -> vector<8x256xf32>
    %c6_103 = arith.constant 6 : index
    %c0_104 = arith.constant 0 : index
    %355 = vector.load %arg3[%c6_103, %c0_104] : memref<9x256xf32, #tpu.memory_space<vmem>>, vector<1x256xf32>
    %356 = vector.shape_cast %355 : vector<1x256xf32> to vector<256xf32>
    %357 = vector.shape_cast %356 : vector<256xf32> to vector<1x256xf32>
    %358 = vector.broadcast %357 : vector<1x256xf32> to vector<8x256xf32>
    %359 = arith.mulf %354, %358 : vector<8x256xf32>
    %360 = vector.extract_strided_slice %159 {offsets = [0, 16], sizes = [8, 240], strides = [1, 1]} : vector<8x256xf32> to vector<8x240xf32>
    %361 = vector.extract_strided_slice %159 {offsets = [0, 0], sizes = [8, 16], strides = [1, 1]} : vector<8x256xf32> to vector<8x16xf32>
    %362 = tpu.concatenate %360, %361 in 1 : vector<8x240xf32>, vector<8x16xf32> -> vector<8x256xf32>
    %c7_105 = arith.constant 7 : index
    %c0_106 = arith.constant 0 : index
    %363 = vector.load %arg3[%c7_105, %c0_106] : memref<9x256xf32, #tpu.memory_space<vmem>>, vector<1x256xf32>
    %364 = vector.shape_cast %363 : vector<1x256xf32> to vector<256xf32>
    %365 = vector.shape_cast %364 : vector<256xf32> to vector<1x256xf32>
    %366 = vector.broadcast %365 : vector<1x256xf32> to vector<8x256xf32>
    %367 = arith.mulf %362, %366 : vector<8x256xf32>
    %368 = vector.extract_strided_slice %159 {offsets = [0, 17], sizes = [8, 239], strides = [1, 1]} : vector<8x256xf32> to vector<8x239xf32>
    %369 = vector.extract_strided_slice %159 {offsets = [0, 0], sizes = [8, 17], strides = [1, 1]} : vector<8x256xf32> to vector<8x17xf32>
    %370 = tpu.concatenate %368, %369 in 1 : vector<8x239xf32>, vector<8x17xf32> -> vector<8x256xf32>
    %c8_107 = arith.constant 8 : index
    %c0_108 = arith.constant 0 : index
    %371 = vector.load %arg3[%c8_107, %c0_108] : memref<9x256xf32, #tpu.memory_space<vmem>>, vector<1x256xf32>
    %372 = vector.shape_cast %371 : vector<1x256xf32> to vector<256xf32>
    %373 = vector.shape_cast %372 : vector<256xf32> to vector<1x256xf32>
    %374 = vector.broadcast %373 : vector<1x256xf32> to vector<8x256xf32>
    %375 = arith.mulf %370, %374 : vector<8x256xf32>
    %376 = tpu.concatenate %319, %327, %335, %343, %159, %351, %359, %367, %375 in 0 : vector<8x256xf32>, vector<8x256xf32>, vector<8x256xf32>, vector<8x256xf32>, vector<8x256xf32>, vector<8x256xf32>, vector<8x256xf32>, vector<8x256xf32>, vector<8x256xf32> -> vector<72x256xf32>
    %c0_109 = arith.constant 0 : index
    %c0_110 = arith.constant 0 : index
    %377 = vector.load %arg14[%c0_109, %c0_110] : memref<16x72xf32, #tpu.memory_space<vmem>>, vector<16x72xf32>
    %cst_111 = arith.constant dense<0.000000e+00> : vector<16x256xf32>
    %378 = tpu.matmul %377, %376, %cst_111 {dimension_numbers = #tpu.dot_dimension_numbers<[1], [0], [0], [1], [0, 0, 1, 1], [], []>} : vector<16x72xf32>, vector<72x256xf32>, vector<16x256xf32> -> vector<16x256xf32>
    %cst_112 = arith.constant 0.000000e+00 : f32
    %379 = vector.broadcast %cst_112 : f32 to vector<16x256xf32>
    %c0_113 = arith.constant 0 : index
    %c0_114 = arith.constant 0 : index
    %380 = vector.load %arg5[%c0_113, %c0_114] : memref<16x256xf32, #tpu.memory_space<vmem>>, vector<1x256xf32>
    %381 = vector.shape_cast %380 : vector<1x256xf32> to vector<256xf32>
    %382 = vector.shape_cast %381 : vector<256xf32> to vector<1x256xf32>
    %383 = vector.broadcast %382 : vector<1x256xf32> to vector<16x256xf32>
    %384 = arith.mulf %383, %378 : vector<16x256xf32>
    %385 = arith.addf %379, %384 : vector<16x256xf32>
    %c1_115 = arith.constant 1 : index
    %c0_116 = arith.constant 0 : index
    %386 = vector.load %arg5[%c1_115, %c0_116] : memref<16x256xf32, #tpu.memory_space<vmem>>, vector<1x256xf32>
    %387 = vector.shape_cast %386 : vector<1x256xf32> to vector<256xf32>
    %388 = vector.extract_strided_slice %378 {offsets = [0, 1], sizes = [16, 255], strides = [1, 1]} : vector<16x256xf32> to vector<16x255xf32>
    %389 = vector.extract_strided_slice %378 {offsets = [0, 0], sizes = [16, 1], strides = [1, 1]} : vector<16x256xf32> to vector<16x1xf32>
    %390 = tpu.concatenate %388, %389 in 1 : vector<16x255xf32>, vector<16x1xf32> -> vector<16x256xf32>
    %391 = vector.shape_cast %387 : vector<256xf32> to vector<1x256xf32>
    %392 = vector.broadcast %391 : vector<1x256xf32> to vector<16x256xf32>
    %393 = arith.mulf %392, %390 : vector<16x256xf32>
    %394 = arith.addf %385, %393 : vector<16x256xf32>
    %c2_117 = arith.constant 2 : index
    %c0_118 = arith.constant 0 : index
    %395 = vector.load %arg5[%c2_117, %c0_118] : memref<16x256xf32, #tpu.memory_space<vmem>>, vector<1x256xf32>
    %396 = vector.shape_cast %395 : vector<1x256xf32> to vector<256xf32>
    %397 = vector.extract_strided_slice %378 {offsets = [0, 2], sizes = [16, 254], strides = [1, 1]} : vector<16x256xf32> to vector<16x254xf32>
    %398 = vector.extract_strided_slice %378 {offsets = [0, 0], sizes = [16, 2], strides = [1, 1]} : vector<16x256xf32> to vector<16x2xf32>
    %399 = tpu.concatenate %397, %398 in 1 : vector<16x254xf32>, vector<16x2xf32> -> vector<16x256xf32>
    %400 = vector.shape_cast %396 : vector<256xf32> to vector<1x256xf32>
    %401 = vector.broadcast %400 : vector<1x256xf32> to vector<16x256xf32>
    %402 = arith.mulf %401, %399 : vector<16x256xf32>
    %403 = arith.addf %394, %402 : vector<16x256xf32>
    %c3_119 = arith.constant 3 : index
    %c0_120 = arith.constant 0 : index
    %404 = vector.load %arg5[%c3_119, %c0_120] : memref<16x256xf32, #tpu.memory_space<vmem>>, vector<1x256xf32>
    %405 = vector.shape_cast %404 : vector<1x256xf32> to vector<256xf32>
    %406 = vector.extract_strided_slice %378 {offsets = [0, 3], sizes = [16, 253], strides = [1, 1]} : vector<16x256xf32> to vector<16x253xf32>
    %407 = vector.extract_strided_slice %378 {offsets = [0, 0], sizes = [16, 3], strides = [1, 1]} : vector<16x256xf32> to vector<16x3xf32>
    %408 = tpu.concatenate %406, %407 in 1 : vector<16x253xf32>, vector<16x3xf32> -> vector<16x256xf32>
    %409 = vector.shape_cast %405 : vector<256xf32> to vector<1x256xf32>
    %410 = vector.broadcast %409 : vector<1x256xf32> to vector<16x256xf32>
    %411 = arith.mulf %410, %408 : vector<16x256xf32>
    %412 = arith.addf %403, %411 : vector<16x256xf32>
    %c4_121 = arith.constant 4 : index
    %c0_122 = arith.constant 0 : index
    %413 = vector.load %arg5[%c4_121, %c0_122] : memref<16x256xf32, #tpu.memory_space<vmem>>, vector<1x256xf32>
    %414 = vector.shape_cast %413 : vector<1x256xf32> to vector<256xf32>
    %415 = vector.extract_strided_slice %378 {offsets = [0, 4], sizes = [16, 252], strides = [1, 1]} : vector<16x256xf32> to vector<16x252xf32>
    %416 = vector.extract_strided_slice %378 {offsets = [0, 0], sizes = [16, 4], strides = [1, 1]} : vector<16x256xf32> to vector<16x4xf32>
    %417 = tpu.concatenate %415, %416 in 1 : vector<16x252xf32>, vector<16x4xf32> -> vector<16x256xf32>
    %418 = vector.shape_cast %414 : vector<256xf32> to vector<1x256xf32>
    %419 = vector.broadcast %418 : vector<1x256xf32> to vector<16x256xf32>
    %420 = arith.mulf %419, %417 : vector<16x256xf32>
    %421 = arith.addf %412, %420 : vector<16x256xf32>
    %c5_123 = arith.constant 5 : index
    %c0_124 = arith.constant 0 : index
    %422 = vector.load %arg5[%c5_123, %c0_124] : memref<16x256xf32, #tpu.memory_space<vmem>>, vector<1x256xf32>
    %423 = vector.shape_cast %422 : vector<1x256xf32> to vector<256xf32>
    %424 = vector.extract_strided_slice %378 {offsets = [0, 5], sizes = [16, 251], strides = [1, 1]} : vector<16x256xf32> to vector<16x251xf32>
    %425 = vector.extract_strided_slice %378 {offsets = [0, 0], sizes = [16, 5], strides = [1, 1]} : vector<16x256xf32> to vector<16x5xf32>
    %426 = tpu.concatenate %424, %425 in 1 : vector<16x251xf32>, vector<16x5xf32> -> vector<16x256xf32>
    %427 = vector.shape_cast %423 : vector<256xf32> to vector<1x256xf32>
    %428 = vector.broadcast %427 : vector<1x256xf32> to vector<16x256xf32>
    %429 = arith.mulf %428, %426 : vector<16x256xf32>
    %430 = arith.addf %421, %429 : vector<16x256xf32>
    %c6_125 = arith.constant 6 : index
    %c0_126 = arith.constant 0 : index
    %431 = vector.load %arg5[%c6_125, %c0_126] : memref<16x256xf32, #tpu.memory_space<vmem>>, vector<1x256xf32>
    %432 = vector.shape_cast %431 : vector<1x256xf32> to vector<256xf32>
    %433 = vector.extract_strided_slice %378 {offsets = [0, 6], sizes = [16, 250], strides = [1, 1]} : vector<16x256xf32> to vector<16x250xf32>
    %434 = vector.extract_strided_slice %378 {offsets = [0, 0], sizes = [16, 6], strides = [1, 1]} : vector<16x256xf32> to vector<16x6xf32>
    %435 = tpu.concatenate %433, %434 in 1 : vector<16x250xf32>, vector<16x6xf32> -> vector<16x256xf32>
    %436 = vector.shape_cast %432 : vector<256xf32> to vector<1x256xf32>
    %437 = vector.broadcast %436 : vector<1x256xf32> to vector<16x256xf32>
    %438 = arith.mulf %437, %435 : vector<16x256xf32>
    %439 = arith.addf %430, %438 : vector<16x256xf32>
    %c7_127 = arith.constant 7 : index
    %c0_128 = arith.constant 0 : index
    %440 = vector.load %arg5[%c7_127, %c0_128] : memref<16x256xf32, #tpu.memory_space<vmem>>, vector<1x256xf32>
    %441 = vector.shape_cast %440 : vector<1x256xf32> to vector<256xf32>
    %442 = vector.extract_strided_slice %378 {offsets = [0, 7], sizes = [16, 249], strides = [1, 1]} : vector<16x256xf32> to vector<16x249xf32>
    %443 = vector.extract_strided_slice %378 {offsets = [0, 0], sizes = [16, 7], strides = [1, 1]} : vector<16x256xf32> to vector<16x7xf32>
    %444 = tpu.concatenate %442, %443 in 1 : vector<16x249xf32>, vector<16x7xf32> -> vector<16x256xf32>
    %445 = vector.shape_cast %441 : vector<256xf32> to vector<1x256xf32>
    %446 = vector.broadcast %445 : vector<1x256xf32> to vector<16x256xf32>
    %447 = arith.mulf %446, %444 : vector<16x256xf32>
    %448 = arith.addf %439, %447 : vector<16x256xf32>
    %cst_129 = arith.constant 0.000000e+00 : f32
    %449 = vector.broadcast %cst_129 : f32 to vector<16x256xf32>
    %c8_130 = arith.constant 8 : index
    %c0_131 = arith.constant 0 : index
    %450 = vector.load %arg5[%c8_130, %c0_131] : memref<16x256xf32, #tpu.memory_space<vmem>>, vector<1x256xf32>
    %451 = vector.shape_cast %450 : vector<1x256xf32> to vector<256xf32>
    %452 = vector.shape_cast %451 : vector<256xf32> to vector<1x256xf32>
    %453 = vector.broadcast %452 : vector<1x256xf32> to vector<16x256xf32>
    %454 = arith.mulf %453, %448 : vector<16x256xf32>
    %455 = arith.addf %449, %454 : vector<16x256xf32>
    %c9 = arith.constant 9 : index
    %c0_132 = arith.constant 0 : index
    %456 = vector.load %arg5[%c9, %c0_132] : memref<16x256xf32, #tpu.memory_space<vmem>>, vector<1x256xf32>
    %457 = vector.shape_cast %456 : vector<1x256xf32> to vector<256xf32>
    %458 = vector.extract_strided_slice %448 {offsets = [0, 24], sizes = [16, 232], strides = [1, 1]} : vector<16x256xf32> to vector<16x232xf32>
    %459 = vector.extract_strided_slice %448 {offsets = [0, 0], sizes = [16, 24], strides = [1, 1]} : vector<16x256xf32> to vector<16x24xf32>
    %460 = tpu.concatenate %458, %459 in 1 : vector<16x232xf32>, vector<16x24xf32> -> vector<16x256xf32>
    %461 = vector.shape_cast %457 : vector<256xf32> to vector<1x256xf32>
    %462 = vector.broadcast %461 : vector<1x256xf32> to vector<16x256xf32>
    %463 = arith.mulf %462, %460 : vector<16x256xf32>
    %464 = arith.addf %455, %463 : vector<16x256xf32>
    %c10 = arith.constant 10 : index
    %c0_133 = arith.constant 0 : index
    %465 = vector.load %arg5[%c10, %c0_133] : memref<16x256xf32, #tpu.memory_space<vmem>>, vector<1x256xf32>
    %466 = vector.shape_cast %465 : vector<1x256xf32> to vector<256xf32>
    %467 = vector.extract_strided_slice %448 {offsets = [0, 48], sizes = [16, 208], strides = [1, 1]} : vector<16x256xf32> to vector<16x208xf32>
    %468 = vector.extract_strided_slice %448 {offsets = [0, 0], sizes = [16, 48], strides = [1, 1]} : vector<16x256xf32> to vector<16x48xf32>
    %469 = tpu.concatenate %467, %468 in 1 : vector<16x208xf32>, vector<16x48xf32> -> vector<16x256xf32>
    %470 = vector.shape_cast %466 : vector<256xf32> to vector<1x256xf32>
    %471 = vector.broadcast %470 : vector<1x256xf32> to vector<16x256xf32>
    %472 = arith.mulf %471, %469 : vector<16x256xf32>
    %473 = arith.addf %464, %472 : vector<16x256xf32>
    %c11 = arith.constant 11 : index
    %c0_134 = arith.constant 0 : index
    %474 = vector.load %arg5[%c11, %c0_134] : memref<16x256xf32, #tpu.memory_space<vmem>>, vector<1x256xf32>
    %475 = vector.shape_cast %474 : vector<1x256xf32> to vector<256xf32>
    %476 = vector.extract_strided_slice %448 {offsets = [0, 72], sizes = [16, 184], strides = [1, 1]} : vector<16x256xf32> to vector<16x184xf32>
    %477 = vector.extract_strided_slice %448 {offsets = [0, 0], sizes = [16, 72], strides = [1, 1]} : vector<16x256xf32> to vector<16x72xf32>
    %478 = tpu.concatenate %476, %477 in 1 : vector<16x184xf32>, vector<16x72xf32> -> vector<16x256xf32>
    %479 = vector.shape_cast %475 : vector<256xf32> to vector<1x256xf32>
    %480 = vector.broadcast %479 : vector<1x256xf32> to vector<16x256xf32>
    %481 = arith.mulf %480, %478 : vector<16x256xf32>
    %482 = arith.addf %473, %481 : vector<16x256xf32>
    %c12 = arith.constant 12 : index
    %c0_135 = arith.constant 0 : index
    %483 = vector.load %arg5[%c12, %c0_135] : memref<16x256xf32, #tpu.memory_space<vmem>>, vector<1x256xf32>
    %484 = vector.shape_cast %483 : vector<1x256xf32> to vector<256xf32>
    %485 = vector.extract_strided_slice %448 {offsets = [0, 96], sizes = [16, 160], strides = [1, 1]} : vector<16x256xf32> to vector<16x160xf32>
    %486 = vector.extract_strided_slice %448 {offsets = [0, 0], sizes = [16, 96], strides = [1, 1]} : vector<16x256xf32> to vector<16x96xf32>
    %487 = tpu.concatenate %485, %486 in 1 : vector<16x160xf32>, vector<16x96xf32> -> vector<16x256xf32>
    %488 = vector.shape_cast %484 : vector<256xf32> to vector<1x256xf32>
    %489 = vector.broadcast %488 : vector<1x256xf32> to vector<16x256xf32>
    %490 = arith.mulf %489, %487 : vector<16x256xf32>
    %491 = arith.addf %482, %490 : vector<16x256xf32>
    %c13 = arith.constant 13 : index
    %c0_136 = arith.constant 0 : index
    %492 = vector.load %arg5[%c13, %c0_136] : memref<16x256xf32, #tpu.memory_space<vmem>>, vector<1x256xf32>
    %493 = vector.shape_cast %492 : vector<1x256xf32> to vector<256xf32>
    %494 = vector.extract_strided_slice %448 {offsets = [0, 120], sizes = [16, 136], strides = [1, 1]} : vector<16x256xf32> to vector<16x136xf32>
    %495 = vector.extract_strided_slice %448 {offsets = [0, 0], sizes = [16, 120], strides = [1, 1]} : vector<16x256xf32> to vector<16x120xf32>
    %496 = tpu.concatenate %494, %495 in 1 : vector<16x136xf32>, vector<16x120xf32> -> vector<16x256xf32>
    %497 = vector.shape_cast %493 : vector<256xf32> to vector<1x256xf32>
    %498 = vector.broadcast %497 : vector<1x256xf32> to vector<16x256xf32>
    %499 = arith.mulf %498, %496 : vector<16x256xf32>
    %500 = arith.addf %491, %499 : vector<16x256xf32>
    %c14 = arith.constant 14 : index
    %c0_137 = arith.constant 0 : index
    %501 = vector.load %arg5[%c14, %c0_137] : memref<16x256xf32, #tpu.memory_space<vmem>>, vector<1x256xf32>
    %502 = vector.shape_cast %501 : vector<1x256xf32> to vector<256xf32>
    %503 = vector.extract_strided_slice %448 {offsets = [0, 144], sizes = [16, 112], strides = [1, 1]} : vector<16x256xf32> to vector<16x112xf32>
    %504 = vector.extract_strided_slice %448 {offsets = [0, 0], sizes = [16, 144], strides = [1, 1]} : vector<16x256xf32> to vector<16x144xf32>
    %505 = tpu.concatenate %503, %504 in 1 : vector<16x112xf32>, vector<16x144xf32> -> vector<16x256xf32>
    %506 = vector.shape_cast %502 : vector<256xf32> to vector<1x256xf32>
    %507 = vector.broadcast %506 : vector<1x256xf32> to vector<16x256xf32>
    %508 = arith.mulf %507, %505 : vector<16x256xf32>
    %509 = arith.addf %500, %508 : vector<16x256xf32>
    %c15 = arith.constant 15 : index
    %c0_138 = arith.constant 0 : index
    %510 = vector.load %arg5[%c15, %c0_138] : memref<16x256xf32, #tpu.memory_space<vmem>>, vector<1x256xf32>
    %511 = vector.shape_cast %510 : vector<1x256xf32> to vector<256xf32>
    %512 = vector.extract_strided_slice %448 {offsets = [0, 168], sizes = [16, 88], strides = [1, 1]} : vector<16x256xf32> to vector<16x88xf32>
    %513 = vector.extract_strided_slice %448 {offsets = [0, 0], sizes = [16, 168], strides = [1, 1]} : vector<16x256xf32> to vector<16x168xf32>
    %514 = tpu.concatenate %512, %513 in 1 : vector<16x88xf32>, vector<16x168xf32> -> vector<16x256xf32>
    %515 = vector.shape_cast %511 : vector<256xf32> to vector<1x256xf32>
    %516 = vector.broadcast %515 : vector<1x256xf32> to vector<16x256xf32>
    %517 = arith.mulf %516, %514 : vector<16x256xf32>
    %518 = arith.addf %509, %517 : vector<16x256xf32>
    %519 = vector.extract_strided_slice %518 {offsets = [0, 0], sizes = [16, 64], strides = [1, 1]} : vector<16x256xf32> to vector<16x64xf32>
    %c0_139 = arith.constant 0 : index
    %c0_140 = arith.constant 0 : index
    %520 = vector.load %arg15[%c0_139, %c0_140] : memref<16x1xf32, #tpu.memory_space<vmem>>, vector<16x1xf32>
    %521 = vector.broadcast %520 : vector<16x1xf32> to vector<16x64xf32>
    %522 = arith.addf %519, %521 : vector<16x64xf32>
    %cst_141 = arith.constant 0.000000e+00 : f32
    %523 = vector.broadcast %cst_141 : f32 to vector<16x64xf32>
    %524 = arith.cmpf oge, %522, %523 : vector<16x64xf32>
    %525 = vector.broadcast %4 : f32 to vector<16x64xf32>
    %526 = arith.mulf %525, %522 : vector<16x64xf32>
    %527 = arith.select %524, %522, %526 : vector<16x64xi1>, vector<16x64xf32>
    %528 = vector.extract_strided_slice %527 {offsets = [0, 55], sizes = [16, 9], strides = [1, 1]} : vector<16x64xf32> to vector<16x9xf32>
    %529 = vector.extract_strided_slice %527 {offsets = [0, 0], sizes = [16, 55], strides = [1, 1]} : vector<16x64xf32> to vector<16x55xf32>
    %530 = tpu.concatenate %528, %529 in 1 : vector<16x9xf32>, vector<16x55xf32> -> vector<16x64xf32>
    %c0_142 = arith.constant 0 : index
    %c0_143 = arith.constant 0 : index
    %531 = vector.load %arg4[%c0_142, %c0_143] : memref<9x64xf32, #tpu.memory_space<vmem>>, vector<1x64xf32>
    %532 = vector.shape_cast %531 : vector<1x64xf32> to vector<64xf32>
    %533 = vector.shape_cast %532 : vector<64xf32> to vector<1x64xf32>
    %534 = vector.broadcast %533 : vector<1x64xf32> to vector<16x64xf32>
    %535 = arith.mulf %530, %534 : vector<16x64xf32>
    %536 = vector.extract_strided_slice %527 {offsets = [0, 56], sizes = [16, 8], strides = [1, 1]} : vector<16x64xf32> to vector<16x8xf32>
    %537 = vector.extract_strided_slice %527 {offsets = [0, 0], sizes = [16, 56], strides = [1, 1]} : vector<16x64xf32> to vector<16x56xf32>
    %538 = tpu.concatenate %536, %537 in 1 : vector<16x8xf32>, vector<16x56xf32> -> vector<16x64xf32>
    %c1_144 = arith.constant 1 : index
    %c0_145 = arith.constant 0 : index
    %539 = vector.load %arg4[%c1_144, %c0_145] : memref<9x64xf32, #tpu.memory_space<vmem>>, vector<1x64xf32>
    %540 = vector.shape_cast %539 : vector<1x64xf32> to vector<64xf32>
    %541 = vector.shape_cast %540 : vector<64xf32> to vector<1x64xf32>
    %542 = vector.broadcast %541 : vector<1x64xf32> to vector<16x64xf32>
    %543 = arith.mulf %538, %542 : vector<16x64xf32>
    %544 = vector.extract_strided_slice %527 {offsets = [0, 57], sizes = [16, 7], strides = [1, 1]} : vector<16x64xf32> to vector<16x7xf32>
    %545 = vector.extract_strided_slice %527 {offsets = [0, 0], sizes = [16, 57], strides = [1, 1]} : vector<16x64xf32> to vector<16x57xf32>
    %546 = tpu.concatenate %544, %545 in 1 : vector<16x7xf32>, vector<16x57xf32> -> vector<16x64xf32>
    %c2_146 = arith.constant 2 : index
    %c0_147 = arith.constant 0 : index
    %547 = vector.load %arg4[%c2_146, %c0_147] : memref<9x64xf32, #tpu.memory_space<vmem>>, vector<1x64xf32>
    %548 = vector.shape_cast %547 : vector<1x64xf32> to vector<64xf32>
    %549 = vector.shape_cast %548 : vector<64xf32> to vector<1x64xf32>
    %550 = vector.broadcast %549 : vector<1x64xf32> to vector<16x64xf32>
    %551 = arith.mulf %546, %550 : vector<16x64xf32>
    %552 = vector.extract_strided_slice %527 {offsets = [0, 63], sizes = [16, 1], strides = [1, 1]} : vector<16x64xf32> to vector<16x1xf32>
    %553 = vector.extract_strided_slice %527 {offsets = [0, 0], sizes = [16, 63], strides = [1, 1]} : vector<16x64xf32> to vector<16x63xf32>
    %554 = tpu.concatenate %552, %553 in 1 : vector<16x1xf32>, vector<16x63xf32> -> vector<16x64xf32>
    %c3_148 = arith.constant 3 : index
    %c0_149 = arith.constant 0 : index
    %555 = vector.load %arg4[%c3_148, %c0_149] : memref<9x64xf32, #tpu.memory_space<vmem>>, vector<1x64xf32>
    %556 = vector.shape_cast %555 : vector<1x64xf32> to vector<64xf32>
    %557 = vector.shape_cast %556 : vector<64xf32> to vector<1x64xf32>
    %558 = vector.broadcast %557 : vector<1x64xf32> to vector<16x64xf32>
    %559 = arith.mulf %554, %558 : vector<16x64xf32>
    %560 = vector.extract_strided_slice %527 {offsets = [0, 1], sizes = [16, 63], strides = [1, 1]} : vector<16x64xf32> to vector<16x63xf32>
    %561 = vector.extract_strided_slice %527 {offsets = [0, 0], sizes = [16, 1], strides = [1, 1]} : vector<16x64xf32> to vector<16x1xf32>
    %562 = tpu.concatenate %560, %561 in 1 : vector<16x63xf32>, vector<16x1xf32> -> vector<16x64xf32>
    %c5_150 = arith.constant 5 : index
    %c0_151 = arith.constant 0 : index
    %563 = vector.load %arg4[%c5_150, %c0_151] : memref<9x64xf32, #tpu.memory_space<vmem>>, vector<1x64xf32>
    %564 = vector.shape_cast %563 : vector<1x64xf32> to vector<64xf32>
    %565 = vector.shape_cast %564 : vector<64xf32> to vector<1x64xf32>
    %566 = vector.broadcast %565 : vector<1x64xf32> to vector<16x64xf32>
    %567 = arith.mulf %562, %566 : vector<16x64xf32>
    %568 = vector.extract_strided_slice %527 {offsets = [0, 7], sizes = [16, 57], strides = [1, 1]} : vector<16x64xf32> to vector<16x57xf32>
    %569 = vector.extract_strided_slice %527 {offsets = [0, 0], sizes = [16, 7], strides = [1, 1]} : vector<16x64xf32> to vector<16x7xf32>
    %570 = tpu.concatenate %568, %569 in 1 : vector<16x57xf32>, vector<16x7xf32> -> vector<16x64xf32>
    %c6_152 = arith.constant 6 : index
    %c0_153 = arith.constant 0 : index
    %571 = vector.load %arg4[%c6_152, %c0_153] : memref<9x64xf32, #tpu.memory_space<vmem>>, vector<1x64xf32>
    %572 = vector.shape_cast %571 : vector<1x64xf32> to vector<64xf32>
    %573 = vector.shape_cast %572 : vector<64xf32> to vector<1x64xf32>
    %574 = vector.broadcast %573 : vector<1x64xf32> to vector<16x64xf32>
    %575 = arith.mulf %570, %574 : vector<16x64xf32>
    %576 = vector.extract_strided_slice %527 {offsets = [0, 8], sizes = [16, 56], strides = [1, 1]} : vector<16x64xf32> to vector<16x56xf32>
    %577 = vector.extract_strided_slice %527 {offsets = [0, 0], sizes = [16, 8], strides = [1, 1]} : vector<16x64xf32> to vector<16x8xf32>
    %578 = tpu.concatenate %576, %577 in 1 : vector<16x56xf32>, vector<16x8xf32> -> vector<16x64xf32>
    %c7_154 = arith.constant 7 : index
    %c0_155 = arith.constant 0 : index
    %579 = vector.load %arg4[%c7_154, %c0_155] : memref<9x64xf32, #tpu.memory_space<vmem>>, vector<1x64xf32>
    %580 = vector.shape_cast %579 : vector<1x64xf32> to vector<64xf32>
    %581 = vector.shape_cast %580 : vector<64xf32> to vector<1x64xf32>
    %582 = vector.broadcast %581 : vector<1x64xf32> to vector<16x64xf32>
    %583 = arith.mulf %578, %582 : vector<16x64xf32>
    %584 = vector.extract_strided_slice %527 {offsets = [0, 9], sizes = [16, 55], strides = [1, 1]} : vector<16x64xf32> to vector<16x55xf32>
    %585 = vector.extract_strided_slice %527 {offsets = [0, 0], sizes = [16, 9], strides = [1, 1]} : vector<16x64xf32> to vector<16x9xf32>
    %586 = tpu.concatenate %584, %585 in 1 : vector<16x55xf32>, vector<16x9xf32> -> vector<16x64xf32>
    %c8_156 = arith.constant 8 : index
    %c0_157 = arith.constant 0 : index
    %587 = vector.load %arg4[%c8_156, %c0_157] : memref<9x64xf32, #tpu.memory_space<vmem>>, vector<1x64xf32>
    %588 = vector.shape_cast %587 : vector<1x64xf32> to vector<64xf32>
    %589 = vector.shape_cast %588 : vector<64xf32> to vector<1x64xf32>
    %590 = vector.broadcast %589 : vector<1x64xf32> to vector<16x64xf32>
    %591 = arith.mulf %586, %590 : vector<16x64xf32>
    %592 = tpu.concatenate %535, %543, %551, %559, %527, %567, %575, %583, %591 in 0 : vector<16x64xf32>, vector<16x64xf32>, vector<16x64xf32>, vector<16x64xf32>, vector<16x64xf32>, vector<16x64xf32>, vector<16x64xf32>, vector<16x64xf32>, vector<16x64xf32> -> vector<144x64xf32>
    %c0_158 = arith.constant 0 : index
    %c0_159 = arith.constant 0 : index
    %593 = vector.load %arg16[%c0_158, %c0_159] : memref<16x144xf32, #tpu.memory_space<vmem>>, vector<16x144xf32>
    %cst_160 = arith.constant dense<0.000000e+00> : vector<16x64xf32>
    %594 = tpu.matmul %593, %592, %cst_160 {dimension_numbers = #tpu.dot_dimension_numbers<[1], [0], [0], [1], [0, 0, 1, 1], [], []>} : vector<16x144xf32>, vector<144x64xf32>, vector<16x64xf32> -> vector<16x64xf32>
    %c0_161 = arith.constant 0 : index
    %c0_162 = arith.constant 0 : index
    %595 = vector.load %arg17[%c0_161, %c0_162] : memref<16x1xf32, #tpu.memory_space<vmem>>, vector<16x1xf32>
    %596 = vector.broadcast %595 : vector<16x1xf32> to vector<16x64xf32>
    %597 = arith.addf %594, %596 : vector<16x64xf32>
    %cst_163 = arith.constant 0.000000e+00 : f32
    %598 = vector.broadcast %cst_163 : f32 to vector<16x64xf32>
    %599 = arith.cmpf oge, %597, %598 : vector<16x64xf32>
    %600 = vector.broadcast %5 : f32 to vector<16x64xf32>
    %601 = arith.mulf %600, %597 : vector<16x64xf32>
    %602 = arith.select %599, %597, %601 : vector<16x64xi1>, vector<16x64xf32>
    %603 = arith.addf %311, %602 : vector<16x64xf32>
    %604 = vector.shape_cast %603 : vector<16x64xf32> to vector<1x16x64xf32>
    %c0_164 = arith.constant 0 : index
    %c0_165 = arith.constant 0 : index
    %c0_166 = arith.constant 0 : index
    %605 = vector.load %arg20[%c0_164, %c0_165, %c0_166] : memref<1x16x64xf32, #tpu.memory_space<vmem>>, vector<1x16x64xf32>
    tpu.vector_store %arg20[%c0_164, %c0_165, %c0_166], %604 {strides = array<i32>} : memref<1x16x64xf32, #tpu.memory_space<vmem>>, vector<1x16x64xf32>,
    return
  }
  func.func @transform_0(%arg0: i32) -> (i32, i32, i32) {
    %c0_i32 = arith.constant 0 : i32
    %c0_i32_0 = arith.constant 0 : i32
    %c0_i32_1 = arith.constant 0 : i32
    return %arg0, %c0_i32, %c0_i32_0 : i32, i32, i32
  }
  func.func @transform_1(%arg0: i32) -> (i32, i32, i32) {
    %c0_i32 = arith.constant 0 : i32
    %c0_i32_0 = arith.constant 0 : i32
    %c0_i32_1 = arith.constant 0 : i32
    return %arg0, %c0_i32, %c0_i32_0 : i32, i32, i32
  }
  func.func @transform_2(%arg0: i32) -> (i32, i32) {
    %c0_i32 = arith.constant 0 : i32
    %c0_i32_0 = arith.constant 0 : i32
    %c0_i32_1 = arith.constant 0 : i32
    return %c0_i32, %c0_i32_0 : i32, i32
  }
  func.func @transform_3(%arg0: i32) -> (i32, i32) {
    %c0_i32 = arith.constant 0 : i32
    %c0_i32_0 = arith.constant 0 : i32
    %c0_i32_1 = arith.constant 0 : i32
    return %c0_i32, %c0_i32_0 : i32, i32
  }
  func.func @transform_4(%arg0: i32) -> (i32, i32) {
    %c0_i32 = arith.constant 0 : i32
    %c0_i32_0 = arith.constant 0 : i32
    %c0_i32_1 = arith.constant 0 : i32
    return %c0_i32, %c0_i32_0 : i32, i32
  }
  func.func @transform_5(%arg0: i32) -> (i32, i32) {
    %c0_i32 = arith.constant 0 : i32
    %c0_i32_0 = arith.constant 0 : i32
    %c0_i32_1 = arith.constant 0 : i32
    return %c0_i32, %c0_i32_0 : i32, i32
  }
  func.func @transform_6(%arg0: i32) -> (i32, i32) {
    %c0_i32 = arith.constant 0 : i32
    %c0_i32_0 = arith.constant 0 : i32
    %c0_i32_1 = arith.constant 0 : i32
    return %c0_i32, %c0_i32_0 : i32, i32
  }
  func.func @transform_7(%arg0: i32) -> (i32, i32) {
    %c0_i32 = arith.constant 0 : i32
    %c0_i32_0 = arith.constant 0 : i32
    %c0_i32_1 = arith.constant 0 : i32
    return %c0_i32, %c0_i32_0 : i32, i32
  }
  func.func @transform_8(%arg0: i32) -> (i32, i32) {
    %c0_i32 = arith.constant 0 : i32
    %c0_i32_0 = arith.constant 0 : i32
    %c0_i32_1 = arith.constant 0 : i32
    return %c0_i32, %c0_i32_0 : i32, i32
  }
  func.func @transform_9(%arg0: i32) -> (i32, i32) {
    %c0_i32 = arith.constant 0 : i32
    %c0_i32_0 = arith.constant 0 : i32
    %c0_i32_1 = arith.constant 0 : i32
    return %c0_i32, %c0_i32_0 : i32, i32
  }
  func.func @transform_10(%arg0: i32) -> (i32, i32) {
    %c0_i32 = arith.constant 0 : i32
    %c0_i32_0 = arith.constant 0 : i32
    %c0_i32_1 = arith.constant 0 : i32
    return %c0_i32, %c0_i32_0 : i32, i32
  }
  func.func @transform_11(%arg0: i32) -> (i32, i32) {
    %c0_i32 = arith.constant 0 : i32
    %c0_i32_0 = arith.constant 0 : i32
    %c0_i32_1 = arith.constant 0 : i32
    return %c0_i32, %c0_i32_0 : i32, i32
  }
  func.func @transform_12(%arg0: i32) -> (i32, i32) {
    %c0_i32 = arith.constant 0 : i32
    %c0_i32_0 = arith.constant 0 : i32
    %c0_i32_1 = arith.constant 0 : i32
    return %c0_i32, %c0_i32_0 : i32, i32
  }
  func.func @transform_13(%arg0: i32) -> (i32, i32) {
    %c0_i32 = arith.constant 0 : i32
    %c0_i32_0 = arith.constant 0 : i32
    %c0_i32_1 = arith.constant 0 : i32
    return %c0_i32, %c0_i32_0 : i32, i32
  }
  func.func @transform_14(%arg0: i32) -> (i32, i32) {
    %c0_i32 = arith.constant 0 : i32
    %c0_i32_0 = arith.constant 0 : i32
    %c0_i32_1 = arith.constant 0 : i32
    return %c0_i32, %c0_i32_0 : i32, i32
  }
  func.func @transform_15(%arg0: i32) -> (i32, i32) {
    %c0_i32 = arith.constant 0 : i32
    %c0_i32_0 = arith.constant 0 : i32
    %c0_i32_1 = arith.constant 0 : i32
    return %c0_i32, %c0_i32_0 : i32, i32
  }
  func.func @transform_16(%arg0: i32) -> (i32, i32) {
    %c0_i32 = arith.constant 0 : i32
    %c0_i32_0 = arith.constant 0 : i32
    %c0_i32_1 = arith.constant 0 : i32
    return %c0_i32, %c0_i32_0 : i32, i32
  }
  func.func @transform_17(%arg0: i32) -> i32 {
    %c0_i32 = arith.constant 0 : i32
    %c0_i32_0 = arith.constant 0 : i32
    return %c0_i32 : i32
  }
  func.func @transform_18(%arg0: i32) -> (i32, i32, i32) {
    %c0_i32 = arith.constant 0 : i32
    %c0_i32_0 = arith.constant 0 : i32
    %c0_i32_1 = arith.constant 0 : i32
    return %arg0, %c0_i32, %c0_i32_0 : i32, i32, i32
  }
  func.func @transform_19(%arg0: i32) -> (i32, i32, i32) {
    %c0_i32 = arith.constant 0 : i32
    %c0_i32_0 = arith.constant 0 : i32
    %c0_i32_1 = arith.constant 0 : i32
    return %arg0, %c0_i32, %c0_i32_0 : i32, i32, i32
  }
}

</mosaic_0001>

<llo_original>
// kernel: tpu_custom_call.1
$region0: #{tpu_custom_call.1}
  #allocation0 [shape = 'u32[]', space=smem, size = 0x4, offset = 0x4, fixed_abs, tag = 'smem constant byte address 0x4 - core index']
  #allocation1 [shape = 'u32[72,128]{1,0:T(1,128)}', space=vmem, size = 0x9000, scoped, tag = 'internal scratch']
  %s0 = inlined_call_operand.vmem [shape: f32[2,4,256], index: 0, kind: input, shape index: {}]
  %s1 = inlined_call_operand.hbm [shape: f32[2,8,64], index: 1, kind: input, shape index: {}]
  %s2 = inlined_call_operand.vmem [shape: f32[9,256], index: 2, kind: input, shape index: {}]
  %s3 = inlined_call_operand.hbm [shape: f32[9,64], index: 3, kind: input, shape index: {}]
  %s4 = inlined_call_operand.vmem [shape: f32[16,256], index: 4, kind: input, shape index: {}]
  %s5 = inlined_call_operand.hbm [shape: f32[8,36], index: 5, kind: input, shape index: {}]
  %s6 = inlined_call_operand.vmem [shape: f32[8,1], index: 6, kind: input, shape index: {}]
  %s7 = inlined_call_operand.hbm [shape: f32[8,72], index: 7, kind: input, shape index: {}]
  %s8 = inlined_call_operand.vmem [shape: f32[8,1], index: 8, kind: input, shape index: {}]
  %s9 = inlined_call_operand.hbm [shape: f32[16,72], index: 9, kind: input, shape index: {}]
  %s10 = inlined_call_operand.vmem [shape: f32[16,1], index: 10, kind: input, shape index: {}]
  %s11 = inlined_call_operand.hbm [shape: f32[16,144], index: 11, kind: input, shape index: {}]
  %s12 = inlined_call_operand.vmem [shape: f32[16,1], index: 12, kind: input, shape index: {}]
  %s13 = inlined_call_operand.hbm [shape: f32[16,72], index: 13, kind: input, shape index: {}]
  %s14 = inlined_call_operand.vmem [shape: f32[16,1], index: 14, kind: input, shape index: {}]
  %s15 = inlined_call_operand.hbm [shape: f32[16,144], index: 15, kind: input, shape index: {}]
  %s16 = inlined_call_operand.vmem [shape: f32[16,1], index: 16, kind: input, shape index: {}]
  %s17 = inlined_call_operand.vmem [shape: f32[6], index: 17, kind: input, shape index: {}]
  %s18 = inlined_call_operand.hbm [shape: f32[2,8,256], index: 18, kind: output, shape index: {0}]
  %s19 = inlined_call_operand.hbm [shape: f32[2,16,64], index: 19, kind: output, shape index: {1}]
  %20 = xla_tuple %s18, %s19
  %s21 = sld [smem:[#allocation0]]
  $region149: #{tpu_custom_call.1} parent=0
    _
  %s23 = ssub.s32 1, %s21
  %s24 = scalar_select 0, %s23, %s21
  $region1: #{tpu_custom_call.1} parent=0
    #allocation2 [shape = 'u8[8192]{0}', space=vmem, size = 0x2000, scoped, tag = 'input window, operand 1']
    #allocation3 [shape = 's32[2]{0}', space=sflag, size = 0x8, scoped, tag = 'scoped memory for tpu_custom_call.1']
    #allocation4 [shape = 's32[2]{0}', space=sflag, size = 0x8, scoped, tag = 'scoped memory for tpu_custom_call.1']
    #allocation5 [shape = 's32[2]{0}', space=sflag, size = 0x8, scoped, tag = 'scoped memory for tpu_custom_call.1']
    #allocation6 [shape = 'u8[8192]{0}', space=vmem, size = 0x2000, scoped, tag = 'input window, operand 3, single buffered']
    #allocation7 [shape = 's32[1]{0}', space=sflag, size = 0x4, scoped, tag = 'scoped memory for tpu_custom_call.1']
    #allocation8 [shape = 'u8[4096]{0}', space=vmem, size = 0x1000, scoped, tag = 'input window, operand 5, single buffered']
    #allocation9 [shape = 'u8[4096]{0}', space=vmem, size = 0x1000, scoped, tag = 'input window, operand 7, single buffered']
    #allocation10 [shape = 's32[1]{0}', space=sflag, size = 0x4, scoped, tag = 'scoped memory for tpu_custom_call.1']
    #allocation11 [shape = 'u8[8192]{0}', space=vmem, size = 0x2000, scoped, tag = 'input window, operand 9, single buffered']
    #allocation12 [shape = 'u8[16384]{0}', space=vmem, size = 0x4000, scoped, tag = 'input window, operand 11, single buffered']
    #allocation13 [shape = 's32[1]{0}', space=sflag, size = 0x4, scoped, tag = 'scoped memory for tpu_custom_call.1']
    #allocation14 [shape = 'u8[8192]{0}', space=vmem, size = 0x2000, scoped, tag = 'input window, operand 13, single buffered']
    #allocation15 [shape = 'u8[16384]{0}', space=vmem, size = 0x4000, scoped, tag = 'input window, operand 15, single buffered']
    #allocation16 [shape = 's32[1]{0}', space=sflag, size = 0x4, scoped, tag = 'scoped memory for tpu_custom_call.1']
    #allocation17 [shape = 'u8[512]{0}', space=smem, size = 0x200, scoped, tag = 'input window, operand 17, single buffered']
    #allocation18 [shape = 'u8[16384]{0}', space=vmem, size = 0x4000, scoped, tag = 'output window, operand 0']
    #allocation19 [shape = 'u8[16384]{0}', space=vmem, size = 0x4000, scoped, tag = 'output window, operand 1']
    #allocation20 [shape = 's32[2]{0}', space=sflag, size = 0x8, scoped, tag = 'scoped memory for tpu_custom_call.1']
    %25 = vsyncpa [#allocation3], 0
    %s26 = scalar_lea.sflag [#allocation3], 1
    %27 = vsyncpa %s26, 0
    %28 = vsyncpa [#allocation7], 0
    %29 = vsyncpa [#allocation10], 0
    %30 = vsyncpa [#allocation13], 0
    %31 = vsyncpa [#allocation16], 0
    %32 = vsyncpa [#allocation5], 0
    %33 = vsyncpa [#allocation4], 0
    %s34 = scalar_lea.sflag [#allocation4], 1
    %35 = vsyncpa %s34, 0
    %36 = vsyncpa [#allocation20], 0
    %s37 = scalar_lea.sflag [#allocation20], 1
    %38 = vsyncpa %s37, 0
    loop: start=0, step=1, limit=4
    $region2: #{tpu_custom_call.1} parent=1 // loop_pre_header
      _
    $region3: #{tpu_custom_call.1} parent=1 // loop_header
      %s40 = sphi 0, %s44
      %p41 = scmp.ge.s32.totalorder %s40, 4
      %s50 = sphi 0, %s52
      %s53 = sphi 0, %s50
      %s54 = sphi 0, %s53
      %s70 = sphi 0, %s54
      %s76 = sphi 0, %s78
      %s79 = sphi 0, %s76
      %s80 = sphi 0, %s79
      %s96 = sphi 0, %s80
      %s100 = sphi 0, %s100
      %s102 = sphi 0, %s100
      %s103 = sphi 0, %s102
      %s117 = sphi 0, %s103
      %s121 = sphi 0, %s121
      %s123 = sphi 0, %s121
      %s124 = sphi 0, %s123
      %s138 = sphi 0, %s124
      %s142 = sphi 0, %s142
      %s144 = sphi 0, %s142
      %s145 = sphi 0, %s144
      %s159 = sphi 0, %s145
      %s163 = sphi 0, %s163
      %s165 = sphi 0, %s163
      %s166 = sphi 0, %s165
      %s180 = sphi 0, %s166
      %s184 = sphi 0, %s184
      %s186 = sphi 0, %s184
      %s187 = sphi 0, %s186
      %s201 = sphi 0, %s187
      %s205 = sphi 0, %s205
      %s207 = sphi 0, %s205
      %s208 = sphi 0, %s207
      %s222 = sphi 0, %s208
      %s226 = sphi 0, %s226
      %s228 = sphi 0, %s226
      %s229 = sphi 0, %s228
      %s243 = sphi 0, %s229
      %s247 = sphi 0, %s247
      %s249 = sphi 0, %s247
      %s250 = sphi 0, %s249
      %s264 = sphi 0, %s250
      %s268 = sphi 0, %s268
      %s270 = sphi 0, %s268
      %s271 = sphi 0, %s270
      %s285 = sphi 0, %s271
      %s289 = sphi 0, %s289
      %s291 = sphi 0, %s289
      %s292 = sphi 0, %s291
      %s306 = sphi 0, %s292
      %s310 = sphi 0, %s310
      %s312 = sphi 0, %s310
      %s313 = sphi 0, %s312
      %s327 = sphi 0, %s313
      %s331 = sphi 0, %s331
      %s333 = sphi 0, %s331
      %s334 = sphi 0, %s333
      %s348 = sphi 0, %s334
      %s352 = sphi 0, %s352
      %s354 = sphi 0, %s352
      %s355 = sphi 0, %s354
      %s369 = sphi 0, %s355
      %s373 = sphi 0, %s373
      %s375 = sphi 0, %s373
      %s376 = sphi 0, %s375
      %s390 = sphi 0, %s376
      %s394 = sphi 0, %s394
      %s396 = sphi 0, %s394
      %s397 = sphi 0, %s396
      %s411 = sphi 0, %s397
      %s415 = sphi 0, %s415
      %s417 = sphi 0, %s415
      %s418 = sphi 0, %s417
      %s432 = sphi 0, %s418
      %s438 = sphi 0, %s440
      %s441 = sphi 0, %s438
      %s442 = sphi 0, %s441
      %s458 = sphi 0, %s442
      %s464 = sphi 0, %s466
      %s467 = sphi 0, %s464
      %s468 = sphi 0, %s467
      %s484 = sphi 0, %s468
    $region4: #{tpu_custom_call.1} parent=1 // loop_header_branch
      %43 = sbr.rel (%p41) target = $region8
    $region5: #{tpu_custom_call.1} parent=1 // loop_body
      %s45 = ssub.s32 %s40, 1
      %s46 = ssub.s32 %s40, 2
      %s47 = sadd.s32 %s40, 1
      %s48 = ssub.s32 %s40, %s47
      %p49 = scmp.eq.s32.totalorder %s48, 0
      %s51 = sadd.s32 %s50, 1
      %s52 = scalar_select %p49, %s50, %s51
      %p55 = pneg %p49
      %p56 = scmp.eq.s32.totalorder %s40, 1
      %p57 = por %p55, %p56
      %p58 = scmp.ne.s32.totalorder %s50, %s53
      %p59 = scmp.eq.s32.totalorder %s40, 0
      %p60 = por %p58, %p59
      %p61 = scmp.ne.s32.totalorder %s50, %s53
      %p62 = scmp.eq.s32.totalorder %s45, 1
      %p63 = por %p61, %p62
      %p64 = scmp.ne.s32.totalorder %s53, %s54
      %p65 = scmp.eq.s32.totalorder %s45, 0
      %p66 = por %p64, %p65
      %p67 = scmp.ne.s32.totalorder %s53, %s54
      %p68 = scmp.eq.s32.totalorder %s46, 1
      %p69 = por %p67, %p68
      %p71 = scmp.ne.s32.totalorder %s54, %s70
      %p72 = scmp.eq.s32.totalorder %s46, 0
      %p73 = por %p71, %p72
      %s74 = ssub.s32 %s40, %s47
      %p75 = scmp.eq.s32.totalorder %s74, 0
      %s77 = sadd.s32 %s76, 1
      %s78 = scalar_select %p75, %s76, %s77
      %p81 = pneg %p75
      %p82 = scmp.eq.s32.totalorder %s40, 1
      %p83 = por %p81, %p82
      %p84 = scmp.ne.s32.totalorder %s76, %s79
      %p85 = scmp.eq.s32.totalorder %s40, 0
      %p86 = por %p84, %p85
      %p87 = scmp.ne.s32.totalorder %s76, %s79
      %p88 = scmp.eq.s32.totalorder %s45, 1
      %p89 = por %p87, %p88
      %p90 = scmp.ne.s32.totalorder %s79, %s80
      %p91 = scmp.eq.s32.totalorder %s45, 0
      %p92 = por %p90, %p91
      %p93 = scmp.ne.s32.totalorder %s79, %s80
      %p94 = scmp.eq.s32.totalorder %s46, 1
      %p95 = por %p93, %p94
      %p97 = scmp.ne.s32.totalorder %s80, %s96
      %p98 = scmp.eq.s32.totalorder %s46, 0
      %p99 = por %p97, %p98
      %s101 = sadd.s32 %s100, 1
      %p104 = scmp.eq.s32.totalorder %s40, 1
      %p105 = scmp.ne.s32.totalorder %s100, %s102
      %p106 = scmp.eq.s32.totalorder %s40, 0
      %p107 = por %p105, %p106
      %p108 = scmp.ne.s32.totalorder %s100, %s102
      %p109 = scmp.eq.s32.totalorder %s45, 1
      %p110 = por %p108, %p109
      %p111 = scmp.ne.s32.totalorder %s102, %s103
      %p112 = scmp.eq.s32.totalorder %s45, 0
      %p113 = por %p111, %p112
      %p114 = scmp.ne.s32.totalorder %s102, %s103
      %p115 = scmp.eq.s32.totalorder %s46, 1
      %p116 = por %p114, %p115
      %p118 = scmp.ne.s32.totalorder %s103, %s117
      %p119 = scmp.eq.s32.totalorder %s46, 0
      %p120 = por %p118, %p119
      %s122 = sadd.s32 %s121, 1
      %p125 = scmp.eq.s32.totalorder %s40, 1
      %p126 = scmp.ne.s32.totalorder %s121, %s123
      %p127 = scmp.eq.s32.totalorder %s40, 0
      %p128 = por %p126, %p127
      %p129 = scmp.ne.s32.totalorder %s121, %s123
      %p130 = scmp.eq.s32.totalorder %s45, 1
      %p131 = por %p129, %p130
      %p132 = scmp.ne.s32.totalorder %s123, %s124
      %p133 = scmp.eq.s32.totalorder %s45, 0
      %p134 = por %p132, %p133
      %p135 = scmp.ne.s32.totalorder %s123, %s124
      %p136 = scmp.eq.s32.totalorder %s46, 1
      %p137 = por %p135, %p136
      %p139 = scmp.ne.s32.totalorder %s124, %s138
      %p140 = scmp.eq.s32.totalorder %s46, 0
      %p141 = por %p139, %p140
      %s143 = sadd.s32 %s142, 1
      %p146 = scmp.eq.s32.totalorder %s40, 1
      %p147 = scmp.ne.s32.totalorder %s142, %s144
      %p148 = scmp.eq.s32.totalorder %s40, 0
      %p149 = por %p147, %p148
      %p150 = scmp.ne.s32.totalorder %s142, %s144
      %p151 = scmp.eq.s32.totalorder %s45, 1
      %p152 = por %p150, %p151
      %p153 = scmp.ne.s32.totalorder %s144, %s145
      %p154 = scmp.eq.s32.totalorder %s45, 0
      %p155 = por %p153, %p154
      %p156 = scmp.ne.s32.totalorder %s144, %s145
      %p157 = scmp.eq.s32.totalorder %s46, 1
      %p158 = por %p156, %p157
      %p160 = scmp.ne.s32.totalorder %s145, %s159
      %p161 = scmp.eq.s32.totalorder %s46, 0
      %p162 = por %p160, %p161
      %s164 = sadd.s32 %s163, 1
      %p167 = scmp.eq.s32.totalorder %s40, 1
      %p168 = scmp.ne.s32.totalorder %s163, %s165
      %p169 = scmp.eq.s32.totalorder %s40, 0
      %p170 = por %p168, %p169
      %p171 = scmp.ne.s32.totalorder %s163, %s165
      %p172 = scmp.eq.s32.totalorder %s45, 1
      %p173 = por %p171, %p172
      %p174 = scmp.ne.s32.totalorder %s165, %s166
      %p175 = scmp.eq.s32.totalorder %s45, 0
      %p176 = por %p174, %p175
      %p177 = scmp.ne.s32.totalorder %s165, %s166
      %p178 = scmp.eq.s32.totalorder %s46, 1
      %p179 = por %p177, %p178
      %p181 = scmp.ne.s32.totalorder %s166, %s180
      %p182 = scmp.eq.s32.totalorder %s46, 0
      %p183 = por %p181, %p182
      %s185 = sadd.s32 %s184, 1
      %p188 = scmp.eq.s32.totalorder %s40, 1
      %p189 = scmp.ne.s32.totalorder %s184, %s186
      %p190 = scmp.eq.s32.totalorder %s40, 0
      %p191 = por %p189, %p190
      %p192 = scmp.ne.s32.totalorder %s184, %s186
      %p193 = scmp.eq.s32.totalorder %s45, 1
      %p194 = por %p192, %p193
      %p195 = scmp.ne.s32.totalorder %s186, %s187
      %p196 = scmp.eq.s32.totalorder %s45, 0
      %p197 = por %p195, %p196
      %p198 = scmp.ne.s32.totalorder %s186, %s187
      %p199 = scmp.eq.s32.totalorder %s46, 1
      %p200 = por %p198, %p199
      %p202 = scmp.ne.s32.totalorder %s187, %s201
      %p203 = scmp.eq.s32.totalorder %s46, 0
      %p204 = por %p202, %p203
      %s206 = sadd.s32 %s205, 1
      %p209 = scmp.eq.s32.totalorder %s40, 1
      %p210 = scmp.ne.s32.totalorder %s205, %s207
      %p211 = scmp.eq.s32.totalorder %s40, 0
      %p212 = por %p210, %p211
      %p213 = scmp.ne.s32.totalorder %s205, %s207
      %p214 = scmp.eq.s32.totalorder %s45, 1
      %p215 = por %p213, %p214
      %p216 = scmp.ne.s32.totalorder %s207, %s208
      %p217 = scmp.eq.s32.totalorder %s45, 0
      %p218 = por %p216, %p217
      %p219 = scmp.ne.s32.totalorder %s207, %s208
      %p220 = scmp.eq.s32.totalorder %s46, 1
      %p221 = por %p219, %p220
      %p223 = scmp.ne.s32.totalorder %s208, %s222
      %p224 = scmp.eq.s32.totalorder %s46, 0
      %p225 = por %p223, %p224
      %s227 = sadd.s32 %s226, 1
      %p230 = scmp.eq.s32.totalorder %s40, 1
      %p231 = scmp.ne.s32.totalorder %s226, %s228
      %p232 = scmp.eq.s32.totalorder %s40, 0
      %p233 = por %p231, %p232
      %p234 = scmp.ne.s32.totalorder %s226, %s228
      %p235 = scmp.eq.s32.totalorder %s45, 1
      %p236 = por %p234, %p235
      %p237 = scmp.ne.s32.totalorder %s228, %s229
      %p238 = scmp.eq.s32.totalorder %s45, 0
      %p239 = por %p237, %p238
      %p240 = scmp.ne.s32.totalorder %s228, %s229
      %p241 = scmp.eq.s32.totalorder %s46, 1
      %p242 = por %p240, %p241
      %p244 = scmp.ne.s32.totalorder %s229, %s243
      %p245 = scmp.eq.s32.totalorder %s46, 0
      %p246 = por %p244, %p245
      %s248 = sadd.s32 %s247, 1
      %p251 = scmp.eq.s32.totalorder %s40, 1
      %p252 = scmp.ne.s32.totalorder %s247, %s249
      %p253 = scmp.eq.s32.totalorder %s40, 0
      %p254 = por %p252, %p253
      %p255 = scmp.ne.s32.totalorder %s247, %s249
      %p256 = scmp.eq.s32.totalorder %s45, 1
      %p257 = por %p255, %p256
      %p258 = scmp.ne.s32.totalorder %s249, %s250
      %p259 = scmp.eq.s32.totalorder %s45, 0
      %p260 = por %p258, %p259
      %p261 = scmp.ne.s32.totalorder %s249, %s250
      %p262 = scmp.eq.s32.totalorder %s46, 1
      %p263 = por %p261, %p262
      %p265 = scmp.ne.s32.totalorder %s250, %s264
      %p266 = scmp.eq.s32.totalorder %s46, 0
      %p267 = por %p265, %p266
      %s269 = sadd.s32 %s268, 1
      %p272 = scmp.eq.s32.totalorder %s40, 1
      %p273 = scmp.ne.s32.totalorder %s268, %s270
      %p274 = scmp.eq.s32.totalorder %s40, 0
      %p275 = por %p273, %p274
      %p276 = scmp.ne.s32.totalorder %s268, %s270
      %p277 = scmp.eq.s32.totalorder %s45, 1
      %p278 = por %p276, %p277
      %p279 = scmp.ne.s32.totalorder %s270, %s271
      %p280 = scmp.eq.s32.totalorder %s45, 0
      %p281 = por %p279, %p280
      %p282 = scmp.ne.s32.totalorder %s270, %s271
      %p283 = scmp.eq.s32.totalorder %s46, 1
      %p284 = por %p282, %p283
      %p286 = scmp.ne.s32.totalorder %s271, %s285
      %p287 = scmp.eq.s32.totalorder %s46, 0
      %p288 = por %p286, %p287
      %s290 = sadd.s32 %s289, 1
      %p293 = scmp.eq.s32.totalorder %s40, 1
      %p294 = scmp.ne.s32.totalorder %s289, %s291
      %p295 = scmp.eq.s32.totalorder %s40, 0
      %p296 = por %p294, %p295
      %p297 = scmp.ne.s32.totalorder %s289, %s291
      %p298 = scmp.eq.s32.totalorder %s45, 1
      %p299 = por %p297, %p298
      %p300 = scmp.ne.s32.totalorder %s291, %s292
      %p301 = scmp.eq.s32.totalorder %s45, 0
      %p302 = por %p300, %p301
      %p303 = scmp.ne.s32.totalorder %s291, %s292
      %p304 = scmp.eq.s32.totalorder %s46, 1
      %p305 = por %p303, %p304
      %p307 = scmp.ne.s32.totalorder %s292, %s306
      %p308 = scmp.eq.s32.totalorder %s46, 0
      %p309 = por %p307, %p308
      %s311 = sadd.s32 %s310, 1
      %p314 = scmp.eq.s32.totalorder %s40, 1
      %p315 = scmp.ne.s32.totalorder %s310, %s312
      %p316 = scmp.eq.s32.totalorder %s40, 0
      %p317 = por %p315, %p316
      %p318 = scmp.ne.s32.totalorder %s310, %s312
      %p319 = scmp.eq.s32.totalorder %s45, 1
      %p320 = por %p318, %p319
      %p321 = scmp.ne.s32.totalorder %s312, %s313
      %p322 = scmp.eq.s32.totalorder %s45, 0
      %p323 = por %p321, %p322
      %p324 = scmp.ne.s32.totalorder %s312, %s313
      %p325 = scmp.eq.s32.totalorder %s46, 1
      %p326 = por %p324, %p325
      %p328 = scmp.ne.s32.totalorder %s313, %s327
      %p329 = scmp.eq.s32.totalorder %s46, 0
      %p330 = por %p328, %p329
      %s332 = sadd.s32 %s331, 1
      %p335 = scmp.eq.s32.totalorder %s40, 1
      %p336 = scmp.ne.s32.totalorder %s331, %s333
      %p337 = scmp.eq.s32.totalorder %s40, 0
      %p338 = por %p336, %p337
      %p339 = scmp.ne.s32.totalorder %s331, %s333
      %p340 = scmp.eq.s32.totalorder %s45, 1
      %p341 = por %p339, %p340
      %p342 = scmp.ne.s32.totalorder %s333, %s334
      %p343 = scmp.eq.s32.totalorder %s45, 0
      %p344 = por %p342, %p343
      %p345 = scmp.ne.s32.totalorder %s333, %s334
      %p346 = scmp.eq.s32.totalorder %s46, 1
      %p347 = por %p345, %p346
      %p349 = scmp.ne.s32.totalorder %s334, %s348
      %p350 = scmp.eq.s32.totalorder %s46, 0
      %p351 = por %p349, %p350
      %s353 = sadd.s32 %s352, 1
      %p356 = scmp.eq.s32.totalorder %s40, 1
      %p357 = scmp.ne.s32.totalorder %s352, %s354
      %p358 = scmp.eq.s32.totalorder %s40, 0
      %p359 = por %p357, %p358
      %p360 = scmp.ne.s32.totalorder %s352, %s354
      %p361 = scmp.eq.s32.totalorder %s45, 1
      %p362 = por %p360, %p361
      %p363 = scmp.ne.s32.totalorder %s354, %s355
      %p364 = scmp.eq.s32.totalorder %s45, 0
      %p365 = por %p363, %p364
      %p366 = scmp.ne.s32.totalorder %s354, %s355
      %p367 = scmp.eq.s32.totalorder %s46, 1
      %p368 = por %p366, %p367
      %p370 = scmp.ne.s32.totalorder %s355, %s369
      %p371 = scmp.eq.s32.totalorder %s46, 0
      %p372 = por %p370, %p371
      %s374 = sadd.s32 %s373, 1
      %p377 = scmp.eq.s32.totalorder %s40, 1
      %p378 = scmp.ne.s32.totalorder %s373, %s375
      %p379 = scmp.eq.s32.totalorder %s40, 0
      %p380 = por %p378, %p379
      %p381 = scmp.ne.s32.totalorder %s373, %s375
      %p382 = scmp.eq.s32.totalorder %s45, 1
      %p383 = por %p381, %p382
      %p384 = scmp.ne.s32.totalorder %s375, %s376
      %p385 = scmp.eq.s32.totalorder %s45, 0
      %p386 = por %p384, %p385
      %p387 = scmp.ne.s32.totalorder %s375, %s376
      %p388 = scmp.eq.s32.totalorder %s46, 1
      %p389 = por %p387, %p388
      %p391 = scmp.ne.s32.totalorder %s376, %s390
      %p392 = scmp.eq.s32.totalorder %s46, 0
      %p393 = por %p391, %p392
      %s395 = sadd.s32 %s394, 1
      %p398 = scmp.eq.s32.totalorder %s40, 1
      %p399 = scmp.ne.s32.totalorder %s394, %s396
      %p400 = scmp.eq.s32.totalorder %s40, 0
      %p401 = por %p399, %p400
      %p402 = scmp.ne.s32.totalorder %s394, %s396
      %p403 = scmp.eq.s32.totalorder %s45, 1
      %p404 = por %p402, %p403
      %p405 = scmp.ne.s32.totalorder %s396, %s397
      %p406 = scmp.eq.s32.totalorder %s45, 0
      %p407 = por %p405, %p406
      %p408 = scmp.ne.s32.totalorder %s396, %s397
      %p409 = scmp.eq.s32.totalorder %s46, 1
      %p410 = por %p408, %p409
      %p412 = scmp.ne.s32.totalorder %s397, %s411
      %p413 = scmp.eq.s32.totalorder %s46, 0
      %p414 = por %p412, %p413
      %s416 = sadd.s32 %s415, 1
      %p419 = scmp.eq.s32.totalorder %s40, 1
      %p420 = scmp.ne.s32.totalorder %s415, %s417
      %p421 = scmp.eq.s32.totalorder %s40, 0
      %p422 = por %p420, %p421
      %p423 = scmp.ne.s32.totalorder %s415, %s417
      %p424 = scmp.eq.s32.totalorder %s45, 1
      %p425 = por %p423, %p424
      %p426 = scmp.ne.s32.totalorder %s417, %s418
      %p427 = scmp.eq.s32.totalorder %s45, 0
      %p428 = por %p426, %p427
      %p429 = scmp.ne.s32.totalorder %s417, %s418
      %p430 = scmp.eq.s32.totalorder %s46, 1
      %p431 = por %p429, %p430
      %p433 = scmp.ne.s32.totalorder %s418, %s432
      %p434 = scmp.eq.s32.totalorder %s46, 0
      %p435 = por %p433, %p434
      %s436 = ssub.s32 %s40, %s47
      %p437 = scmp.eq.s32.totalorder %s436, 0
      %s439 = sadd.s32 %s438, 1
      %s440 = scalar_select %p437, %s438, %s439
      %p443 = pneg %p437
      %p444 = scmp.eq.s32.totalorder %s40, 1
      %p445 = por %p443, %p444
      %p446 = scmp.ne.s32.totalorder %s438, %s441
      %p447 = scmp.eq.s32.totalorder %s40, 0
      %p448 = por %p446, %p447
      %p449 = scmp.ne.s32.totalorder %s438, %s441
      %p450 = scmp.eq.s32.totalorder %s45, 1
      %p451 = por %p449, %p450
      %p452 = scmp.ne.s32.totalorder %s441, %s442
      %p453 = scmp.eq.s32.totalorder %s45, 0
      %p454 = por %p452, %p453
      %p455 = scmp.ne.s32.totalorder %s441, %s442
      %p456 = scmp.eq.s32.totalorder %s46, 1
      %p457 = por %p455, %p456
      %p459 = scmp.ne.s32.totalorder %s442, %s458
      %p460 = scmp.eq.s32.totalorder %s46, 0
      %p461 = por %p459, %p460
      %s462 = ssub.s32 %s40, %s47
      %p463 = scmp.eq.s32.totalorder %s462, 0
      %s465 = sadd.s32 %s464, 1
      %s466 = scalar_select %p463, %s464, %s465
      %p469 = pneg %p463
      %p470 = scmp.eq.s32.totalorder %s40, 1
      %p471 = por %p469, %p470
      %p472 = scmp.ne.s32.totalorder %s464, %s467
      %p473 = scmp.eq.s32.totalorder %s40, 0
      %p474 = por %p472, %p473
      %p475 = scmp.ne.s32.totalorder %s464, %s467
      %p476 = scmp.eq.s32.totalorder %s45, 1
      %p477 = por %p475, %p476
      %p478 = scmp.ne.s32.totalorder %s467, %s468
      %p479 = scmp.eq.s32.totalorder %s45, 0
      %p480 = por %p478, %p479
      %p481 = scmp.ne.s32.totalorder %s467, %s468
      %p482 = scmp.eq.s32.totalorder %s46, 1
      %p483 = por %p481, %p482
      %p485 = scmp.ne.s32.totalorder %s468, %s484
      %p486 = scmp.eq.s32.totalorder %s46, 0
      %p487 = por %p485, %p486
      %p488 = scmp.le.s32.totalorder 1, %s40
      %p489 = scmp.lt.s32.totalorder %s40, 3
      %p490 = pnand %p488, %p489
      %p491 = pneg %p490
      // Predicated region
      $region9: #{tpu_custom_call.1} parent=5 // pred_check
        _
      $region10: #{tpu_custom_call.1} parent=5 // pred_check_branch
        %493 = sbr.rel (%p490) target = $region12
      $region11: #{tpu_custom_call.1} parent=5 // pred_region
        %s494 = ssub.s32 %s40, 1
        // Predicated region
        $region13: #{tpu_custom_call.1} parent=11 // pred_check
          %p495 = pneg %p113
        $region14: #{tpu_custom_call.1} parent=11 // pred_check_branch
          %497 = sbr.rel (%p495) target = $region16
        $region15: #{tpu_custom_call.1} parent=11 // pred_region
          _
        $region16: #{tpu_custom_call.1} parent=11 // pred_fallthru
          _
        // Predicated region
        $region17: #{tpu_custom_call.1} parent=11 // pred_check
          %p498 = pneg %p134
        $region18: #{tpu_custom_call.1} parent=11 // pred_check_branch
          %500 = sbr.rel (%p498) target = $region20
        $region19: #{tpu_custom_call.1} parent=11 // pred_region
          %502 = vsyncadd [#allocation7], 0
          %s503 = sshll.u32 %s3, 4
          %s504 = int_to_ptr.hbm [resolvable:$true] %s503
          %s505 = sshll.u32 [#allocation6], 4
          %s506 = int_to_ptr.vmem [resolvable:$true] %s505
          %511 = dma.hbm_to_vmem [thread:$0]  %s504, 256, %s506, [#allocation7], 128, 128, 8
        $region20: #{tpu_custom_call.1} parent=11 // pred_fallthru
          _
        // Predicated region
        $region21: #{tpu_custom_call.1} parent=11 // pred_check
          %p512 = pneg %p155
        $region22: #{tpu_custom_call.1} parent=11 // pred_check_branch
          %514 = sbr.rel (%p512) target = $region24
        $region23: #{tpu_custom_call.1} parent=11 // pred_region
          _
        $region24: #{tpu_custom_call.1} parent=11 // pred_fallthru
          _
        // Predicated region
        $region25: #{tpu_custom_call.1} parent=11 // pred_check
          %p515 = pneg %p176
        $region26: #{tpu_custom_call.1} parent=11 // pred_check_branch
          %517 = sbr.rel (%p515) target = $region28
        $region27: #{tpu_custom_call.1} parent=11 // pred_region
          %519 = vsyncadd [#allocation7], 0
          %s521 = sshll.u32 %s5, 4
          %s522 = int_to_ptr.hbm [resolvable:$true] %s521
          %s523 = sshll.u32 [#allocation8], 4
          %s524 = int_to_ptr.vmem [resolvable:$true] %s523
          %526 = dma.hbm_to_vmem [thread:$0]  %s522, 128, %s524, [#allocation7]
        $region28: #{tpu_custom_call.1} parent=11 // pred_fallthru
          _
        // Predicated region
        $region29: #{tpu_custom_call.1} parent=11 // pred_check
          %p527 = pneg %p197
        $region30: #{tpu_custom_call.1} parent=11 // pred_check_branch
          %529 = sbr.rel (%p527) target = $region32
        $region31: #{tpu_custom_call.1} parent=11 // pred_region
          _
        $region32: #{tpu_custom_call.1} parent=11 // pred_fallthru
          _
        // Predicated region
        $region33: #{tpu_custom_call.1} parent=11 // pred_check
          %p530 = pneg %p218
        $region34: #{tpu_custom_call.1} parent=11 // pred_check_branch
          %532 = sbr.rel (%p530) target = $region36
        $region35: #{tpu_custom_call.1} parent=11 // pred_region
          %534 = vsyncadd [#allocation10], 0
          %s536 = sshll.u32 %s7, 4
          %s537 = int_to_ptr.hbm [resolvable:$true] %s536
          %s538 = sshll.u32 [#allocation9], 4
          %s539 = int_to_ptr.vmem [resolvable:$true] %s538
          %541 = dma.hbm_to_vmem [thread:$0]  %s537, 128, %s539, [#allocation10]
        $region36: #{tpu_custom_call.1} parent=11 // pred_fallthru
          _
        // Predicated region
        $region37: #{tpu_custom_call.1} parent=11 // pred_check
          %p542 = pneg %p239
        $region38: #{tpu_custom_call.1} parent=11 // pred_check_branch
          %544 = sbr.rel (%p542) target = $region40
        $region39: #{tpu_custom_call.1} parent=11 // pred_region
          _
        $region40: #{tpu_custom_call.1} parent=11 // pred_fallthru
          _
        // Predicated region
        $region41: #{tpu_custom_call.1} parent=11 // pred_check
          %p545 = pneg %p260
        $region42: #{tpu_custom_call.1} parent=11 // pred_check_branch
          %547 = sbr.rel (%p545) target = $region44
        $region43: #{tpu_custom_call.1} parent=11 // pred_region
          %549 = vsyncadd [#allocation10], 0
          %s550 = sshll.u32 %s9, 4
          %s551 = int_to_ptr.hbm [resolvable:$true] %s550
          %s552 = sshll.u32 [#allocation11], 4
          %s553 = int_to_ptr.vmem [resolvable:$true] %s552
          %558 = dma.hbm_to_vmem [thread:$0]  %s551, 256, %s553, [#allocation10], 128, 128, 8
        $region44: #{tpu_custom_call.1} parent=11 // pred_fallthru
          _
        // Predicated region
        $region45: #{tpu_custom_call.1} parent=11 // pred_check
          %p559 = pneg %p281
        $region46: #{tpu_custom_call.1} parent=11 // pred_check_branch
          %561 = sbr.rel (%p559) target = $region48
        $region47: #{tpu_custom_call.1} parent=11 // pred_region
          _
        $region48: #{tpu_custom_call.1} parent=11 // pred_fallthru
          _
        // Predicated region
        $region49: #{tpu_custom_call.1} parent=11 // pred_check
          %p562 = pneg %p302
        $region50: #{tpu_custom_call.1} parent=11 // pred_check_branch
          %564 = sbr.rel (%p562) target = $region52
        $region51: #{tpu_custom_call.1} parent=11 // pred_region
          %566 = vsyncadd [#allocation13], 0
          %s567 = sshll.u32 %s11, 4
          %s568 = int_to_ptr.hbm [resolvable:$true] %s567
          %s569 = sshll.u32 [#allocation12], 4
          %s570 = int_to_ptr.vmem [resolvable:$true] %s569
          %575 = dma.hbm_to_vmem [thread:$0]  %s568, 512, %s570, [#allocation13], 256, 256, 16
        $region52: #{tpu_custom_call.1} parent=11 // pred_fallthru
          _
        // Predicated region
        $region53: #{tpu_custom_call.1} parent=11 // pred_check
          %p576 = pneg %p323
        $region54: #{tpu_custom_call.1} parent=11 // pred_check_branch
          %578 = sbr.rel (%p576) target = $region56
        $region55: #{tpu_custom_call.1} parent=11 // pred_region
          _
        $region56: #{tpu_custom_call.1} parent=11 // pred_fallthru
          _
        // Predicated region
        $region57: #{tpu_custom_call.1} parent=11 // pred_check
          %p579 = pneg %p344
        $region58: #{tpu_custom_call.1} parent=11 // pred_check_branch
          %581 = sbr.rel (%p579) target = $region60
        $region59: #{tpu_custom_call.1} parent=11 // pred_region
          %583 = vsyncadd [#allocation13], 0
          %s584 = sshll.u32 %s13, 4
          %s585 = int_to_ptr.hbm [resolvable:$true] %s584
          %s586 = sshll.u32 [#allocation14], 4
          %s587 = int_to_ptr.vmem [resolvable:$true] %s586
          %592 = dma.hbm_to_vmem [thread:$0]  %s585, 256, %s587, [#allocation13], 128, 128, 8
        $region60: #{tpu_custom_call.1} parent=11 // pred_fallthru
          _
        // Predicated region
        $region61: #{tpu_custom_call.1} parent=11 // pred_check
          %p593 = pneg %p365
        $region62: #{tpu_custom_call.1} parent=11 // pred_check_branch
          %595 = sbr.rel (%p593) target = $region64
        $region63: #{tpu_custom_call.1} parent=11 // pred_region
          _
        $region64: #{tpu_custom_call.1} parent=11 // pred_fallthru
          _
        // Predicated region
        $region65: #{tpu_custom_call.1} parent=11 // pred_check
          %p596 = pneg %p386
        $region66: #{tpu_custom_call.1} parent=11 // pred_check_branch
          %598 = sbr.rel (%p596) target = $region68
        $region67: #{tpu_custom_call.1} parent=11 // pred_region
          %600 = vsyncadd [#allocation16], 0
          %s601 = sshll.u32 %s15, 4
          %s602 = int_to_ptr.hbm [resolvable:$true] %s601
          %s603 = sshll.u32 [#allocation15], 4
          %s604 = int_to_ptr.vmem [resolvable:$true] %s603
          %609 = dma.hbm_to_vmem [thread:$0]  %s602, 512, %s604, [#allocation16], 256, 256, 16
        $region68: #{tpu_custom_call.1} parent=11 // pred_fallthru
          _
        // Predicated region
        $region69: #{tpu_custom_call.1} parent=11 // pred_check
          %p610 = pneg %p407
        $region70: #{tpu_custom_call.1} parent=11 // pred_check_branch
          %612 = sbr.rel (%p610) target = $region72
        $region71: #{tpu_custom_call.1} parent=11 // pred_region
          _
        $region72: #{tpu_custom_call.1} parent=11 // pred_fallthru
          _
        // Predicated region
        $region73: #{tpu_custom_call.1} parent=11 // pred_check
          %p613 = pneg %p428
        $region74: #{tpu_custom_call.1} parent=11 // pred_check_branch
          %615 = sbr.rel (%p613) target = $region76
        $region75: #{tpu_custom_call.1} parent=11 // pred_region
          %617 = vsyncadd [#allocation5], 0
          %s619 = sshll.u32 %s17, 4
          %s620 = int_to_ptr.vmem [resolvable:$true] %s619
          %622 = dma.vmem_to_smem %s620, 16, [#allocation17], [#allocation5]
        $region76: #{tpu_custom_call.1} parent=11 // pred_fallthru
          _
      $region12: #{tpu_custom_call.1} parent=5 // pred_fallthru
        _
      %p623 = scmp.lt.s32.totalorder %s40, 2
      // Predicated region
      $region77: #{tpu_custom_call.1} parent=5 // pred_check
        %p624 = pneg %p623
      $region78: #{tpu_custom_call.1} parent=5 // pred_check_branch
        %626 = sbr.rel (%p624) target = $region80
      $region79: #{tpu_custom_call.1} parent=5 // pred_region
        // Predicated region
        $region81: #{tpu_custom_call.1} parent=79 // pred_check
          %p627 = pneg %p60
        $region82: #{tpu_custom_call.1} parent=79 // pred_check_branch
          %629 = sbr.rel (%p627) target = $region84
        $region83: #{tpu_custom_call.1} parent=79 // pred_region
          %p630 = scmp.lt.s32.totalorder %s40, 1
          %s631 = scalar_select %p630, %s40, 1
          %s632 = smul.addr %s631, 2
          %s633 = smul.addr %s632, 4
          %s634 = scalar_lea.vmem %s0, %s633
        $region84: #{tpu_custom_call.1} parent=79 // pred_fallthru
          _
        // Predicated region
        $region85: #{tpu_custom_call.1} parent=79 // pred_check
          %p635 = pneg %p86
        $region86: #{tpu_custom_call.1} parent=79 // pred_check_branch
          %637 = sbr.rel (%p635) target = $region88
        $region87: #{tpu_custom_call.1} parent=79 // pred_region
          %s638 = sand.u32 %s76, 1
          %s639 = scalar_lea.sflag [#allocation3], %s638
          %s640 = sand.u32 %s76, 1
          %s641 = smul.addr %s640, 8
          %s642 = scalar_lea.vmem [#allocation2], %s641
          %644 = vsyncadd %s639, 0
          %s645 = smul.addr %s40, 8
          %s646 = scalar_lea.hbm %s1, %s645
          %s648 = sshll.u32 %s646, 4
          %s649 = int_to_ptr.hbm [resolvable:$true] %s648
          %s650 = sshll.u32 %s642, 4
          %s651 = int_to_ptr.vmem [resolvable:$true] %s650
          %653 = dma.hbm_to_vmem [thread:$0]  %s649, 128, %s651, %s639
        $region88: #{tpu_custom_call.1} parent=79 // pred_fallthru
          _
      $region80: #{tpu_custom_call.1} parent=5 // pred_fallthru
        _
      %p654 = scmp.le.s32.totalorder 1, %s40
      %p655 = scmp.lt.s32.totalorder %s40, 3
      %p656 = pnand %p654, %p655
      %p657 = pneg %p656
      // Predicated region
      $region89: #{tpu_custom_call.1} parent=5 // pred_check
        _
      $region90: #{tpu_custom_call.1} parent=5 // pred_check_branch
        %659 = sbr.rel (%p656) target = $region92
      $region91: #{tpu_custom_call.1} parent=5 // pred_region
        %s660 = ssub.s32 %s40, 1
        %s661 = sand.u32 %s79, 1
        %s662 = scalar_lea.sflag [#allocation3], %s661
        %s663 = sand.u32 %s79, 1
        %s664 = smul.addr %s663, 8
        %s665 = scalar_lea.vmem [#allocation2], %s664
        // Predicated region
        $region93: #{tpu_custom_call.1} parent=91 // pred_check
          %p666 = pneg %p92
        $region94: #{tpu_custom_call.1} parent=91 // pred_check_branch
          %668 = sbr.rel (%p666) target = $region96
        $region95: #{tpu_custom_call.1} parent=91 // pred_region
          %670 = dma.done %s662, 128
        $region96: #{tpu_custom_call.1} parent=91 // pred_fallthru
          _
        // Predicated region
        $region97: #{tpu_custom_call.1} parent=91 // pred_check
          %p671 = pneg %p134
        $region98: #{tpu_custom_call.1} parent=91 // pred_check_branch
          %673 = sbr.rel (%p671) target = $region100
        $region99: #{tpu_custom_call.1} parent=91 // pred_region
          %675 = dma.done [#allocation7], 256
        $region100: #{tpu_custom_call.1} parent=91 // pred_fallthru
          _
        // Predicated region
        $region101: #{tpu_custom_call.1} parent=91 // pred_check
          %p676 = pneg %p176
        $region102: #{tpu_custom_call.1} parent=91 // pred_check_branch
          %678 = sbr.rel (%p676) target = $region104
        $region103: #{tpu_custom_call.1} parent=91 // pred_region
          %680 = dma.done [#allocation7], 128
        $region104: #{tpu_custom_call.1} parent=91 // pred_fallthru
          _
        // Predicated region
        $region105: #{tpu_custom_call.1} parent=91 // pred_check
          %p681 = pneg %p218
        $region106: #{tpu_custom_call.1} parent=91 // pred_check_branch
          %683 = sbr.rel (%p681) target = $region108
        $region107: #{tpu_custom_call.1} parent=91 // pred_region
          %685 = dma.done [#allocation10], 128
        $region108: #{tpu_custom_call.1} parent=91 // pred_fallthru
          _
        // Predicated region
        $region109: #{tpu_custom_call.1} parent=91 // pred_check
          %p686 = pneg %p260
        $region110: #{tpu_custom_call.1} parent=91 // pred_check_branch
          %688 = sbr.rel (%p686) target = $region112
        $region111: #{tpu_custom_call.1} parent=91 // pred_region
          %690 = dma.done [#allocation10], 256
        $region112: #{tpu_custom_call.1} parent=91 // pred_fallthru
          _
        // Predicated region
        $region113: #{tpu_custom_call.1} parent=91 // pred_check
          %p691 = pneg %p302
        $region114: #{tpu_custom_call.1} parent=91 // pred_check_branch
          %693 = sbr.rel (%p691) target = $region116
        $region115: #{tpu_custom_call.1} parent=91 // pred_region
          %695 = dma.done [#allocation13], 512
        $region116: #{tpu_custom_call.1} parent=91 // pred_fallthru
          _
        // Predicated region
        $region117: #{tpu_custom_call.1} parent=91 // pred_check
          %p696 = pneg %p344
        $region118: #{tpu_custom_call.1} parent=91 // pred_check_branch
          %698 = sbr.rel (%p696) target = $region120
        $region119: #{tpu_custom_call.1} parent=91 // pred_region
          %700 = dma.done [#allocation13], 256
        $region120: #{tpu_custom_call.1} parent=91 // pred_fallthru
          _
        // Predicated region
        $region121: #{tpu_custom_call.1} parent=91 // pred_check
          %p701 = pneg %p386
        $region122: #{tpu_custom_call.1} parent=91 // pred_check_branch
          %703 = sbr.rel (%p701) target = $region124
        $region123: #{tpu_custom_call.1} parent=91 // pred_region
          %705 = dma.done [#allocation16], 512
        $region124: #{tpu_custom_call.1} parent=91 // pred_fallthru
          _
        // Predicated region
        $region125: #{tpu_custom_call.1} parent=91 // pred_check
          %p706 = pneg %p428
        $region126: #{tpu_custom_call.1} parent=91 // pred_check_branch
          %708 = sbr.rel (%p706) target = $region128
        $region127: #{tpu_custom_call.1} parent=91 // pred_region
          %710 = dma.done [#allocation5], 16
        $region128: #{tpu_custom_call.1} parent=91 // pred_fallthru
          _
        %711 = sfence
        %p712 = scmp.lt.s32.totalorder %s45, 1
        %s713 = scalar_select %p712, %s45, 1
        %s714 = smul.addr %s713, 2
        %s715 = smul.addr %s714, 4
        %s716 = scalar_lea.vmem %s0, %s715
        %p717 = pneg %p66
        %p718 = pneg %p63
        %s719 = sand.u32 %s79, 1
        %s720 = scalar_lea.sflag [#allocation3], %s719
        %s721 = sand.u32 %s79, 1
        %s722 = smul.addr %s721, 8
        %s723 = scalar_lea.vmem [#allocation2], %s722
        %p724 = pneg %p92
        %p725 = pneg %p89
        %p726 = pneg %p113
        %p727 = pneg %p110
        %p728 = pneg %p134
        %p729 = pneg %p131
        %p730 = pneg %p155
        %p731 = pneg %p152
        %p732 = pneg %p176
        %p733 = pneg %p173
        %p734 = pneg %p197
        %p735 = pneg %p194
        %p736 = pneg %p218
        %p737 = pneg %p215
        %p738 = pneg %p239
        %p739 = pneg %p236
        %p740 = pneg %p260
        %p741 = pneg %p257
        %p742 = pneg %p281
        %p743 = pneg %p278
        %p744 = pneg %p302
        %p745 = pneg %p299
        %p746 = pneg %p323
        %p747 = pneg %p320
        %p748 = pneg %p344
        %p749 = pneg %p341
        %p750 = pneg %p365
        %p751 = pneg %p362
        %p752 = pneg %p386
        %p753 = pneg %p383
        %p754 = pneg %p407
        %p755 = pneg %p404
        %p756 = pneg %p428
        %p757 = pneg %p425
        %p758 = pneg %p454
        %p759 = pneg %p451
        %s760 = sand.u32 %s441, 1
        %s761 = scalar_lea.sflag [#allocation4], %s760
        %s762 = sand.u32 %s441, 1
        %s763 = smul.addr %s762, 16
        %s764 = scalar_lea.vmem [#allocation18], %s763
        %p765 = pneg %p480
        %p766 = pneg %p477
        %s767 = sand.u32 %s467, 1
        %s768 = scalar_lea.sflag [#allocation20], %s767
        %s769 = sand.u32 %s467, 1
        %s770 = smul.addr %s769, 16
        %s771 = scalar_lea.vmem [#allocation19], %s770
        %p772 = scmp.lt.s32.totalorder %s45, 1
        %s773 = scalar_select %p772, %s45, 1
        %s774 = smul.addr %s773, 2
        %s775 = smul.addr %s774, 4
        %s776 = scalar_lea.vmem %s0, %s775
        %s777 = sld [smem:[#allocation17]]
        %s778 = sld [smem:[#allocation17 + $0x1]]
        %s779 = sld [smem:[#allocation17 + $0x2]]
        %s780 = sld [smem:[#allocation17 + $0x3]]
        %s781 = sld [smem:[#allocation17 + $0x4]]
        %s782 = sld [smem:[#allocation17 + $0x5]]
        %v783 = vld [vmem:[%s776] sm:$0xff]
        %v784 = vld [vmem:[%s665] sm:$0xff]
        %786 = vst [vmem:[#allocation1] ss:$2 sm:$0xff] %v783
        %v787 = vld.sshfl [vmem:[#allocation1 + $0x8] sm:$0xff pattern:$0x75316420]
        %788 = vrot.lane.b32.xlu0 %v787, 17
        %v789 = vpop.permute.xlu0 %788
        %791 = vst [vmem:[#allocation1] ss:$2 sm:$0xff] %v783
        %v792 = vld.sshfl [vmem:[#allocation1] sm:$0xff pattern:$0x75316420]
        %v793 = vld.sshfl [vmem:[#allocation1 + $0x8] sm:$0xff pattern:$0x75316420]
        %794 = vrot.lane.b32.xlu0 %v792, 17
        %v795 = vpop.permute.xlu0 %794
        %796 = vrot.lane.b32.xlu0 %v793, 17
        %v797 = vpop.permute.xlu0 %796
        %vm798 = vcmask 138240
        %v799 = vsel %vm798, %v795, %v797
        %v802 = vsel %vm798, %v789, %v795
        %v803 = vld [vmem:[%s2] ss:$8 sm:$0x3]
        %v805 = vperm.slane %v803, 0
        %v806 = vperm.slane %v803, 1
        %v809 = vmul.f32 %v802, %v805
        %v810 = vmul.f32 %v799, %v806
        %811 = vst [vmem:[#allocation1] ss:$2 sm:$0xff] %v783
        %v812 = vld.sshfl [vmem:[#allocation1 + $0x8] sm:$0xff pattern:$0x75316420]
        %813 = vrot.lane.b32.xlu0 %v812, 16
        %v814 = vpop.permute.xlu0 %813
        %816 = vst [vmem:[#allocation1] ss:$2 sm:$0xff] %v783
        %v817 = vld.sshfl [vmem:[#allocation1] sm:$0xff pattern:$0x75316420]
        %v818 = vld.sshfl [vmem:[#allocation1 + $0x8] sm:$0xff pattern:$0x75316420]
        %819 = vrot.lane.b32.xlu0 %v817, 16
        %v820 = vpop.permute.xlu0 %819
        %821 = vrot.lane.b32.xlu0 %v818, 16
        %v822 = vpop.permute.xlu0 %821
        %vm823 = vcmask 130048
        %v824 = vsel %vm823, %v820, %v822
        %v827 = vsel %vm823, %v814, %v820
        %s828 = scalar_lea.vmem %s2, 1
        %v829 = vld [vmem:[%s828] ss:$8 sm:$0x3]
        %v831 = vperm.slane %v829, 0
        %v832 = vperm.slane %v829, 1
        %v835 = vmul.f32 %v827, %v831
        %v836 = vmul.f32 %v824, %v832
        %837 = vst [vmem:[#allocation1] ss:$2 sm:$0xff] %v783
        %v838 = vld.sshfl [vmem:[#allocation1 + $0x8] sm:$0xff pattern:$0x75316420]
        %839 = vrot.lane.b32.xlu0 %v838, 15
        %v840 = vpop.permute.xlu0 %839
        %842 = vst [vmem:[#allocation1] ss:$2 sm:$0xff] %v783
        %v843 = vld.sshfl [vmem:[#allocation1] sm:$0xff pattern:$0x75316420]
        %v844 = vld.sshfl [vmem:[#allocation1 + $0x8] sm:$0xff pattern:$0x75316420]
        %845 = vrot.lane.b32.xlu0 %v843, 15
        %v846 = vpop.permute.xlu0 %845
        %847 = vrot.lane.b32.xlu0 %v844, 15
        %v848 = vpop.permute.xlu0 %847
        %vm849 = vcmask 121856
        %v850 = vsel %vm849, %v846, %v848
        %v853 = vsel %vm849, %v840, %v846
        %s854 = scalar_lea.vmem %s2, 2
        %v855 = vld [vmem:[%s854] ss:$8 sm:$0x3]
        %v857 = vperm.slane %v855, 0
        %v858 = vperm.slane %v855, 1
        %v861 = vmul.f32 %v853, %v857
        %v862 = vmul.f32 %v850, %v858
        %863 = vst [vmem:[#allocation1] ss:$2 sm:$0xff] %v783
        %v864 = vld.sshfl [vmem:[#allocation1 + $0x8] sm:$0xff pattern:$0x75316420]
        %865 = vrot.lane.b32.xlu0 %v864, 1
        %v866 = vpop.permute.xlu0 %865
        %868 = vst [vmem:[#allocation1] ss:$2 sm:$0xff] %v783
        %v869 = vld.sshfl [vmem:[#allocation1] sm:$0xff pattern:$0x75316420]
        %v870 = vld.sshfl [vmem:[#allocation1 + $0x8] sm:$0xff pattern:$0x75316420]
        %871 = vrot.lane.b32.xlu0 %v869, 1
        %v872 = vpop.permute.xlu0 %871
        %873 = vrot.lane.b32.xlu0 %v870, 1
        %v874 = vpop.permute.xlu0 %873
        %vm875 = vcmask 7168
        %v876 = vsel %vm875, %v872, %v874
        %v879 = vsel %vm875, %v866, %v872
        %s880 = scalar_lea.vmem %s2, 3
        %v881 = vld [vmem:[%s880] ss:$8 sm:$0x3]
        %v883 = vperm.slane %v881, 0
        %v884 = vperm.slane %v881, 1
        %v887 = vmul.f32 %v879, %v883
        %v888 = vmul.f32 %v876, %v884
        %889 = vst [vmem:[#allocation1] ss:$2 sm:$0xff] %v783
        %v890 = vld.sshfl [vmem:[#allocation1] sm:$0xff pattern:$0x75316420]
        %v891 = vld.sshfl [vmem:[#allocation1 + $0x8] sm:$0xff pattern:$0x75316420]
        %892 = vrot.lane.b32.xlu0 %v890, 127
        %v893 = vpop.permute.xlu0 %892
        %894 = vrot.lane.b32.xlu0 %v891, 127
        %v895 = vpop.permute.xlu0 %894
        %vm896 = vcmask 1039360
        %v897 = vsel %vm896, %v893, %v895
        %900 = vst [vmem:[#allocation1] ss:$2 sm:$0xff] %v783
        %v901 = vld.sshfl [vmem:[#allocation1] sm:$0xff pattern:$0x75316420]
        %902 = vrot.lane.b32.xlu0 %v901, 127
        %v903 = vpop.permute.xlu0 %902
        %v905 = vsel %vm896, %v895, %v903
        %s906 = scalar_lea.vmem %s2, 5
        %v907 = vld [vmem:[%s906] ss:$8 sm:$0x3]
        %v909 = vperm.slane %v907, 0
        %v910 = vperm.slane %v907, 1
        %v913 = vmul.f32 %v897, %v909
        %v914 = vmul.f32 %v905, %v910
        %915 = vst [vmem:[#allocation1] ss:$2 sm:$0xff] %v783
        %v916 = vld.sshfl [vmem:[#allocation1] sm:$0xff pattern:$0x75316420]
        %v917 = vld.sshfl [vmem:[#allocation1 + $0x8] sm:$0xff pattern:$0x75316420]
        %918 = vrot.lane.b32.xlu0 %v916, 113
        %v919 = vpop.permute.xlu0 %918
        %920 = vrot.lane.b32.xlu0 %v917, 113
        %v921 = vpop.permute.xlu0 %920
        %vm922 = vcmask 924672
        %v923 = vsel %vm922, %v919, %v921
        %926 = vst [vmem:[#allocation1] ss:$2 sm:$0xff] %v783
        %v927 = vld.sshfl [vmem:[#allocation1] sm:$0xff pattern:$0x75316420]
        %928 = vrot.lane.b32.xlu0 %v927, 113
        %v929 = vpop.permute.xlu0 %928
        %v931 = vsel %vm922, %v921, %v929
        %s932 = scalar_lea.vmem %s2, 6
        %v933 = vld [vmem:[%s932] ss:$8 sm:$0x3]
        %v935 = vperm.slane %v933, 0
        %v936 = vperm.slane %v933, 1
        %v939 = vmul.f32 %v923, %v935
        %v940 = vmul.f32 %v931, %v936
        %941 = vst [vmem:[#allocation1] ss:$2 sm:$0xff] %v783
        %v942 = vld.sshfl [vmem:[#allocation1] sm:$0xff pattern:$0x75316420]
        %v943 = vld.sshfl [vmem:[#allocation1 + $0x8] sm:$0xff pattern:$0x75316420]
        %944 = vrot.lane.b32.xlu0 %v942, 112
        %v945 = vpop.permute.xlu0 %944
        %946 = vrot.lane.b32.xlu0 %v943, 112
        %v947 = vpop.permute.xlu0 %946
        %vm948 = vcmask 916480
        %v949 = vsel %vm948, %v945, %v947
        %952 = vst [vmem:[#allocation1] ss:$2 sm:$0xff] %v783
        %v953 = vld.sshfl [vmem:[#allocation1] sm:$0xff pattern:$0x75316420]
        %954 = vrot.lane.b32.xlu0 %v953, 112
        %v955 = vpop.permute.xlu0 %954
        %v957 = vsel %vm948, %v947, %v955
        %s958 = scalar_lea.vmem %s2, 7
        %v959 = vld [vmem:[%s958] ss:$8 sm:$0x3]
        %v961 = vperm.slane %v959, 0
        %v962 = vperm.slane %v959, 1
        %v965 = vmul.f32 %v949, %v961
        %v966 = vmul.f32 %v957, %v962
        %967 = vst [vmem:[#allocation1] ss:$2 sm:$0xff] %v783
        %v968 = vld.sshfl [vmem:[#allocation1] sm:$0xff pattern:$0x75316420]
        %v969 = vld.sshfl [vmem:[#allocation1 + $0x8] sm:$0xff pattern:$0x75316420]
        %970 = vrot.lane.b32.xlu0 %v968, 111
        %v971 = vpop.permute.xlu0 %970
        %972 = vrot.lane.b32.xlu0 %v969, 111
        %v973 = vpop.permute.xlu0 %972
        %vm974 = vcmask 908288
        %v975 = vsel %vm974, %v971, %v973
        %978 = vst [vmem:[#allocation1] ss:$2 sm:$0xff] %v783
        %v979 = vld.sshfl [vmem:[#allocation1] sm:$0xff pattern:$0x75316420]
        %980 = vrot.lane.b32.xlu0 %v979, 111
        %v981 = vpop.permute.xlu0 %980
        %v983 = vsel %vm974, %v973, %v981
        %s984 = scalar_lea.vmem %s2, 16
        %v985 = vld [vmem:[%s984] ss:$8 sm:$0x3]
        %v987 = vperm.slane %v985, 0
        %v988 = vperm.slane %v985, 1
        %v991 = vmul.f32 %v975, %v987
        %v992 = vmul.f32 %v983, %v988
        %v995 = vrot.slane %v835, 4
        %v996 = vrot.slane %v836, 4
        %v1001 = vrot.slane %v887, 4
        %v1002 = vrot.slane %v888, 4
        %1005 = vst [vmem:[#allocation1] ss:$2 sm:$0xff] %v783
        %v1006 = vld.sshfl [vmem:[#allocation1] sm:$0xff pattern:$0x75316420]
        %v1007 = vld.sshfl [vmem:[#allocation1 + $0x8] sm:$0xff pattern:$0x75316420]
        %v1012 = vrot.slane %v913, 4
        %v1013 = vrot.slane %v914, 4
        %v1018 = vrot.slane %v965, 4
        %v1019 = vrot.slane %v966, 4
        %vm1022 = vcmask 1043456
        %v1023 = vsel %vm1022, %v809, %v995
        %v1024 = vsel %vm1022, %v810, %v996
        %v1025 = vsel %vm1022, %v861, %v1001
        %v1026 = vsel %vm1022, %v862, %v1002
        %v1027 = vsel %vm1022, %v1006, %v1012
        %v1028 = vsel %vm1022, %v1007, %v1013
        %v1029 = vsel %vm1022, %v939, %v1018
        %v1030 = vsel %vm1022, %v940, %v1019
        %v1031 = vld [vmem:[#allocation8] sm:$0xff]
        %v1032 = vld [vmem:[%s6] sm:$0xff]
        %1034 = vset.pattern.permute.xlu0 0
        %1035 = vperm.xlu0 %1034, %v1032
        %v1036 = vpop.permute.xlu0 %1035
        %vm1038 = vcmask 293888
        %v1040 = vsel %vm1038, %v1031, 0
        %v1043 = vsel %vm1022, %v991, 0
        %v1046 = vsel %vm1022, %v992, 0
        %1048 = vmatpush.msra.mxu0 0.0
        %1049 = vmatpush.msra.mxu0 0.0
        %1050 = vmatpush.msra.mxu0 0.0
        %1051 = vmatpush.msra.mxu0 0.0
        %1052 = vmatpush.msra.mxu0 0.0
        %1053 = vmatpush.msra.mxu0 0.0
        %1054 = vmatpush.msra.mxu0 0.0
        %1055 = vmatpush.msra.mxu0 0.0
        %1056 = vmatpush.msra.mxu0 0.0
        %1057 = vmatpush.msra.mxu0 0.0
        %1058 = vmatpush.msra.mxu0 0.0
        %1059 = vmatpush.msra.mxu0 %v1043
        %1060 = vmatpush.msra.mxu0 %v1029
        %1061 = vmatpush.msra.mxu0 %v1027
        %1062 = vmatpush.msra.mxu0 %v1025
        %1063 = vmatpush.msra.mxu0 %v1023
        %1064 = vmatmul.f32.gmra.mxu0 %v1040
        %v1065 = vpop.f32.mrf.mxu0
        %v1066 = vadd.f32 %v1036, %v1065
        %1067 = vdwg.mxu0
        %1068 = vmatpush.msra.mxu0 0.0
        %1069 = vmatpush.msra.mxu0 0.0
        %1070 = vmatpush.msra.mxu0 0.0
        %1071 = vmatpush.msra.mxu0 0.0
        %1072 = vmatpush.msra.mxu0 0.0
        %1073 = vmatpush.msra.mxu0 0.0
        %1074 = vmatpush.msra.mxu0 0.0
        %1075 = vmatpush.msra.mxu0 0.0
        %1076 = vmatpush.msra.mxu0 0.0
        %1077 = vmatpush.msra.mxu0 0.0
        %1078 = vmatpush.msra.mxu0 0.0
        %1079 = vmatpush.msra.mxu0 %v1046
        %1080 = vmatpush.msra.mxu0 %v1030
        %1081 = vmatpush.msra.mxu0 %v1028
        %1082 = vmatpush.msra.mxu0 %v1026
        %1083 = vmatpush.msra.mxu0 %v1024
        %1084 = vmatmul.f32.gmra.mxu0 %v1040
        %v1085 = vpop.f32.mrf.mxu0
        %v1086 = vadd.f32 %v1036, %v1085
        %1087 = vdwg.mxu0
        %vm1088 = vcmp.ge.f32.partialorder %v1066, 0.0
        %vm1089 = vcmp.ge.f32.partialorder %v1086, 0.0
        %v1090 = vstv %s777
        %v1091 = vmul.f32 %v1090, %v1066
        %v1092 = vmul.f32 %v1090, %v1086
        %v1093 = vsel %vm1088, %v1066, %v1091
        %v1094 = vsel %vm1089, %v1086, %v1092
        %1096 = vrot.lane.b32.xlu0 %v1094, 17
        %v1097 = vpop.permute.xlu0 %1096
        %1100 = vrot.lane.b32.xlu0 %v1093, 17
        %v1101 = vpop.permute.xlu0 %1100
        %v1102 = vsel %vm798, %v1101, %v1097
        %v1105 = vsel %vm798, %v1097, %v1101
        %v1106 = vmul.f32 %v1105, %v805
        %v1107 = vmul.f32 %v1102, %v806
        %1108 = vrot.lane.b32.xlu0 %v1094, 16
        %v1109 = vpop.permute.xlu0 %1108
        %1111 = vrot.lane.b32.xlu0 %v1093, 16
        %v1112 = vpop.permute.xlu0 %1111
        %v1113 = vsel %vm823, %v1112, %v1109
        %v1116 = vsel %vm823, %v1109, %v1112
        %v1117 = vmul.f32 %v1116, %v831
        %v1118 = vmul.f32 %v1113, %v832
        %1119 = vrot.lane.b32.xlu0 %v1094, 15
        %v1120 = vpop.permute.xlu0 %1119
        %1122 = vrot.lane.b32.xlu0 %v1093, 15
        %v1123 = vpop.permute.xlu0 %1122
        %v1124 = vsel %vm849, %v1123, %v1120
        %v1127 = vsel %vm849, %v1120, %v1123
        %v1128 = vmul.f32 %v1127, %v857
        %v1129 = vmul.f32 %v1124, %v858
        %1130 = vrot.lane.b32.xlu0 %v1094, 1
        %v1131 = vpop.permute.xlu0 %1130
        %1133 = vrot.lane.b32.xlu0 %v1093, 1
        %v1134 = vpop.permute.xlu0 %1133
        %v1135 = vsel %vm875, %v1134, %v1131
        %v1138 = vsel %vm875, %v1131, %v1134
        %v1139 = vmul.f32 %v1138, %v883
        %v1140 = vmul.f32 %v1135, %v884
        %1141 = vrot.lane.b32.xlu0 %v1093, 127
        %v1142 = vpop.permute.xlu0 %1141
        %1143 = vrot.lane.b32.xlu0 %v1094, 127
        %v1144 = vpop.permute.xlu0 %1143
        %v1145 = vsel %vm896, %v1142, %v1144
        %v1149 = vsel %vm896, %v1144, %v1142
        %v1150 = vmul.f32 %v1145, %v909
        %v1151 = vmul.f32 %v1149, %v910
        %1152 = vrot.lane.b32.xlu0 %v1093, 113
        %v1153 = vpop.permute.xlu0 %1152
        %1154 = vrot.lane.b32.xlu0 %v1094, 113
        %v1155 = vpop.permute.xlu0 %1154
        %v1156 = vsel %vm922, %v1153, %v1155
        %v1160 = vsel %vm922, %v1155, %v1153
        %v1161 = vmul.f32 %v1156, %v935
        %v1162 = vmul.f32 %v1160, %v936
        %1163 = vrot.lane.b32.xlu0 %v1093, 112
        %v1164 = vpop.permute.xlu0 %1163
        %1165 = vrot.lane.b32.xlu0 %v1094, 112
        %v1166 = vpop.permute.xlu0 %1165
        %v1167 = vsel %vm948, %v1164, %v1166
        %v1171 = vsel %vm948, %v1166, %v1164
        %v1172 = vmul.f32 %v1167, %v961
        %v1173 = vmul.f32 %v1171, %v962
        %1174 = vrot.lane.b32.xlu0 %v1093, 111
        %v1175 = vpop.permute.xlu0 %1174
        %1176 = vrot.lane.b32.xlu0 %v1094, 111
        %v1177 = vpop.permute.xlu0 %1176
        %v1178 = vsel %vm974, %v1175, %v1177
        %v1182 = vsel %vm974, %v1177, %v1175
        %v1183 = vmul.f32 %v1178, %v987
        %v1184 = vmul.f32 %v1182, %v988
        %v1185 = vld [vmem:[#allocation9] sm:$0xff]
        %v1186 = vld [vmem:[%s8] sm:$0xff]
        %1188 = vset.pattern.permute.xlu0 0
        %1189 = vperm.xlu0 %1188, %v1186
        %v1190 = vpop.permute.xlu0 %1189
        %vm1192 = vcmask 588800
        %v1194 = vsel %vm1192, %v1185, 0
        %1196 = vmatpush.msra.mxu0 0.0
        %1197 = vmatpush.msra.mxu0 0.0
        %1198 = vmatpush.msra.mxu0 0.0
        %1199 = vmatpush.msra.mxu0 0.0
        %1200 = vmatpush.msra.mxu0 0.0
        %1201 = vmatpush.msra.mxu0 0.0
        %1202 = vmatpush.msra.mxu0 0.0
        %1203 = vmatpush.msra.mxu0 %v1183
        %1204 = vmatpush.msra.mxu0 %v1172
        %1205 = vmatpush.msra.mxu0 %v1161
        %1206 = vmatpush.msra.mxu0 %v1150
        %1207 = vmatpush.msra.mxu0 %v1093
        %1208 = vmatpush.msra.mxu0 %v1139
        %1209 = vmatpush.msra.mxu0 %v1128
        %1210 = vmatpush.msra.mxu0 %v1117
        %1211 = vmatpush.msra.mxu0 %v1106
        %1212 = vmatmul.f32.gmra.mxu0 %v1194
        %v1213 = vpop.f32.mrf.mxu0
        %v1214 = vadd.f32 %v1190, %v1213
        %1215 = vdwg.mxu0
        %1216 = vmatpush.msra.mxu0 0.0
        %1217 = vmatpush.msra.mxu0 0.0
        %1218 = vmatpush.msra.mxu0 0.0
        %1219 = vmatpush.msra.mxu0 0.0
        %1220 = vmatpush.msra.mxu0 0.0
        %1221 = vmatpush.msra.mxu0 0.0
        %1222 = vmatpush.msra.mxu0 0.0
        %1223 = vmatpush.msra.mxu0 %v1184
        %1224 = vmatpush.msra.mxu0 %v1173
        %1225 = vmatpush.msra.mxu0 %v1162
        %1226 = vmatpush.msra.mxu0 %v1151
        %1227 = vmatpush.msra.mxu0 %v1094
        %1228 = vmatpush.msra.mxu0 %v1140
        %1229 = vmatpush.msra.mxu0 %v1129
        %1230 = vmatpush.msra.mxu0 %v1118
        %1231 = vmatpush.msra.mxu0 %v1107
        %1232 = vmatmul.f32.gmra.mxu0 %v1194
        %v1233 = vpop.f32.mrf.mxu0
        %v1234 = vadd.f32 %v1190, %v1233
        %1235 = vdwg.mxu0
        %vm1236 = vcmp.ge.f32.partialorder %v1214, 0.0
        %vm1237 = vcmp.ge.f32.partialorder %v1234, 0.0
        %v1238 = vstv %s778
        %v1239 = vmul.f32 %v1238, %v1214
        %v1240 = vmul.f32 %v1238, %v1234
        %v1241 = vsel %vm1236, %v1214, %v1239
        %v1242 = vsel %vm1237, %v1234, %v1240
        %1243 = vst [vmem:[%s764] sm:$0xff] %v1241
        %1244 = vst [vmem:[%s764 + $0x8] sm:$0xff] %v1242
        %1246 = vrot.lane.b32.xlu0 %v784, 73
        %v1247 = vpop.permute.xlu0 %1246
        %1249 = vrot.lane.b32.xlu0 %v784, 9
        %v1250 = vpop.permute.xlu0 %1249
        %vm1252 = vcmask 72704
        %v1253 = vsel %vm1252, %v1247, %v1250
        %v1254 = vld [vmem:[#allocation6] sm:$0x1]
        %v1255 = vperm.slane %v1254, 0
        %v1256 = vmul.f32 %v1253, %v1255
        %1257 = vrot.lane.b32.xlu0 %v784, 72
        %v1258 = vpop.permute.xlu0 %1257
        %1260 = vrot.lane.b32.xlu0 %v784, 8
        %v1261 = vpop.permute.xlu0 %1260
        %vm1263 = vcmask 64512
        %v1264 = vsel %vm1263, %v1258, %v1261
        %v1265 = vld [vmem:[#allocation6 + $0x1] sm:$0x1]
        %v1266 = vperm.slane %v1265, 0
        %v1267 = vmul.f32 %v1264, %v1266
        %1268 = vrot.lane.b32.xlu0 %v784, 71
        %v1269 = vpop.permute.xlu0 %1268
        %1271 = vrot.lane.b32.xlu0 %v784, 7
        %v1272 = vpop.permute.xlu0 %1271
        %vm1274 = vcmask 56320
        %v1275 = vsel %vm1274, %v1269, %v1272
        %v1276 = vld [vmem:[#allocation6 + $0x2] sm:$0x1]
        %v1277 = vperm.slane %v1276, 0
        %v1278 = vmul.f32 %v1275, %v1277
        %1279 = vrot.lane.b32.xlu0 %v784, 65
        %v1280 = vpop.permute.xlu0 %1279
        %1282 = vrot.lane.b32.xlu0 %v784, 1
        %v1283 = vpop.permute.xlu0 %1282
        %v1285 = vsel %vm875, %v1280, %v1283
        %v1286 = vld [vmem:[#allocation6 + $0x3] sm:$0x1]
        %v1287 = vperm.slane %v1286, 0
        %v1288 = vmul.f32 %v1285, %v1287
        %1289 = vrot.lane.b32.xlu0 %v784, 127
        %v1290 = vpop.permute.xlu0 %1289
        %1292 = vrot.lane.b32.xlu0 %v784, 63
        %v1293 = vpop.permute.xlu0 %1292
        %vm1295 = vcmask 515072
        %v1296 = vsel %vm1295, %v1290, %v1293
        %v1297 = vld [vmem:[#allocation6 + $0x5] sm:$0x1]
        %v1298 = vperm.slane %v1297, 0
        %v1299 = vmul.f32 %v1296, %v1298
        %1300 = vrot.lane.b32.xlu0 %v784, 121
        %v1301 = vpop.permute.xlu0 %1300
        %1303 = vrot.lane.b32.xlu0 %v784, 57
        %v1304 = vpop.permute.xlu0 %1303
        %vm1306 = vcmask 465920
        %v1307 = vsel %vm1306, %v1301, %v1304
        %v1308 = vld [vmem:[#allocation6 + $0x6] sm:$0x1]
        %v1309 = vperm.slane %v1308, 0
        %v1310 = vmul.f32 %v1307, %v1309
        %1311 = vrot.lane.b32.xlu0 %v784, 120
        %v1312 = vpop.permute.xlu0 %1311
        %1314 = vrot.lane.b32.xlu0 %v784, 56
        %v1315 = vpop.permute.xlu0 %1314
        %vm1317 = vcmask 457728
        %v1318 = vsel %vm1317, %v1312, %v1315
        %v1319 = vld [vmem:[#allocation6 + $0x7] sm:$0x1]
        %v1320 = vperm.slane %v1319, 0
        %v1321 = vmul.f32 %v1318, %v1320
        %1322 = vrot.lane.b32.xlu0 %v784, 119
        %v1323 = vpop.permute.xlu0 %1322
        %1325 = vrot.lane.b32.xlu0 %v784, 55
        %v1326 = vpop.permute.xlu0 %1325
        %vm1328 = vcmask 449536
        %v1329 = vsel %vm1328, %v1323, %v1326
        %v1330 = vld [vmem:[#allocation6 + $0x8] sm:$0x1]
        %v1331 = vperm.slane %v1330, 0
        %v1332 = vmul.f32 %v1329, %v1331
        %v1333 = vld [vmem:[#allocation11] sm:$0xff]
        %v1334 = vld [vmem:[#allocation11 + $0x8] sm:$0xff]
        %v1335 = vld [vmem:[%s10] sm:$0xff]
        %v1336 = vld [vmem:[%s10 + $0x8] sm:$0xff]
        %1338 = vset.pattern.permute.xlu0 0
        %1339 = vperm.xlu0 %1338, %v1335
        %v1340 = vpop.permute.xlu0 %1339
        %1343 = vset.pattern.permute.xlu0 0
        %1344 = vperm.xlu0 %1343, %v1336
        %v1345 = vpop.permute.xlu0 %1344
        %v1348 = vsel %vm1192, %v1333, 0
        %v1351 = vsel %vm1192, %v1334, 0
        %1353 = vmatpush.msra.mxu0 0.0
        %1354 = vmatpush.msra.mxu0 0.0
        %1355 = vmatpush.msra.mxu0 0.0
        %1356 = vmatpush.msra.mxu0 0.0
        %1357 = vmatpush.msra.mxu0 0.0
        %1358 = vmatpush.msra.mxu0 0.0
        %1359 = vmatpush.msra.mxu0 0.0
        %1360 = vmatpush.msra.mxu0 %v1332
        %1361 = vmatpush.msra.mxu0 %v1321
        %1362 = vmatpush.msra.mxu0 %v1310
        %1363 = vmatpush.msra.mxu0 %v1299
        %1364 = vmatpush.msra.mxu0 %v784
        %1365 = vmatpush.msra.mxu0 %v1288
        %1366 = vmatpush.msra.mxu0 %v1278
        %1367 = vmatpush.msra.mxu0 %v1267
        %1368 = vmatpush.msra.mxu0 %v1256
        %1369 = vmatmul.f32.gmra.mxu0 %v1348
        %v1370 = vpop.f32.mrf.mxu0
        %v1371 = vadd.f32 %v1340, %v1370
        %1372 = vmatmul.f32.gmra.mxu0 %v1351
        %v1373 = vpop.f32.mrf.mxu0
        %v1374 = vadd.f32 %v1345, %v1373
        %1375 = vdwg.mxu0
        %vm1376 = vcmp.ge.f32.partialorder %v1371, 0.0
        %vm1377 = vcmp.ge.f32.partialorder %v1374, 0.0
        %v1378 = vstv %s779
        %v1379 = vmul.f32 %v1378, %v1371
        %v1380 = vmul.f32 %v1378, %v1374
        %v1381 = vsel %vm1376, %v1371, %v1379
        %v1382 = vsel %vm1377, %v1374, %v1380
        %1385 = vrot.lane.b32.xlu0 %v1381, 73
        %v1386 = vpop.permute.xlu0 %1385
        %1387 = vrot.lane.b32.xlu0 %v1382, 73
        %v1388 = vpop.permute.xlu0 %1387
        %1391 = vrot.lane.b32.xlu0 %v1381, 9
        %v1392 = vpop.permute.xlu0 %1391
        %1393 = vrot.lane.b32.xlu0 %v1382, 9
        %v1394 = vpop.permute.xlu0 %1393
        %v1397 = vsel %vm1252, %v1386, %v1392
        %v1398 = vsel %vm1252, %v1388, %v1394
        %v1399 = vmul.f32 %v1397, %v1255
        %v1400 = vmul.f32 %v1398, %v1255
        %1401 = vrot.lane.b32.xlu0 %v1381, 72
        %v1402 = vpop.permute.xlu0 %1401
        %1403 = vrot.lane.b32.xlu0 %v1382, 72
        %v1404 = vpop.permute.xlu0 %1403
        %1407 = vrot.lane.b32.xlu0 %v1381, 8
        %v1408 = vpop.permute.xlu0 %1407
        %1409 = vrot.lane.b32.xlu0 %v1382, 8
        %v1410 = vpop.permute.xlu0 %1409
        %v1413 = vsel %vm1263, %v1402, %v1408
        %v1414 = vsel %vm1263, %v1404, %v1410
        %v1415 = vmul.f32 %v1413, %v1266
        %v1416 = vmul.f32 %v1414, %v1266
        %1417 = vrot.lane.b32.xlu0 %v1381, 71
        %v1418 = vpop.permute.xlu0 %1417
        %1419 = vrot.lane.b32.xlu0 %v1382, 71
        %v1420 = vpop.permute.xlu0 %1419
        %1423 = vrot.lane.b32.xlu0 %v1381, 7
        %v1424 = vpop.permute.xlu0 %1423
        %1425 = vrot.lane.b32.xlu0 %v1382, 7
        %v1426 = vpop.permute.xlu0 %1425
        %v1429 = vsel %vm1274, %v1418, %v1424
        %v1430 = vsel %vm1274, %v1420, %v1426
        %v1431 = vmul.f32 %v1429, %v1277
        %v1432 = vmul.f32 %v1430, %v1277
        %1433 = vrot.lane.b32.xlu0 %v1381, 65
        %v1434 = vpop.permute.xlu0 %1433
        %1435 = vrot.lane.b32.xlu0 %v1382, 65
        %v1436 = vpop.permute.xlu0 %1435
        %1439 = vrot.lane.b32.xlu0 %v1381, 1
        %v1440 = vpop.permute.xlu0 %1439
        %1441 = vrot.lane.b32.xlu0 %v1382, 1
        %v1442 = vpop.permute.xlu0 %1441
        %v1445 = vsel %vm875, %v1434, %v1440
        %v1446 = vsel %vm875, %v1436, %v1442
        %v1447 = vmul.f32 %v1445, %v1287
        %v1448 = vmul.f32 %v1446, %v1287
        %1449 = vrot.lane.b32.xlu0 %v1381, 127
        %v1450 = vpop.permute.xlu0 %1449
        %1451 = vrot.lane.b32.xlu0 %v1382, 127
        %v1452 = vpop.permute.xlu0 %1451
        %1455 = vrot.lane.b32.xlu0 %v1381, 63
        %v1456 = vpop.permute.xlu0 %1455
        %1457 = vrot.lane.b32.xlu0 %v1382, 63
        %v1458 = vpop.permute.xlu0 %1457
        %v1461 = vsel %vm1295, %v1450, %v1456
        %v1462 = vsel %vm1295, %v1452, %v1458
        %v1463 = vmul.f32 %v1461, %v1298
        %v1464 = vmul.f32 %v1462, %v1298
        %1465 = vrot.lane.b32.xlu0 %v1381, 121
        %v1466 = vpop.permute.xlu0 %1465
        %1467 = vrot.lane.b32.xlu0 %v1382, 121
        %v1468 = vpop.permute.xlu0 %1467
        %1471 = vrot.lane.b32.xlu0 %v1381, 57
        %v1472 = vpop.permute.xlu0 %1471
        %1473 = vrot.lane.b32.xlu0 %v1382, 57
        %v1474 = vpop.permute.xlu0 %1473
        %v1477 = vsel %vm1306, %v1466, %v1472
        %v1478 = vsel %vm1306, %v1468, %v1474
        %v1479 = vmul.f32 %v1477, %v1309
        %v1480 = vmul.f32 %v1478, %v1309
        %1481 = vrot.lane.b32.xlu0 %v1381, 120
        %v1482 = vpop.permute.xlu0 %1481
        %1483 = vrot.lane.b32.xlu0 %v1382, 120
        %v1484 = vpop.permute.xlu0 %1483
        %1487 = vrot.lane.b32.xlu0 %v1381, 56
        %v1488 = vpop.permute.xlu0 %1487
        %1489 = vrot.lane.b32.xlu0 %v1382, 56
        %v1490 = vpop.permute.xlu0 %1489
        %v1493 = vsel %vm1317, %v1482, %v1488
        %v1494 = vsel %vm1317, %v1484, %v1490
        %v1495 = vmul.f32 %v1493, %v1320
        %v1496 = vmul.f32 %v1494, %v1320
        %1497 = vrot.lane.b32.xlu0 %v1381, 119
        %v1498 = vpop.permute.xlu0 %1497
        %1499 = vrot.lane.b32.xlu0 %v1382, 119
        %v1500 = vpop.permute.xlu0 %1499
        %1503 = vrot.lane.b32.xlu0 %v1381, 55
        %v1504 = vpop.permute.xlu0 %1503
        %1505 = vrot.lane.b32.xlu0 %v1382, 55
        %v1506 = vpop.permute.xlu0 %1505
        %v1509 = vsel %vm1328, %v1498, %v1504
        %v1510 = vsel %vm1328, %v1500, %v1506
        %v1511 = vmul.f32 %v1509, %v1331
        %v1512 = vmul.f32 %v1510, %v1331
        %v1513 = vld [vmem:[#allocation12] sm:$0xff]
        %v1514 = vld [vmem:[#allocation12 + $0x8] sm:$0xff]
        %v1515 = vld [vmem:[#allocation12 + $0x10] sm:$0xff]
        %v1516 = vld [vmem:[#allocation12 + $0x18] sm:$0xff]
        %v1517 = vld [vmem:[%s12] sm:$0xff]
        %v1518 = vld [vmem:[%s12 + $0x8] sm:$0xff]
        %1520 = vset.pattern.permute.xlu0 0
        %1521 = vperm.xlu0 %1520, %v1517
        %v1522 = vpop.permute.xlu0 %1521
        %1525 = vset.pattern.permute.xlu0 0
        %1526 = vperm.xlu0 %1525, %v1518
        %v1527 = vpop.permute.xlu0 %1526
        %v1530 = vsel %vm823, %v1514, 0
        %v1533 = vsel %vm823, %v1516, 0
        %1535 = vmatpush.msra.mxu0 %v1496
        %1536 = vmatpush.msra.mxu0 %v1495
        %1537 = vmatpush.msra.mxu0 %v1480
        %1538 = vmatpush.msra.mxu0 %v1479
        %1539 = vmatpush.msra.mxu0 %v1464
        %1540 = vmatpush.msra.mxu0 %v1463
        %1541 = vmatpush.msra.mxu0 %v1382
        %1542 = vmatpush.msra.mxu0 %v1381
        %1543 = vmatpush.msra.mxu0 %v1448
        %1544 = vmatpush.msra.mxu0 %v1447
        %1545 = vmatpush.msra.mxu0 %v1432
        %1546 = vmatpush.msra.mxu0 %v1431
        %1547 = vmatpush.msra.mxu0 %v1416
        %1548 = vmatpush.msra.mxu0 %v1415
        %1549 = vmatpush.msra.mxu0 %v1400
        %1550 = vmatpush.msra.mxu0 %v1399
        %1551 = vmatmul.f32.gmra.mxu0 %v1513
        %v1552 = vpop.f32.mrf.mxu0
        %v1553 = vadd.f32 %v1522, %v1552
        %1554 = vmatmul.f32.gmra.mxu0 %v1515
        %v1555 = vpop.f32.mrf.mxu0
        %v1556 = vadd.f32 %v1527, %v1555
        %1557 = vdwg.mxu0
        %1558 = vmatpush.msra.mxu0 0.0
        %1559 = vmatpush.msra.mxu0 0.0
        %1560 = vmatpush.msra.mxu0 0.0
        %1561 = vmatpush.msra.mxu0 0.0
        %1562 = vmatpush.msra.mxu0 0.0
        %1563 = vmatpush.msra.mxu0 0.0
        %1564 = vmatpush.msra.mxu0 0.0
        %1565 = vmatpush.msra.mxu0 0.0
        %1566 = vmatpush.msra.mxu0 0.0
        %1567 = vmatpush.msra.mxu0 0.0
        %1568 = vmatpush.msra.mxu0 0.0
        %1569 = vmatpush.msra.mxu0 0.0
        %1570 = vmatpush.msra.mxu0 0.0
        %1571 = vmatpush.msra.mxu0 0.0
        %1572 = vmatpush.msra.mxu0 %v1512
        %1573 = vmatpush.msra.mxu0 %v1511
        %1574 = vmatmul.f32.gmra.mxu0 %v1530
        %v1575 = vpop.f32.mrf.mxu0
        %v1576 = vadd.f32 %v1553, %v1575
        %1577 = vmatmul.f32.gmra.mxu0 %v1533
        %v1578 = vpop.f32.mrf.mxu0
        %v1579 = vadd.f32 %v1556, %v1578
        %1580 = vdwg.mxu0
        %vm1581 = vcmp.ge.f32.partialorder %v1576, 0.0
        %vm1582 = vcmp.ge.f32.partialorder %v1579, 0.0
        %v1583 = vstv %s780
        %v1584 = vmul.f32 %v1583, %v1576
        %v1585 = vmul.f32 %v1583, %v1579
        %v1586 = vsel %vm1581, %v1576, %v1584
        %v1587 = vsel %vm1582, %v1579, %v1585
        %1589 = vrot.lane.b32.xlu0 %v1242, 17
        %v1590 = vpop.permute.xlu0 %1589
        %1593 = vrot.lane.b32.xlu0 %v1241, 17
        %v1594 = vpop.permute.xlu0 %1593
        %v1595 = vsel %vm798, %v1594, %v1590
        %v1598 = vsel %vm798, %v1590, %v1594
        %v1599 = vld [vmem:[%s2] ss:$8 sm:$0x3]
        %v1601 = vperm.slane %v1599, 0
        %v1602 = vperm.slane %v1599, 1
        %v1605 = vmul.f32 %v1598, %v1601
        %v1606 = vmul.f32 %v1595, %v1602
        %1607 = vrot.lane.b32.xlu0 %v1242, 16
        %v1608 = vpop.permute.xlu0 %1607
        %1610 = vrot.lane.b32.xlu0 %v1241, 16
        %v1611 = vpop.permute.xlu0 %1610
        %v1612 = vsel %vm823, %v1611, %v1608
        %v1615 = vsel %vm823, %v1608, %v1611
        %v1616 = vld [vmem:[%s828] ss:$8 sm:$0x3]
        %v1618 = vperm.slane %v1616, 0
        %v1619 = vperm.slane %v1616, 1
        %v1622 = vmul.f32 %v1615, %v1618
        %v1623 = vmul.f32 %v1612, %v1619
        %1624 = vrot.lane.b32.xlu0 %v1242, 15
        %v1625 = vpop.permute.xlu0 %1624
        %1627 = vrot.lane.b32.xlu0 %v1241, 15
        %v1628 = vpop.permute.xlu0 %1627
        %v1629 = vsel %vm849, %v1628, %v1625
        %v1632 = vsel %vm849, %v1625, %v1628
        %v1633 = vld [vmem:[%s854] ss:$8 sm:$0x3]
        %v1635 = vperm.slane %v1633, 0
        %v1636 = vperm.slane %v1633, 1
        %v1639 = vmul.f32 %v1632, %v1635
        %v1640 = vmul.f32 %v1629, %v1636
        %1641 = vrot.lane.b32.xlu0 %v1242, 1
        %v1642 = vpop.permute.xlu0 %1641
        %1644 = vrot.lane.b32.xlu0 %v1241, 1
        %v1645 = vpop.permute.xlu0 %1644
        %v1646 = vsel %vm875, %v1645, %v1642
        %v1649 = vsel %vm875, %v1642, %v1645
        %v1650 = vld [vmem:[%s880] ss:$8 sm:$0x3]
        %v1652 = vperm.slane %v1650, 0
        %v1653 = vperm.slane %v1650, 1
        %v1656 = vmul.f32 %v1649, %v1652
        %v1657 = vmul.f32 %v1646, %v1653
        %1658 = vrot.lane.b32.xlu0 %v1241, 127
        %v1659 = vpop.permute.xlu0 %1658
        %1660 = vrot.lane.b32.xlu0 %v1242, 127
        %v1661 = vpop.permute.xlu0 %1660
        %v1662 = vsel %vm896, %v1659, %v1661
        %v1666 = vsel %vm896, %v1661, %v1659
        %v1667 = vld [vmem:[%s906] ss:$8 sm:$0x3]
        %v1669 = vperm.slane %v1667, 0
        %v1670 = vperm.slane %v1667, 1
        %v1673 = vmul.f32 %v1662, %v1669
        %v1674 = vmul.f32 %v1666, %v1670
        %1675 = vrot.lane.b32.xlu0 %v1241, 113
        %v1676 = vpop.permute.xlu0 %1675
        %1677 = vrot.lane.b32.xlu0 %v1242, 113
        %v1678 = vpop.permute.xlu0 %1677
        %v1679 = vsel %vm922, %v1676, %v1678
        %v1683 = vsel %vm922, %v1678, %v1676
        %v1684 = vld [vmem:[%s932] ss:$8 sm:$0x3]
        %v1686 = vperm.slane %v1684, 0
        %v1687 = vperm.slane %v1684, 1
        %v1690 = vmul.f32 %v1679, %v1686
        %v1691 = vmul.f32 %v1683, %v1687
        %1692 = vrot.lane.b32.xlu0 %v1241, 112
        %v1693 = vpop.permute.xlu0 %1692
        %1694 = vrot.lane.b32.xlu0 %v1242, 112
        %v1695 = vpop.permute.xlu0 %1694
        %v1696 = vsel %vm948, %v1693, %v1695
        %v1700 = vsel %vm948, %v1695, %v1693
        %v1701 = vld [vmem:[%s958] ss:$8 sm:$0x3]
        %v1703 = vperm.slane %v1701, 0
        %v1704 = vperm.slane %v1701, 1
        %v1707 = vmul.f32 %v1696, %v1703
        %v1708 = vmul.f32 %v1700, %v1704
        %1709 = vrot.lane.b32.xlu0 %v1241, 111
        %v1710 = vpop.permute.xlu0 %1709
        %1711 = vrot.lane.b32.xlu0 %v1242, 111
        %v1712 = vpop.permute.xlu0 %1711
        %v1713 = vsel %vm974, %v1710, %v1712
        %v1717 = vsel %vm974, %v1712, %v1710
        %v1718 = vld [vmem:[%s984] ss:$8 sm:$0x3]
        %v1720 = vperm.slane %v1718, 0
        %v1721 = vperm.slane %v1718, 1
        %v1724 = vmul.f32 %v1713, %v1720
        %v1725 = vmul.f32 %v1717, %v1721
        %v1726 = vld [vmem:[#allocation14] sm:$0xff]
        %v1727 = vld [vmem:[#allocation14 + $0x8] sm:$0xff]
        %v1729 = vsel %vm1192, %v1726, 0
        %v1732 = vsel %vm1192, %v1727, 0
        %1734 = vmatpush.msra.mxu0 0.0
        %1735 = vmatpush.msra.mxu0 0.0
        %1736 = vmatpush.msra.mxu0 0.0
        %1737 = vmatpush.msra.mxu0 0.0
        %1738 = vmatpush.msra.mxu0 0.0
        %1739 = vmatpush.msra.mxu0 0.0
        %1740 = vmatpush.msra.mxu0 0.0
        %1741 = vmatpush.msra.mxu0 %v1724
        %1742 = vmatpush.msra.mxu0 %v1707
        %1743 = vmatpush.msra.mxu0 %v1690
        %1744 = vmatpush.msra.mxu0 %v1673
        %1745 = vmatpush.msra.mxu0 %v1241
        %1746 = vmatpush.msra.mxu0 %v1656
        %1747 = vmatpush.msra.mxu0 %v1639
        %1748 = vmatpush.msra.mxu0 %v1622
        %1749 = vmatpush.msra.mxu0 %v1605
        %1750 = vmatmul.f32.gmra.mxu0 %v1729
        %v1751 = vpop.f32.mrf.mxu0
        %v1752 = vadd.f32 0.0, %v1751
        %1753 = vmatmul.f32.gmra.mxu0 %v1732
        %v1754 = vpop.f32.mrf.mxu0
        %v1755 = vadd.f32 0.0, %v1754
        %1756 = vdwg.mxu0
        %1757 = vmatpush.msra.mxu0 0.0
        %1758 = vmatpush.msra.mxu0 0.0
        %1759 = vmatpush.msra.mxu0 0.0
        %1760 = vmatpush.msra.mxu0 0.0
        %1761 = vmatpush.msra.mxu0 0.0
        %1762 = vmatpush.msra.mxu0 0.0
        %1763 = vmatpush.msra.mxu0 0.0
        %1764 = vmatpush.msra.mxu0 %v1725
        %1765 = vmatpush.msra.mxu0 %v1708
        %1766 = vmatpush.msra.mxu0 %v1691
        %1767 = vmatpush.msra.mxu0 %v1674
        %1768 = vmatpush.msra.mxu0 %v1242
        %1769 = vmatpush.msra.mxu0 %v1657
        %1770 = vmatpush.msra.mxu0 %v1640
        %1771 = vmatpush.msra.mxu0 %v1623
        %1772 = vmatpush.msra.mxu0 %v1606
        %1773 = vmatmul.f32.gmra.mxu0 %v1729
        %v1774 = vpop.f32.mrf.mxu0
        %v1775 = vadd.f32 0.0, %v1774
        %1776 = vmatmul.f32.gmra.mxu0 %v1732
        %v1777 = vpop.f32.mrf.mxu0
        %v1778 = vadd.f32 0.0, %v1777
        %1779 = vdwg.mxu0
        %v1780 = vld [vmem:[%s4] ss:$8 sm:$0x3]
        %v1782 = vperm.slane %v1780, 0
        %v1783 = vperm.slane %v1780, 1
        %v1786 = vmul.f32 %v1782, %v1752
        %v1787 = vmul.f32 %v1783, %v1775
        %v1788 = vmul.f32 %v1782, %v1755
        %v1789 = vmul.f32 %v1783, %v1778
        %v1790 = vadd.f32 %v1786, 0.0
        %v1791 = vadd.f32 %v1787, 0.0
        %v1792 = vadd.f32 %v1788, 0.0
        %v1793 = vadd.f32 %v1789, 0.0
        %s1794 = scalar_lea.vmem %s4, 1
        %v1795 = vld [vmem:[%s1794] ss:$8 sm:$0x3]
        %1800 = vrot.lane.b32.xlu0 %v1752, 127
        %v1801 = vpop.permute.xlu0 %1800
        %1802 = vrot.lane.b32.xlu0 %v1775, 127
        %v1803 = vpop.permute.xlu0 %1802
        %1804 = vrot.lane.b32.xlu0 %v1755, 127
        %v1805 = vpop.permute.xlu0 %1804
        %1806 = vrot.lane.b32.xlu0 %v1778, 127
        %v1807 = vpop.permute.xlu0 %1806
        %v1808 = vsel %vm896, %v1801, %v1803
        %v1809 = vsel %vm896, %v1805, %v1807
        %v1816 = vsel %vm896, %v1803, %v1801
        %v1817 = vsel %vm896, %v1807, %v1805
        %v1819 = vperm.slane %v1795, 0
        %v1820 = vperm.slane %v1795, 1
        %v1823 = vmul.f32 %v1819, %v1808
        %v1824 = vmul.f32 %v1820, %v1816
        %v1825 = vmul.f32 %v1819, %v1809
        %v1826 = vmul.f32 %v1820, %v1817
        %v1827 = vadd.f32 %v1790, %v1823
        %v1828 = vadd.f32 %v1791, %v1824
        %v1829 = vadd.f32 %v1792, %v1825
        %v1830 = vadd.f32 %v1793, %v1826
        %s1831 = scalar_lea.vmem %s4, 2
        %v1832 = vld [vmem:[%s1831] ss:$8 sm:$0x3]
        %1833 = vrot.lane.b32.xlu0 %v1752, 126
        %v1834 = vpop.permute.xlu0 %1833
        %1835 = vrot.lane.b32.xlu0 %v1775, 126
        %v1836 = vpop.permute.xlu0 %1835
        %1837 = vrot.lane.b32.xlu0 %v1755, 126
        %v1838 = vpop.permute.xlu0 %1837
        %1839 = vrot.lane.b32.xlu0 %v1778, 126
        %v1840 = vpop.permute.xlu0 %1839
        %vm1841 = vcmask 1031168
        %v1842 = vsel %vm1841, %v1834, %v1836
        %v1843 = vsel %vm1841, %v1838, %v1840
        %v1850 = vsel %vm1841, %v1836, %v1834
        %v1851 = vsel %vm1841, %v1840, %v1838
        %v1853 = vperm.slane %v1832, 0
        %v1854 = vperm.slane %v1832, 1
        %v1857 = vmul.f32 %v1853, %v1842
        %v1858 = vmul.f32 %v1854, %v1850
        %v1859 = vmul.f32 %v1853, %v1843
        %v1860 = vmul.f32 %v1854, %v1851
        %v1861 = vadd.f32 %v1827, %v1857
        %v1862 = vadd.f32 %v1828, %v1858
        %v1863 = vadd.f32 %v1829, %v1859
        %v1864 = vadd.f32 %v1830, %v1860
        %s1865 = scalar_lea.vmem %s4, 3
        %v1866 = vld [vmem:[%s1865] ss:$8 sm:$0x3]
        %1867 = vrot.lane.b32.xlu0 %v1752, 125
        %v1868 = vpop.permute.xlu0 %1867
        %1869 = vrot.lane.b32.xlu0 %v1775, 125
        %v1870 = vpop.permute.xlu0 %1869
        %1871 = vrot.lane.b32.xlu0 %v1755, 125
        %v1872 = vpop.permute.xlu0 %1871
        %1873 = vrot.lane.b32.xlu0 %v1778, 125
        %v1874 = vpop.permute.xlu0 %1873
        %vm1875 = vcmask 1022976
        %v1876 = vsel %vm1875, %v1868, %v1870
        %v1877 = vsel %vm1875, %v1872, %v1874
        %v1884 = vsel %vm1875, %v1870, %v1868
        %v1885 = vsel %vm1875, %v1874, %v1872
        %v1887 = vperm.slane %v1866, 0
        %v1888 = vperm.slane %v1866, 1
        %v1891 = vmul.f32 %v1887, %v1876
        %v1892 = vmul.f32 %v1888, %v1884
        %v1893 = vmul.f32 %v1887, %v1877
        %v1894 = vmul.f32 %v1888, %v1885
        %v1895 = vadd.f32 %v1861, %v1891
        %v1896 = vadd.f32 %v1862, %v1892
        %v1897 = vadd.f32 %v1863, %v1893
        %v1898 = vadd.f32 %v1864, %v1894
        %s1899 = scalar_lea.vmem %s4, 4
        %v1900 = vld [vmem:[%s1899] ss:$8 sm:$0x3]
        %1901 = vrot.lane.b32.xlu0 %v1752, 124
        %v1902 = vpop.permute.xlu0 %1901
        %1903 = vrot.lane.b32.xlu0 %v1775, 124
        %v1904 = vpop.permute.xlu0 %1903
        %1905 = vrot.lane.b32.xlu0 %v1755, 124
        %v1906 = vpop.permute.xlu0 %1905
        %1907 = vrot.lane.b32.xlu0 %v1778, 124
        %v1908 = vpop.permute.xlu0 %1907
        %vm1909 = vcmask 1014784
        %v1910 = vsel %vm1909, %v1902, %v1904
        %v1911 = vsel %vm1909, %v1906, %v1908
        %v1918 = vsel %vm1909, %v1904, %v1902
        %v1919 = vsel %vm1909, %v1908, %v1906
        %v1921 = vperm.slane %v1900, 0
        %v1922 = vperm.slane %v1900, 1
        %v1925 = vmul.f32 %v1921, %v1910
        %v1926 = vmul.f32 %v1922, %v1918
        %v1927 = vmul.f32 %v1921, %v1911
        %v1928 = vmul.f32 %v1922, %v1919
        %v1929 = vadd.f32 %v1895, %v1925
        %v1930 = vadd.f32 %v1896, %v1926
        %v1931 = vadd.f32 %v1897, %v1927
        %v1932 = vadd.f32 %v1898, %v1928
        %s1933 = scalar_lea.vmem %s4, 5
        %v1934 = vld [vmem:[%s1933] ss:$8 sm:$0x3]
        %1935 = vrot.lane.b32.xlu0 %v1752, 123
        %v1936 = vpop.permute.xlu0 %1935
        %1937 = vrot.lane.b32.xlu0 %v1775, 123
        %v1938 = vpop.permute.xlu0 %1937
        %1939 = vrot.lane.b32.xlu0 %v1755, 123
        %v1940 = vpop.permute.xlu0 %1939
        %1941 = vrot.lane.b32.xlu0 %v1778, 123
        %v1942 = vpop.permute.xlu0 %1941
        %vm1943 = vcmask 1006592
        %v1944 = vsel %vm1943, %v1936, %v1938
        %v1945 = vsel %vm1943, %v1940, %v1942
        %v1952 = vsel %vm1943, %v1938, %v1936
        %v1953 = vsel %vm1943, %v1942, %v1940
        %v1955 = vperm.slane %v1934, 0
        %v1956 = vperm.slane %v1934, 1
        %v1959 = vmul.f32 %v1955, %v1944
        %v1960 = vmul.f32 %v1956, %v1952
        %v1961 = vmul.f32 %v1955, %v1945
        %v1962 = vmul.f32 %v1956, %v1953
        %v1963 = vadd.f32 %v1929, %v1959
        %v1964 = vadd.f32 %v1930, %v1960
        %v1965 = vadd.f32 %v1931, %v1961
        %v1966 = vadd.f32 %v1932, %v1962
        %s1967 = scalar_lea.vmem %s4, 6
        %v1968 = vld [vmem:[%s1967] ss:$8 sm:$0x3]
        %1969 = vrot.lane.b32.xlu0 %v1752, 122
        %v1970 = vpop.permute.xlu0 %1969
        %1971 = vrot.lane.b32.xlu0 %v1775, 122
        %v1972 = vpop.permute.xlu0 %1971
        %1973 = vrot.lane.b32.xlu0 %v1755, 122
        %v1974 = vpop.permute.xlu0 %1973
        %1975 = vrot.lane.b32.xlu0 %v1778, 122
        %v1976 = vpop.permute.xlu0 %1975
        %vm1977 = vcmask 998400
        %v1978 = vsel %vm1977, %v1970, %v1972
        %v1979 = vsel %vm1977, %v1974, %v1976
        %v1986 = vsel %vm1977, %v1972, %v1970
        %v1987 = vsel %vm1977, %v1976, %v1974
        %v1989 = vperm.slane %v1968, 0
        %v1990 = vperm.slane %v1968, 1
        %v1993 = vmul.f32 %v1989, %v1978
        %v1994 = vmul.f32 %v1990, %v1986
        %v1995 = vmul.f32 %v1989, %v1979
        %v1996 = vmul.f32 %v1990, %v1987
        %v1997 = vadd.f32 %v1963, %v1993
        %v1998 = vadd.f32 %v1964, %v1994
        %v1999 = vadd.f32 %v1965, %v1995
        %v2000 = vadd.f32 %v1966, %v1996
        %s2001 = scalar_lea.vmem %s4, 7
        %v2002 = vld [vmem:[%s2001] ss:$8 sm:$0x3]
        %2003 = vrot.lane.b32.xlu0 %v1752, 121
        %v2004 = vpop.permute.xlu0 %2003
        %2005 = vrot.lane.b32.xlu0 %v1775, 121
        %v2006 = vpop.permute.xlu0 %2005
        %2007 = vrot.lane.b32.xlu0 %v1755, 121
        %v2008 = vpop.permute.xlu0 %2007
        %2009 = vrot.lane.b32.xlu0 %v1778, 121
        %v2010 = vpop.permute.xlu0 %2009
        %vm2011 = vcmask 990208
        %v2012 = vsel %vm2011, %v2004, %v2006
        %v2013 = vsel %vm2011, %v2008, %v2010
        %v2020 = vsel %vm2011, %v2006, %v2004
        %v2021 = vsel %vm2011, %v2010, %v2008
        %v2023 = vperm.slane %v2002, 0
        %v2024 = vperm.slane %v2002, 1
        %v2027 = vmul.f32 %v2023, %v2012
        %v2028 = vmul.f32 %v2024, %v2020
        %v2029 = vmul.f32 %v2023, %v2013
        %v2030 = vmul.f32 %v2024, %v2021
        %v2031 = vadd.f32 %v1997, %v2027
        %v2032 = vadd.f32 %v1998, %v2028
        %v2033 = vadd.f32 %v1999, %v2029
        %v2034 = vadd.f32 %v2000, %v2030
        %s2035 = scalar_lea.vmem %s4, 16
        %v2036 = vld [vmem:[%s2035] ss:$8 sm:$0x3]
        %v2038 = vperm.slane %v2036, 0
        %v2040 = vmul.f32 %v2038, %v2031
        %v2041 = vmul.f32 %v2038, %v2033
        %v2042 = vadd.f32 %v2040, 0.0
        %v2043 = vadd.f32 %v2041, 0.0
        %s2044 = scalar_lea.vmem %s4, 17
        %v2045 = vld [vmem:[%s2044] ss:$8 sm:$0x3]
        %2050 = vrot.lane.b32.xlu0 %v2031, 104
        %v2051 = vpop.permute.xlu0 %2050
        %2052 = vrot.lane.b32.xlu0 %v2032, 104
        %v2053 = vpop.permute.xlu0 %2052
        %2054 = vrot.lane.b32.xlu0 %v2033, 104
        %v2055 = vpop.permute.xlu0 %2054
        %2056 = vrot.lane.b32.xlu0 %v2034, 104
        %v2057 = vpop.permute.xlu0 %2056
        %vm2058 = vcmask 850944
        %v2059 = vsel %vm2058, %v2051, %v2053
        %v2060 = vsel %vm2058, %v2055, %v2057
        %v2064 = vperm.slane %v2045, 0
        %v2066 = vmul.f32 %v2064, %v2059
        %v2067 = vmul.f32 %v2064, %v2060
        %v2068 = vadd.f32 %v2042, %v2066
        %v2069 = vadd.f32 %v2043, %v2067
        %s2070 = scalar_lea.vmem %s4, 18
        %v2071 = vld [vmem:[%s2070] ss:$8 sm:$0x3]
        %2072 = vrot.lane.b32.xlu0 %v2031, 80
        %v2073 = vpop.permute.xlu0 %2072
        %2074 = vrot.lane.b32.xlu0 %v2032, 80
        %v2075 = vpop.permute.xlu0 %2074
        %2076 = vrot.lane.b32.xlu0 %v2033, 80
        %v2077 = vpop.permute.xlu0 %2076
        %2078 = vrot.lane.b32.xlu0 %v2034, 80
        %v2079 = vpop.permute.xlu0 %2078
        %vm2080 = vcmask 654336
        %v2081 = vsel %vm2080, %v2073, %v2075
        %v2082 = vsel %vm2080, %v2077, %v2079
        %v2086 = vperm.slane %v2071, 0
        %v2088 = vmul.f32 %v2086, %v2081
        %v2089 = vmul.f32 %v2086, %v2082
        %v2090 = vadd.f32 %v2068, %v2088
        %v2091 = vadd.f32 %v2069, %v2089
        %s2092 = scalar_lea.vmem %s4, 19
        %v2093 = vld [vmem:[%s2092] ss:$8 sm:$0x3]
        %2094 = vrot.lane.b32.xlu0 %v2031, 56
        %v2095 = vpop.permute.xlu0 %2094
        %2096 = vrot.lane.b32.xlu0 %v2032, 56
        %v2097 = vpop.permute.xlu0 %2096
        %2098 = vrot.lane.b32.xlu0 %v2033, 56
        %v2099 = vpop.permute.xlu0 %2098
        %2100 = vrot.lane.b32.xlu0 %v2034, 56
        %v2101 = vpop.permute.xlu0 %2100
        %v2102 = vsel %vm1317, %v2095, %v2097
        %v2103 = vsel %vm1317, %v2099, %v2101
        %v2107 = vperm.slane %v2093, 0
        %v2109 = vmul.f32 %v2107, %v2102
        %v2110 = vmul.f32 %v2107, %v2103
        %v2111 = vadd.f32 %v2090, %v2109
        %v2112 = vadd.f32 %v2091, %v2110
        %s2113 = scalar_lea.vmem %s4, 20
        %v2114 = vld [vmem:[%s2113] ss:$8 sm:$0x3]
        %2115 = vrot.lane.b32.xlu0 %v2031, 32
        %v2116 = vpop.permute.xlu0 %2115
        %2117 = vrot.lane.b32.xlu0 %v2032, 32
        %v2118 = vpop.permute.xlu0 %2117
        %2119 = vrot.lane.b32.xlu0 %v2033, 32
        %v2120 = vpop.permute.xlu0 %2119
        %2121 = vrot.lane.b32.xlu0 %v2034, 32
        %v2122 = vpop.permute.xlu0 %2121
        %vm2123 = vcmask 261120
        %v2124 = vsel %vm2123, %v2116, %v2118
        %v2125 = vsel %vm2123, %v2120, %v2122
        %v2129 = vperm.slane %v2114, 0
        %v2131 = vmul.f32 %v2129, %v2124
        %v2132 = vmul.f32 %v2129, %v2125
        %v2133 = vadd.f32 %v2111, %v2131
        %v2134 = vadd.f32 %v2112, %v2132
        %s2135 = scalar_lea.vmem %s4, 21
        %v2136 = vld [vmem:[%s2135] ss:$8 sm:$0x3]
        %2137 = vrot.lane.b32.xlu0 %v2031, 8
        %v2138 = vpop.permute.xlu0 %2137
        %2139 = vrot.lane.b32.xlu0 %v2032, 8
        %v2140 = vpop.permute.xlu0 %2139
        %2141 = vrot.lane.b32.xlu0 %v2033, 8
        %v2142 = vpop.permute.xlu0 %2141
        %2143 = vrot.lane.b32.xlu0 %v2034, 8
        %v2144 = vpop.permute.xlu0 %2143
        %v2145 = vsel %vm1263, %v2138, %v2140
        %v2146 = vsel %vm1263, %v2142, %v2144
        %v2150 = vperm.slane %v2136, 0
        %v2152 = vmul.f32 %v2150, %v2145
        %v2153 = vmul.f32 %v2150, %v2146
        %v2154 = vadd.f32 %v2133, %v2152
        %v2155 = vadd.f32 %v2134, %v2153
        %s2156 = scalar_lea.vmem %s4, 22
        %v2157 = vld [vmem:[%s2156] ss:$8 sm:$0x3]
        %2158 = vrot.lane.b32.xlu0 %v2032, 112
        %v2159 = vpop.permute.xlu0 %2158
        %2160 = vrot.lane.b32.xlu0 %v2034, 112
        %v2161 = vpop.permute.xlu0 %2160
        %2164 = vrot.lane.b32.xlu0 %v2031, 112
        %v2165 = vpop.permute.xlu0 %2164
        %2166 = vrot.lane.b32.xlu0 %v2033, 112
        %v2167 = vpop.permute.xlu0 %2166
        %v2170 = vsel %vm948, %v2159, %v2165
        %v2171 = vsel %vm948, %v2161, %v2167
        %v2173 = vperm.slane %v2157, 0
        %v2175 = vmul.f32 %v2173, %v2170
        %v2176 = vmul.f32 %v2173, %v2171
        %v2177 = vadd.f32 %v2154, %v2175
        %v2178 = vadd.f32 %v2155, %v2176
        %s2179 = scalar_lea.vmem %s4, 23
        %v2180 = vld [vmem:[%s2179] ss:$8 sm:$0x3]
        %2181 = vrot.lane.b32.xlu0 %v2032, 88
        %v2182 = vpop.permute.xlu0 %2181
        %2183 = vrot.lane.b32.xlu0 %v2034, 88
        %v2184 = vpop.permute.xlu0 %2183
        %2187 = vrot.lane.b32.xlu0 %v2031, 88
        %v2188 = vpop.permute.xlu0 %2187
        %2189 = vrot.lane.b32.xlu0 %v2033, 88
        %v2190 = vpop.permute.xlu0 %2189
        %vm2193 = vcmask 719872
        %v2194 = vsel %vm2193, %v2182, %v2188
        %v2195 = vsel %vm2193, %v2184, %v2190
        %v2197 = vperm.slane %v2180, 0
        %v2199 = vmul.f32 %v2197, %v2194
        %v2200 = vmul.f32 %v2197, %v2195
        %v2201 = vadd.f32 %v2177, %v2199
        %v2202 = vadd.f32 %v2178, %v2200
        %v2203 = vld [vmem:[%s14] sm:$0xff]
        %v2204 = vld [vmem:[%s14 + $0x8] sm:$0xff]
        %2206 = vset.pattern.permute.xlu0 0
        %2207 = vperm.xlu0 %2206, %v2203
        %v2208 = vpop.permute.xlu0 %2207
        %2211 = vset.pattern.permute.xlu0 0
        %2212 = vperm.xlu0 %2211, %v2204
        %v2213 = vpop.permute.xlu0 %2212
        %v2215 = vadd.f32 %v2201, %v2208
        %v2216 = vadd.f32 %v2202, %v2213
        %vm2217 = vcmp.ge.f32.partialorder %v2215, 0.0
        %vm2218 = vcmp.ge.f32.partialorder %v2216, 0.0
        %v2219 = vstv %s781
        %v2220 = vmul.f32 %v2219, %v2215
        %v2221 = vmul.f32 %v2219, %v2216
        %v2222 = vsel %vm2217, %v2215, %v2220
        %v2223 = vsel %vm2218, %v2216, %v2221
        %2226 = vrot.lane.b32.xlu0 %v2222, 73
        %v2227 = vpop.permute.xlu0 %2226
        %2228 = vrot.lane.b32.xlu0 %v2223, 73
        %v2229 = vpop.permute.xlu0 %2228
        %2232 = vrot.lane.b32.xlu0 %v2222, 9
        %v2233 = vpop.permute.xlu0 %2232
        %2234 = vrot.lane.b32.xlu0 %v2223, 9
        %v2235 = vpop.permute.xlu0 %2234
        %v2238 = vsel %vm1252, %v2227, %v2233
        %v2239 = vsel %vm1252, %v2229, %v2235
        %v2240 = vmul.f32 %v2238, %v1255
        %v2241 = vmul.f32 %v2239, %v1255
        %2242 = vrot.lane.b32.xlu0 %v2222, 72
        %v2243 = vpop.permute.xlu0 %2242
        %2244 = vrot.lane.b32.xlu0 %v2223, 72
        %v2245 = vpop.permute.xlu0 %2244
        %2248 = vrot.lane.b32.xlu0 %v2222, 8
        %v2249 = vpop.permute.xlu0 %2248
        %2250 = vrot.lane.b32.xlu0 %v2223, 8
        %v2251 = vpop.permute.xlu0 %2250
        %v2254 = vsel %vm1263, %v2243, %v2249
        %v2255 = vsel %vm1263, %v2245, %v2251
        %v2256 = vmul.f32 %v2254, %v1266
        %v2257 = vmul.f32 %v2255, %v1266
        %2258 = vrot.lane.b32.xlu0 %v2222, 71
        %v2259 = vpop.permute.xlu0 %2258
        %2260 = vrot.lane.b32.xlu0 %v2223, 71
        %v2261 = vpop.permute.xlu0 %2260
        %2264 = vrot.lane.b32.xlu0 %v2222, 7
        %v2265 = vpop.permute.xlu0 %2264
        %2266 = vrot.lane.b32.xlu0 %v2223, 7
        %v2267 = vpop.permute.xlu0 %2266
        %v2270 = vsel %vm1274, %v2259, %v2265
        %v2271 = vsel %vm1274, %v2261, %v2267
        %v2272 = vmul.f32 %v2270, %v1277
        %v2273 = vmul.f32 %v2271, %v1277
        %2274 = vrot.lane.b32.xlu0 %v2222, 65
        %v2275 = vpop.permute.xlu0 %2274
        %2276 = vrot.lane.b32.xlu0 %v2223, 65
        %v2277 = vpop.permute.xlu0 %2276
        %2280 = vrot.lane.b32.xlu0 %v2222, 1
        %v2281 = vpop.permute.xlu0 %2280
        %2282 = vrot.lane.b32.xlu0 %v2223, 1
        %v2283 = vpop.permute.xlu0 %2282
        %v2286 = vsel %vm875, %v2275, %v2281
        %v2287 = vsel %vm875, %v2277, %v2283
        %v2288 = vmul.f32 %v2286, %v1287
        %v2289 = vmul.f32 %v2287, %v1287
        %2290 = vrot.lane.b32.xlu0 %v2222, 127
        %v2291 = vpop.permute.xlu0 %2290
        %2292 = vrot.lane.b32.xlu0 %v2223, 127
        %v2293 = vpop.permute.xlu0 %2292
        %2296 = vrot.lane.b32.xlu0 %v2222, 63
        %v2297 = vpop.permute.xlu0 %2296
        %2298 = vrot.lane.b32.xlu0 %v2223, 63
        %v2299 = vpop.permute.xlu0 %2298
        %v2302 = vsel %vm1295, %v2291, %v2297
        %v2303 = vsel %vm1295, %v2293, %v2299
        %v2304 = vmul.f32 %v2302, %v1298
        %v2305 = vmul.f32 %v2303, %v1298
        %2306 = vrot.lane.b32.xlu0 %v2222, 121
        %v2307 = vpop.permute.xlu0 %2306
        %2308 = vrot.lane.b32.xlu0 %v2223, 121
        %v2309 = vpop.permute.xlu0 %2308
        %2312 = vrot.lane.b32.xlu0 %v2222, 57
        %v2313 = vpop.permute.xlu0 %2312
        %2314 = vrot.lane.b32.xlu0 %v2223, 57
        %v2315 = vpop.permute.xlu0 %2314
        %v2318 = vsel %vm1306, %v2307, %v2313
        %v2319 = vsel %vm1306, %v2309, %v2315
        %v2320 = vmul.f32 %v2318, %v1309
        %v2321 = vmul.f32 %v2319, %v1309
        %2322 = vrot.lane.b32.xlu0 %v2222, 120
        %v2323 = vpop.permute.xlu0 %2322
        %2324 = vrot.lane.b32.xlu0 %v2223, 120
        %v2325 = vpop.permute.xlu0 %2324
        %2328 = vrot.lane.b32.xlu0 %v2222, 56
        %v2329 = vpop.permute.xlu0 %2328
        %2330 = vrot.lane.b32.xlu0 %v2223, 56
        %v2331 = vpop.permute.xlu0 %2330
        %v2334 = vsel %vm1317, %v2323, %v2329
        %v2335 = vsel %vm1317, %v2325, %v2331
        %v2336 = vmul.f32 %v2334, %v1320
        %v2337 = vmul.f32 %v2335, %v1320
        %2338 = vrot.lane.b32.xlu0 %v2222, 119
        %v2339 = vpop.permute.xlu0 %2338
        %2340 = vrot.lane.b32.xlu0 %v2223, 119
        %v2341 = vpop.permute.xlu0 %2340
        %2344 = vrot.lane.b32.xlu0 %v2222, 55
        %v2345 = vpop.permute.xlu0 %2344
        %2346 = vrot.lane.b32.xlu0 %v2223, 55
        %v2347 = vpop.permute.xlu0 %2346
        %v2350 = vsel %vm1328, %v2339, %v2345
        %v2351 = vsel %vm1328, %v2341, %v2347
        %v2352 = vmul.f32 %v2350, %v1331
        %v2353 = vmul.f32 %v2351, %v1331
        %v2354 = vld [vmem:[#allocation15] sm:$0xff]
        %v2355 = vld [vmem:[#allocation15 + $0x8] sm:$0xff]
        %v2356 = vld [vmem:[#allocation15 + $0x10] sm:$0xff]
        %v2357 = vld [vmem:[#allocation15 + $0x18] sm:$0xff]
        %v2358 = vld [vmem:[%s16] sm:$0xff]
        %v2359 = vld [vmem:[%s16 + $0x8] sm:$0xff]
        %2361 = vset.pattern.permute.xlu0 0
        %2362 = vperm.xlu0 %2361, %v2358
        %v2363 = vpop.permute.xlu0 %2362
        %2366 = vset.pattern.permute.xlu0 0
        %2367 = vperm.xlu0 %2366, %v2359
        %v2368 = vpop.permute.xlu0 %2367
        %v2371 = vsel %vm823, %v2355, 0
        %v2374 = vsel %vm823, %v2357, 0
        %2376 = vmatpush.msra.mxu0 %v2337
        %2377 = vmatpush.msra.mxu0 %v2336
        %2378 = vmatpush.msra.mxu0 %v2321
        %2379 = vmatpush.msra.mxu0 %v2320
        %2380 = vmatpush.msra.mxu0 %v2305
        %2381 = vmatpush.msra.mxu0 %v2304
        %2382 = vmatpush.msra.mxu0 %v2223
        %2383 = vmatpush.msra.mxu0 %v2222
        %2384 = vmatpush.msra.mxu0 %v2289
        %2385 = vmatpush.msra.mxu0 %v2288
        %2386 = vmatpush.msra.mxu0 %v2273
        %2387 = vmatpush.msra.mxu0 %v2272
        %2388 = vmatpush.msra.mxu0 %v2257
        %2389 = vmatpush.msra.mxu0 %v2256
        %2390 = vmatpush.msra.mxu0 %v2241
        %2391 = vmatpush.msra.mxu0 %v2240
        %2392 = vmatmul.f32.gmra.mxu0 %v2354
        %v2393 = vpop.f32.mrf.mxu0
        %v2394 = vadd.f32 %v2363, %v2393
        %2395 = vmatmul.f32.gmra.mxu0 %v2356
        %v2396 = vpop.f32.mrf.mxu0
        %v2397 = vadd.f32 %v2368, %v2396
        %2398 = vdwg.mxu0
        %2399 = vmatpush.msra.mxu0 0.0
        %2400 = vmatpush.msra.mxu0 0.0
        %2401 = vmatpush.msra.mxu0 0.0
        %2402 = vmatpush.msra.mxu0 0.0
        %2403 = vmatpush.msra.mxu0 0.0
        %2404 = vmatpush.msra.mxu0 0.0
        %2405 = vmatpush.msra.mxu0 0.0
        %2406 = vmatpush.msra.mxu0 0.0
        %2407 = vmatpush.msra.mxu0 0.0
        %2408 = vmatpush.msra.mxu0 0.0
        %2409 = vmatpush.msra.mxu0 0.0
        %2410 = vmatpush.msra.mxu0 0.0
        %2411 = vmatpush.msra.mxu0 0.0
        %2412 = vmatpush.msra.mxu0 0.0
        %2413 = vmatpush.msra.mxu0 %v2353
        %2414 = vmatpush.msra.mxu0 %v2352
        %2415 = vmatmul.f32.gmra.mxu0 %v2371
        %v2416 = vpop.f32.mrf.mxu0
        %v2417 = vadd.f32 %v2394, %v2416
        %2418 = vmatmul.f32.gmra.mxu0 %v2374
        %v2419 = vpop.f32.mrf.mxu0
        %v2420 = vadd.f32 %v2397, %v2419
        %2421 = vdwg.mxu0
        %vm2422 = vcmp.ge.f32.partialorder %v2417, 0.0
        %vm2423 = vcmp.ge.f32.partialorder %v2420, 0.0
        %v2424 = vstv %s782
        %v2425 = vmul.f32 %v2424, %v2417
        %v2426 = vmul.f32 %v2424, %v2420
        %v2427 = vsel %vm2422, %v2417, %v2425
        %v2428 = vsel %vm2423, %v2420, %v2426
        %v2429 = vadd.f32 %v1586, %v2427
        %v2430 = vadd.f32 %v1587, %v2428
        %vm2431 = vcmask 523264
        %2432 = vst.msk [vmem:[%s771] sm:$0xff] %vm2431, %v2429
        %2433 = vst.msk [vmem:[%s771 + $0x8] sm:$0xff] %vm2431, %v2430
        %s2434 = sand.u32 %s441, 1
        %s2435 = scalar_lea.sflag [#allocation4], %s2434
        %s2436 = sand.u32 %s441, 1
        %s2437 = smul.addr %s2436, 16
        %s2438 = scalar_lea.vmem [#allocation18], %s2437
        %s2439 = sand.u32 %s467, 1
        %s2440 = scalar_lea.sflag [#allocation20], %s2439
        %s2441 = sand.u32 %s467, 1
        %s2442 = smul.addr %s2441, 16
        %s2443 = scalar_lea.vmem [#allocation19], %s2442
        // Predicated region
        $region129: #{tpu_custom_call.1} parent=91 // pred_check
          %p2444 = pneg %p451
        $region130: #{tpu_custom_call.1} parent=91 // pred_check_branch
          %2446 = sbr.rel (%p2444) target = $region132
        $region131: #{tpu_custom_call.1} parent=91 // pred_region
          %2448 = vsyncadd %s2435, 0
          %s2449 = smul.addr %s45, 2
          %s2450 = smul.addr %s2449, 8
          %s2451 = scalar_lea.hbm %s18, %s2450
          %s2453 = sshll.u32 %s2438, 4
          %s2454 = int_to_ptr.vmem [resolvable:$true] %s2453
          %s2455 = sshll.u32 %s2451, 4
          %s2456 = int_to_ptr.hbm [resolvable:$true] %s2455
          %2458 = dma.vmem_to_hbm [thread:$0]  %s2454, 256, %s2456, %s2435
        $region132: #{tpu_custom_call.1} parent=91 // pred_fallthru
          _
        // Predicated region
        $region133: #{tpu_custom_call.1} parent=91 // pred_check
          %p2459 = pneg %p477
        $region134: #{tpu_custom_call.1} parent=91 // pred_check_branch
          %2461 = sbr.rel (%p2459) target = $region136
        $region135: #{tpu_custom_call.1} parent=91 // pred_region
          %2463 = vsyncadd %s2440, 0
          %s2464 = smul.addr %s45, 2
          %s2465 = smul.addr %s2464, 8
          %s2466 = scalar_lea.hbm %s19, %s2465
          %s2467 = sshll.u32 %s2443, 4
          %s2468 = int_to_ptr.vmem [resolvable:$true] %s2467
          %s2469 = sshll.u32 %s2466, 4
          %s2470 = int_to_ptr.hbm [resolvable:$true] %s2469
          %2475 = dma.vmem_to_hbm [thread:$0]  %s2468, 256, %s2470, %s2440, 128, 128, 8
        $region136: #{tpu_custom_call.1} parent=91 // pred_fallthru
          _
      $region92: #{tpu_custom_call.1} parent=5 // pred_fallthru
        _
      %p2476 = scmp.le.s32.totalorder 2, %s40
      // Predicated region
      $region137: #{tpu_custom_call.1} parent=5 // pred_check
        %p2477 = pneg %p2476
      $region138: #{tpu_custom_call.1} parent=5 // pred_check_branch
        %2479 = sbr.rel (%p2477) target = $region140
      $region139: #{tpu_custom_call.1} parent=5 // pred_region
        %s2480 = ssub.s32 %s40, 2
        // Predicated region
        $region141: #{tpu_custom_call.1} parent=139 // pred_check
          %p2481 = pneg %p457
        $region142: #{tpu_custom_call.1} parent=139 // pred_check_branch
          %2483 = sbr.rel (%p2481) target = $region144
        $region143: #{tpu_custom_call.1} parent=139 // pred_region
          %s2484 = sand.u32 %s442, 1
          %s2485 = scalar_lea.sflag [#allocation4], %s2484
          %s2486 = sand.u32 %s442, 1
          %s2487 = smul.addr %s2486, 16
          %s2488 = scalar_lea.vmem [#allocation18], %s2487
          %2490 = dma.done %s2485, 256
        $region144: #{tpu_custom_call.1} parent=139 // pred_fallthru
          _
        // Predicated region
        $region145: #{tpu_custom_call.1} parent=139 // pred_check
          %p2491 = pneg %p483
        $region146: #{tpu_custom_call.1} parent=139 // pred_check_branch
          %2493 = sbr.rel (%p2491) target = $region148
        $region147: #{tpu_custom_call.1} parent=139 // pred_region
          %s2494 = sand.u32 %s468, 1
          %s2495 = scalar_lea.sflag [#allocation20], %s2494
          %s2496 = sand.u32 %s468, 1
          %s2497 = smul.addr %s2496, 16
          %s2498 = scalar_lea.vmem [#allocation19], %s2497
          %2500 = dma.done %s2495, 256
        $region148: #{tpu_custom_call.1} parent=139 // pred_fallthru
          _
      $region140: #{tpu_custom_call.1} parent=5 // pred_fallthru
        _
    $region6: #{tpu_custom_call.1} parent=1 // loop_footer
      %s44 = sadd.s32 1, %s40
    $region7: #{tpu_custom_call.1} parent=1 // loop_footer_branch
      %39 = sbr.rel target = $region3
    $region8: #{tpu_custom_call.1} parent=1 // loop_exit
      _
    %2501 = vsyncpa [#allocation3], 1
    %s2502 = scalar_lea.sflag [#allocation3], 1
    %2503 = vsyncpa %s2502, 1
    %2504 = vsyncpa [#allocation7], 1
    %2505 = vsyncpa [#allocation10], 1
    %2506 = vsyncpa [#allocation13], 1
    %2507 = vsyncpa [#allocation16], 1
    %2508 = vsyncpa [#allocation4], 1
    %s2509 = scalar_lea.sflag [#allocation4], 1
    %2510 = vsyncpa %s2509, 1
    %2511 = vsyncpa [#allocation20], 1
    %s2512 = scalar_lea.sflag [#allocation20], 1
    %2513 = vsyncpa %s2512, 1
    %2514 = vsyncpa [#allocation5], 1
    %s2515 = scalar_lea.sflag [#allocation5], 1
    %2516 = vsyncpa %s2515, 1

</llo_original>
